<compile_context>
chip_gen: v5e
topology: v5e:2x2
jax: 0.10.0
libtpu: 0.0.40
codegen_flags: <defaults>
</compile_context>

<pallas_src>
import jax
import jax.numpy as jnp
from jax.experimental import pallas as pl
from jax.experimental.pallas import tpu as pltpu

# ----- small synthetic config (matches module's shape relationships) -----
NTOKEN   = 50
NINP     = 32
NHID     = 32
NLAYERS  = 2          # kernel below is specialized to 2 layers
SEQ      = 8
BSZ      = 2
ATT_UNIT = 16
HOPS     = 4
NFC      = 16
NCLASS   = 3
PAD_IDX  = 0


# ---------------------------------------------------------------------------
# Single fused kernel: embedding gather + BiLSTM + attention + head
# ---------------------------------------------------------------------------
def _fused_classifier_kernel(
        # scalar prefetch (SMEM)
        ids_sm,
        # regular inputs (VMEM)
        ids_v, embed_ref,
        wihT_f0, whhT_f0, b_f0, wihT_b0, whhT_b0, b_b0,
        wihT_f1, whhT_f1, b_f1, wihT_b1, whhT_b1, b_b1,
        w1T, w2T, wfcT, bfc, wpT, bp,
        # outputs
        pred_ref, alphas_ref,
        # scratch (VMEM)
        emb_sc, y_sc, o_sc):
    H = NHID

    # ---- embedding gather: ids from SMEM, table resident in VMEM ----------
    # emb_sc rows are time-major: row = t*BSZ + b
    for t in range(SEQ):
        for b in range(BSZ):
            r = t * BSZ + b
            emb_sc[r:r + 1, :] = embed_ref[ids_sm[t, b]]          # (1, NINP)

    def lstm_cell(gates, c_prev):
        # full-vreg sigmoid/tanh on the (BSZ, 4H) gates (EUP), then slice.
        sg = jax.nn.sigmoid(gates)
        th = jnp.tanh(gates)
        i_g = sg[:, 0:H]
        f_g = sg[:, H:2 * H]
        g_g = th[:, 2 * H:3 * H]
        o_g = sg[:, 3 * H:4 * H]
        c = f_g * c_prev + i_g * g_g
        h = o_g * jnp.tanh(c)
        return h, c

    def bilstm_layer(x_flat, wihT_f, whhT_f, bias_f, wihT_b, whhT_b, bias_b,
                     y_ref, batch_major_out):
        # Hoisted input projection: all timesteps in one matmul per direction.
        xg_f = jnp.dot(x_flat, wihT_f[...],
                       preferred_element_type=jnp.float32) + bias_f[...]
        xg_b = jnp.dot(x_flat, wihT_b[...],
                       preferred_element_type=jnp.float32) + bias_b[...]
        whh_f = whhT_f[...]
        whh_b = whhT_b[...]
        h_f = jnp.zeros((BSZ, H), jnp.float32)
        c_f = jnp.zeros((BSZ, H), jnp.float32)
        h_b = jnp.zeros((BSZ, H), jnp.float32)
        c_b = jnp.zeros((BSZ, H), jnp.float32)
        # Fully unrolled time loop; only h @ W_hh stays on the serial path.
        for t in range(SEQ):
            tb = SEQ - 1 - t
            g_f = xg_f[t * BSZ:(t + 1) * BSZ, :] + jnp.dot(
                h_f, whh_f, preferred_element_type=jnp.float32)
            g_b = xg_b[tb * BSZ:(tb + 1) * BSZ, :] + jnp.dot(
                h_b, whh_b, preferred_element_type=jnp.float32)
            h_f, c_f = lstm_cell(g_f, c_f)
            h_b, c_b = lstm_cell(g_b, c_b)
            if batch_major_out:
                # final layer: write batch-major rows (row = b*SEQ + t) so the
                # attention epilogue reads contiguous per-batch blocks.
                for b in range(BSZ):
                    rf = b * SEQ + t
                    rb = b * SEQ + tb
                    y_ref[rf:rf + 1, 0:H] = h_f[b:b + 1, :]
                    y_ref[rb:rb + 1, H:2 * H] = h_b[b:b + 1, :]
            else:
                # intermediate layer: time-major rows (row = t*BSZ + b)
                y_ref[t * BSZ:(t + 1) * BSZ, 0:H] = h_f
                y_ref[tb * BSZ:(tb + 1) * BSZ, H:2 * H] = h_b

    # ---- 2-layer BiLSTM, fwd+bwd fused per layer, all in VMEM --------------
    bilstm_layer(emb_sc[...], wihT_f0, whhT_f0, b_f0, wihT_b0, whhT_b0, b_b0,
                 y_sc, batch_major_out=False)
    bilstm_layer(y_sc[...], wihT_f1, whhT_f1, b_f1, wihT_b1, whhT_b1, b_b1,
                 o_sc, batch_major_out=True)

    # ---- self-attention (tanh(ws1) -> ws2 -> pad-penalized softmax) --------
    outp = o_sc[...]                                             # (BSZ*SEQ, 2H)
    hbar = jnp.tanh(jnp.dot(outp, w1T[...],
                            preferred_element_type=jnp.float32))  # (BSZ*SEQ, A)
    scores = jnp.dot(hbar, w2T[...],
                     preferred_element_type=jnp.float32)          # (BSZ*SEQ, HOPS)
    pad = (ids_v[...] == PAD_IDX).astype(jnp.float32)             # (SEQ, BSZ)

    # identity matrix built with iota (used to emit alphas pre-transposed via MXU)
    eye_seq = (jax.lax.broadcasted_iota(jnp.int32, (SEQ, SEQ), 0) ==
               jax.lax.broadcasted_iota(jnp.int32, (SEQ, SEQ), 1)
               ).astype(jnp.float32)

    flat_rows = []
    for b in range(BSZ):
        o_b = outp[b * SEQ:(b + 1) * SEQ, :]                      # (SEQ, 2H)
        s_b = scores[b * SEQ:(b + 1) * SEQ, :]                    # (SEQ, HOPS)
        pen = s_b - 10000.0 * pad[:, b:b + 1]                     # same mask / hop
        pen = pen - jnp.max(pen, axis=0, keepdims=True)           # softmax over seq
        e = jnp.exp(pen)
        a_b = e / jnp.sum(e, axis=0, keepdims=True)               # (SEQ, HOPS)
        # alphas already transposed to (HOPS, SEQ): a_b^T = a_b^T @ I (MXU)
        a_bT = jax.lax.dot_general(
            a_b, eye_seq, dimension_numbers=(((0,), (0,)), ((), ())),
            preferred_element_type=jnp.float32)                   # (HOPS, SEQ)
        alphas_ref[b, :, :] = a_bT
        # M[b] = alphas^T @ outp  (bmm of the PyTorch reference)
        m_b = jax.lax.dot_general(
            a_b, o_b, dimension_numbers=(((0,), (0,)), ((), ())),
            preferred_element_type=jnp.float32)                   # (HOPS, 2H)
        # row-major flatten of (HOPS, 2H) -> (1, HOPS*2H) via lane concat
        flat_rows.append(jnp.concatenate(
            [m_b[h_:h_ + 1, :] for h_ in range(HOPS)], axis=1))
    flat = jnp.concatenate(flat_rows, axis=0)                     # (BSZ, HOPS*2H)

    # ---- classifier head: tanh(fc(x)) -> pred -------------------------------
    fc = jnp.tanh(jnp.dot(flat, wfcT[...],
                          preferred_element_type=jnp.float32) + bfc[...])
    pred_ref[...] = jnp.dot(fc, wpT[...],
                            preferred_element_type=jnp.float32) + bp[...]


def _full_spec(shape):
    nd = len(shape)
    # index_map receives (grid_i, ids_prefetch_ref) because num_scalar_prefetch=1
    return pl.BlockSpec(shape, lambda i, ids, nd=nd: (0,) * nd)


def build_classifier_call():
    in_shapes = [
        (SEQ, BSZ),                    # ids (VMEM copy, for the pad mask)
        (NTOKEN, 1, NINP),             # embedding table
        (NINP, 4 * NHID), (NHID, 4 * NHID), (1, 4 * NHID),       # layer0 fwd
        (NINP, 4 * NHID), (NHID, 4 * NHID), (1, 4 * NHID),       # layer0 bwd
        (2 * NHID, 4 * NHID), (NHID, 4 * NHID), (1, 4 * NHID),   # layer1 fwd
        (2 * NHID, 4 * NHID), (NHID, 4 * NHID), (1, 4 * NHID),   # layer1 bwd
        (2 * NHID, ATT_UNIT), (ATT_UNIT, HOPS),                  # ws1^T, ws2^T
        (2 * NHID * HOPS, NFC), (1, NFC),                        # fc
        (NFC, NCLASS), (1, NCLASS),                              # pred
    ]
    grid_spec = pltpu.PrefetchScalarGridSpec(
        num_scalar_prefetch=1,
        grid=(1,),
        in_specs=[_full_spec(s) for s in in_shapes],
        out_specs=(_full_spec((BSZ, NCLASS)),
                   _full_spec((BSZ, HOPS, SEQ))),
        scratch_shapes=[
            pltpu.VMEM((SEQ * BSZ, NINP), jnp.float32),          # emb (time-major)
            pltpu.VMEM((SEQ * BSZ, 2 * NHID), jnp.float32),      # layer-0 out
            pltpu.VMEM((SEQ * BSZ, 2 * NHID), jnp.float32),      # layer-1 out (batch-major)
        ])
    return pl.pallas_call(
        _fused_classifier_kernel,
        out_shape=(jax.ShapeDtypeStruct((BSZ, NCLASS), jnp.float32),
                   jax.ShapeDtypeStruct((BSZ, HOPS, SEQ), jnp.float32)),
        grid_spec=grid_spec,
        compiler_params=pltpu.CompilerParams(
            dimension_semantics=("arbitrary",)),
    )


# ---------------------------------------------------------------------------
# Full forward: single pallas_call, no glue ops in the wrapper
# ---------------------------------------------------------------------------
def classifier_forward(inp_ids, params):
    """inp_ids: (SEQ, BSZ) int32 token ids. Returns (pred, attention, True)."""
    call = build_classifier_call()
    l0, l1 = params['lstm']
    pred, alphas = call(
        inp_ids,                      # scalar-prefetched (SMEM) for the gather
        inp_ids,                      # VMEM copy for the pad mask
        params['embed3'],
        l0['wihT_f'], l0['whhT_f'], l0['b_f'],
        l0['wihT_b'], l0['whhT_b'], l0['b_b'],
        l1['wihT_f'], l1['whhT_f'], l1['b_f'],
        l1['wihT_b'], l1['whhT_b'], l1['b_b'],
        params['w1T'], params['w2T'],
        params['wfcT'], params['bfc'], params['wpT'], params['bp'])
    return pred, alphas, True         # encoder is SelfAttentiveEncoder


# ---------------------------------------------------------------------------
# Deterministic parameter construction
# ---------------------------------------------------------------------------
def make_params(key):
    def uni(k, shape, r=0.1):
        return jax.random.uniform(k, shape, jnp.float32, -r, r)

    keys = iter(jax.random.split(key, 64))
    embed = uni(next(keys), (NTOKEN, NINP))
    embed = embed.at[PAD_IDX].set(0.0)                           # encoder.weight[<pad>] = 0

    lstm = []
    for layer in range(NLAYERS):
        in_dim = NINP if layer == 0 else 2 * NHID
        p = {}
        for d in ('f', 'b'):
            wih = uni(next(keys), (4 * NHID, in_dim))
            whh = uni(next(keys), (4 * NHID, NHID))
            bih = uni(next(keys), (4 * NHID,))
            bhh = uni(next(keys), (4 * NHID,))
            p['wihT_' + d] = wih.T
            p['whhT_' + d] = whh.T
            p['b_' + d] = (bih + bhh).reshape(1, 4 * NHID)
        lstm.append(p)

    w1 = uni(next(keys), (ATT_UNIT, 2 * NHID))                   # ws1 (no bias)
    w2 = uni(next(keys), (HOPS, ATT_UNIT))                       # ws2 (no bias)
    wfc = uni(next(keys), (NFC, 2 * NHID * HOPS))
    wp = uni(next(keys), (NCLASS, NFC))
    return {
        'embed3': embed.reshape(NTOKEN, 1, NINP),                # 3D for clean dynamic row gather
        'lstm': lstm,
        'w1T': w1.T,
        'w2T': w2.T,
        'wfcT': wfc.T,
        'bfc': jnp.zeros((1, NFC), jnp.float32),
        'wpT': wp.T,
        'bp': jnp.zeros((1, NCLASS), jnp.float32),
    }


if __name__ == "__main__":
    key = jax.random.PRNGKey(0)
    k_par, k_inp = jax.random.split(key)
    params = make_params(k_par)
    inp_ids = jax.random.randint(k_inp, (SEQ, BSZ), 0, NTOKEN, dtype=jnp.int32)

    pred, attn, out_bool = classifier_forward(inp_ids, params)
    jax.block_until_ready(pred)
    jax.block_until_ready(attn)

    assert pred.shape == (BSZ, NCLASS)
    assert attn.shape == (BSZ, HOPS, SEQ)
    assert out_bool is True
    print("KERNEL_OK")
</pallas_src>

<mosaic_0001>
module attributes {stable_mosaic.version = 11 : i64} {
  func.func @_fused_classifier_kernel(%arg0: i32, %arg1: memref<8x2xi32, #tpu.memory_space<smem>>, %arg2: memref<8x2xi32, #tpu.memory_space<vmem>>, %arg3: memref<50x1x32xf32, #tpu.memory_space<vmem>>, %arg4: memref<32x128xf32, #tpu.memory_space<vmem>>, %arg5: memref<32x128xf32, #tpu.memory_space<vmem>>, %arg6: memref<1x128xf32, #tpu.memory_space<vmem>>, %arg7: memref<32x128xf32, #tpu.memory_space<vmem>>, %arg8: memref<32x128xf32, #tpu.memory_space<vmem>>, %arg9: memref<1x128xf32, #tpu.memory_space<vmem>>, %arg10: memref<64x128xf32, #tpu.memory_space<vmem>>, %arg11: memref<32x128xf32, #tpu.memory_space<vmem>>, %arg12: memref<1x128xf32, #tpu.memory_space<vmem>>, %arg13: memref<64x128xf32, #tpu.memory_space<vmem>>, %arg14: memref<32x128xf32, #tpu.memory_space<vmem>>, %arg15: memref<1x128xf32, #tpu.memory_space<vmem>>, %arg16: memref<64x16xf32, #tpu.memory_space<vmem>>, %arg17: memref<16x4xf32, #tpu.memory_space<vmem>>, %arg18: memref<256x16xf32, #tpu.memory_space<vmem>>, %arg19: memref<1x16xf32, #tpu.memory_space<vmem>>, %arg20: memref<16x3xf32, #tpu.memory_space<vmem>>, %arg21: memref<1x3xf32, #tpu.memory_space<vmem>>, %arg22: memref<2x3xf32, #tpu.memory_space<vmem>>, %arg23: memref<2x4x8xf32, #tpu.memory_space<vmem>>, %arg24: memref<16x32xf32, #tpu.memory_space<vmem>>, %arg25: memref<16x64xf32, #tpu.memory_space<vmem>>, %arg26: memref<16x64xf32, #tpu.memory_space<vmem>>) attributes {dimension_semantics = [#tpu.dimension_semantics<arbitrary>], iteration_bounds = array<i64: 1>, scalar_prefetch = 1 : i64, scratch_operands = 3 : i64, tpu.core_type = #tpu.core_type<tc>, window_params = [{pipeline_mode = #tpu.pipeline_mode<synchronous>, transform_indices = @transform_0, window_bounds = array<i64: 8, 2>}, {pipeline_mode = #tpu.pipeline_mode<synchronous>, transform_indices = @transform_1, window_bounds = array<i64: 50, 1, 32>}, {pipeline_mode = #tpu.pipeline_mode<synchronous>, transform_indices = @transform_2, window_bounds = array<i64: 32, 128>}, {pipeline_mode = #tpu.pipeline_mode<synchronous>, transform_indices = @transform_3, window_bounds = array<i64: 32, 128>}, {pipeline_mode = #tpu.pipeline_mode<synchronous>, transform_indices = @transform_4, window_bounds = array<i64: 1, 128>}, {pipeline_mode = #tpu.pipeline_mode<synchronous>, transform_indices = @transform_5, window_bounds = array<i64: 32, 128>}, {pipeline_mode = #tpu.pipeline_mode<synchronous>, transform_indices = @transform_6, window_bounds = array<i64: 32, 128>}, {pipeline_mode = #tpu.pipeline_mode<synchronous>, transform_indices = @transform_7, window_bounds = array<i64: 1, 128>}, {pipeline_mode = #tpu.pipeline_mode<synchronous>, transform_indices = @transform_8, window_bounds = array<i64: 64, 128>}, {pipeline_mode = #tpu.pipeline_mode<synchronous>, transform_indices = @transform_9, window_bounds = array<i64: 32, 128>}, {pipeline_mode = #tpu.pipeline_mode<synchronous>, transform_indices = @transform_10, window_bounds = array<i64: 1, 128>}, {pipeline_mode = #tpu.pipeline_mode<synchronous>, transform_indices = @transform_11, window_bounds = array<i64: 64, 128>}, {pipeline_mode = #tpu.pipeline_mode<synchronous>, transform_indices = @transform_12, window_bounds = array<i64: 32, 128>}, {pipeline_mode = #tpu.pipeline_mode<synchronous>, transform_indices = @transform_13, window_bounds = array<i64: 1, 128>}, {pipeline_mode = #tpu.pipeline_mode<synchronous>, transform_indices = @transform_14, window_bounds = array<i64: 64, 16>}, {pipeline_mode = #tpu.pipeline_mode<synchronous>, transform_indices = @transform_15, window_bounds = array<i64: 16, 4>}, {pipeline_mode = #tpu.pipeline_mode<synchronous>, transform_indices = @transform_16, window_bounds = array<i64: 256, 16>}, {pipeline_mode = #tpu.pipeline_mode<synchronous>, transform_indices = @transform_17, window_bounds = array<i64: 1, 16>}, {pipeline_mode = #tpu.pipeline_mode<synchronous>, transform_indices = @transform_18, window_bounds = array<i64: 16, 3>}, {pipeline_mode = #tpu.pipeline_mode<synchronous>, transform_indices = @transform_19, window_bounds = array<i64: 1, 3>}, {pipeline_mode = #tpu.pipeline_mode<synchronous>, transform_indices = @transform_20, window_bounds = array<i64: 2, 3>}, {pipeline_mode = #tpu.pipeline_mode<synchronous>, transform_indices = @transform_21, window_bounds = array<i64: 2, 4, 8>}]} {
    %c0 = arith.constant 0 : index
    %c0_0 = arith.constant 0 : index
    %0 = memref.load %arg1[%c0, %c0_0] : memref<8x2xi32, #tpu.memory_space<smem>>
    %1 = arith.index_cast %0 : i32 to index
    %c0_1 = arith.constant 0 : index
    %c0_2 = arith.constant 0 : index
    %2 = vector.load %arg3[%1, %c0_1, %c0_2] : memref<50x1x32xf32, #tpu.memory_space<vmem>>, vector<1x1x32xf32>
    %3 = vector.shape_cast %2 : vector<1x1x32xf32> to vector<1x32xf32>
    %c0_3 = arith.constant 0 : index
    %c0_4 = arith.constant 0 : index
    %4 = vector.load %arg24[%c0_3, %c0_4] : memref<16x32xf32, #tpu.memory_space<vmem>>, vector<1x32xf32>
    tpu.vector_store %arg24[%c0_3, %c0_4], %3 {strides = array<i32>} : memref<16x32xf32, #tpu.memory_space<vmem>>, vector<1x32xf32>,
    %c0_5 = arith.constant 0 : index
    %c1 = arith.constant 1 : index
    %5 = memref.load %arg1[%c0_5, %c1] : memref<8x2xi32, #tpu.memory_space<smem>>
    %6 = arith.index_cast %5 : i32 to index
    %c0_6 = arith.constant 0 : index
    %c0_7 = arith.constant 0 : index
    %7 = vector.load %arg3[%6, %c0_6, %c0_7] : memref<50x1x32xf32, #tpu.memory_space<vmem>>, vector<1x1x32xf32>
    %8 = vector.shape_cast %7 : vector<1x1x32xf32> to vector<1x32xf32>
    %c1_8 = arith.constant 1 : index
    %c0_9 = arith.constant 0 : index
    %9 = vector.load %arg24[%c1_8, %c0_9] : memref<16x32xf32, #tpu.memory_space<vmem>>, vector<1x32xf32>
    tpu.vector_store %arg24[%c1_8, %c0_9], %8 {strides = array<i32>} : memref<16x32xf32, #tpu.memory_space<vmem>>, vector<1x32xf32>,
    %c1_10 = arith.constant 1 : index
    %c0_11 = arith.constant 0 : index
    %10 = memref.load %arg1[%c1_10, %c0_11] : memref<8x2xi32, #tpu.memory_space<smem>>
    %11 = arith.index_cast %10 : i32 to index
    %c0_12 = arith.constant 0 : index
    %c0_13 = arith.constant 0 : index
    %12 = vector.load %arg3[%11, %c0_12, %c0_13] : memref<50x1x32xf32, #tpu.memory_space<vmem>>, vector<1x1x32xf32>
    %13 = vector.shape_cast %12 : vector<1x1x32xf32> to vector<1x32xf32>
    %c2 = arith.constant 2 : index
    %c0_14 = arith.constant 0 : index
    %14 = vector.load %arg24[%c2, %c0_14] : memref<16x32xf32, #tpu.memory_space<vmem>>, vector<1x32xf32>
    tpu.vector_store %arg24[%c2, %c0_14], %13 {strides = array<i32>} : memref<16x32xf32, #tpu.memory_space<vmem>>, vector<1x32xf32>,
    %c1_15 = arith.constant 1 : index
    %c1_16 = arith.constant 1 : index
    %15 = memref.load %arg1[%c1_15, %c1_16] : memref<8x2xi32, #tpu.memory_space<smem>>
    %16 = arith.index_cast %15 : i32 to index
    %c0_17 = arith.constant 0 : index
    %c0_18 = arith.constant 0 : index
    %17 = vector.load %arg3[%16, %c0_17, %c0_18] : memref<50x1x32xf32, #tpu.memory_space<vmem>>, vector<1x1x32xf32>
    %18 = vector.shape_cast %17 : vector<1x1x32xf32> to vector<1x32xf32>
    %c3 = arith.constant 3 : index
    %c0_19 = arith.constant 0 : index
    %19 = vector.load %arg24[%c3, %c0_19] : memref<16x32xf32, #tpu.memory_space<vmem>>, vector<1x32xf32>
    tpu.vector_store %arg24[%c3, %c0_19], %18 {strides = array<i32>} : memref<16x32xf32, #tpu.memory_space<vmem>>, vector<1x32xf32>,
    %c2_20 = arith.constant 2 : index
    %c0_21 = arith.constant 0 : index
    %20 = memref.load %arg1[%c2_20, %c0_21] : memref<8x2xi32, #tpu.memory_space<smem>>
    %21 = arith.index_cast %20 : i32 to index
    %c0_22 = arith.constant 0 : index
    %c0_23 = arith.constant 0 : index
    %22 = vector.load %arg3[%21, %c0_22, %c0_23] : memref<50x1x32xf32, #tpu.memory_space<vmem>>, vector<1x1x32xf32>
    %23 = vector.shape_cast %22 : vector<1x1x32xf32> to vector<1x32xf32>
    %c4 = arith.constant 4 : index
    %c0_24 = arith.constant 0 : index
    %24 = vector.load %arg24[%c4, %c0_24] : memref<16x32xf32, #tpu.memory_space<vmem>>, vector<1x32xf32>
    tpu.vector_store %arg24[%c4, %c0_24], %23 {strides = array<i32>} : memref<16x32xf32, #tpu.memory_space<vmem>>, vector<1x32xf32>,
    %c2_25 = arith.constant 2 : index
    %c1_26 = arith.constant 1 : index
    %25 = memref.load %arg1[%c2_25, %c1_26] : memref<8x2xi32, #tpu.memory_space<smem>>
    %26 = arith.index_cast %25 : i32 to index
    %c0_27 = arith.constant 0 : index
    %c0_28 = arith.constant 0 : index
    %27 = vector.load %arg3[%26, %c0_27, %c0_28] : memref<50x1x32xf32, #tpu.memory_space<vmem>>, vector<1x1x32xf32>
    %28 = vector.shape_cast %27 : vector<1x1x32xf32> to vector<1x32xf32>
    %c5 = arith.constant 5 : index
    %c0_29 = arith.constant 0 : index
    %29 = vector.load %arg24[%c5, %c0_29] : memref<16x32xf32, #tpu.memory_space<vmem>>, vector<1x32xf32>
    tpu.vector_store %arg24[%c5, %c0_29], %28 {strides = array<i32>} : memref<16x32xf32, #tpu.memory_space<vmem>>, vector<1x32xf32>,
    %c3_30 = arith.constant 3 : index
    %c0_31 = arith.constant 0 : index
    %30 = memref.load %arg1[%c3_30, %c0_31] : memref<8x2xi32, #tpu.memory_space<smem>>
    %31 = arith.index_cast %30 : i32 to index
    %c0_32 = arith.constant 0 : index
    %c0_33 = arith.constant 0 : index
    %32 = vector.load %arg3[%31, %c0_32, %c0_33] : memref<50x1x32xf32, #tpu.memory_space<vmem>>, vector<1x1x32xf32>
    %33 = vector.shape_cast %32 : vector<1x1x32xf32> to vector<1x32xf32>
    %c6 = arith.constant 6 : index
    %c0_34 = arith.constant 0 : index
    %34 = vector.load %arg24[%c6, %c0_34] : memref<16x32xf32, #tpu.memory_space<vmem>>, vector<1x32xf32>
    tpu.vector_store %arg24[%c6, %c0_34], %33 {strides = array<i32>} : memref<16x32xf32, #tpu.memory_space<vmem>>, vector<1x32xf32>,
    %c3_35 = arith.constant 3 : index
    %c1_36 = arith.constant 1 : index
    %35 = memref.load %arg1[%c3_35, %c1_36] : memref<8x2xi32, #tpu.memory_space<smem>>
    %36 = arith.index_cast %35 : i32 to index
    %c0_37 = arith.constant 0 : index
    %c0_38 = arith.constant 0 : index
    %37 = vector.load %arg3[%36, %c0_37, %c0_38] : memref<50x1x32xf32, #tpu.memory_space<vmem>>, vector<1x1x32xf32>
    %38 = vector.shape_cast %37 : vector<1x1x32xf32> to vector<1x32xf32>
    %c7 = arith.constant 7 : index
    %c0_39 = arith.constant 0 : index
    %39 = vector.load %arg24[%c7, %c0_39] : memref<16x32xf32, #tpu.memory_space<vmem>>, vector<1x32xf32>
    tpu.vector_store %arg24[%c7, %c0_39], %38 {strides = array<i32>} : memref<16x32xf32, #tpu.memory_space<vmem>>, vector<1x32xf32>,
    %c4_40 = arith.constant 4 : index
    %c0_41 = arith.constant 0 : index
    %40 = memref.load %arg1[%c4_40, %c0_41] : memref<8x2xi32, #tpu.memory_space<smem>>
    %41 = arith.index_cast %40 : i32 to index
    %c0_42 = arith.constant 0 : index
    %c0_43 = arith.constant 0 : index
    %42 = vector.load %arg3[%41, %c0_42, %c0_43] : memref<50x1x32xf32, #tpu.memory_space<vmem>>, vector<1x1x32xf32>
    %43 = vector.shape_cast %42 : vector<1x1x32xf32> to vector<1x32xf32>
    %c8 = arith.constant 8 : index
    %c0_44 = arith.constant 0 : index
    %44 = vector.load %arg24[%c8, %c0_44] : memref<16x32xf32, #tpu.memory_space<vmem>>, vector<1x32xf32>
    tpu.vector_store %arg24[%c8, %c0_44], %43 {strides = array<i32>} : memref<16x32xf32, #tpu.memory_space<vmem>>, vector<1x32xf32>,
    %c4_45 = arith.constant 4 : index
    %c1_46 = arith.constant 1 : index
    %45 = memref.load %arg1[%c4_45, %c1_46] : memref<8x2xi32, #tpu.memory_space<smem>>
    %46 = arith.index_cast %45 : i32 to index
    %c0_47 = arith.constant 0 : index
    %c0_48 = arith.constant 0 : index
    %47 = vector.load %arg3[%46, %c0_47, %c0_48] : memref<50x1x32xf32, #tpu.memory_space<vmem>>, vector<1x1x32xf32>
    %48 = vector.shape_cast %47 : vector<1x1x32xf32> to vector<1x32xf32>
    %c9 = arith.constant 9 : index
    %c0_49 = arith.constant 0 : index
    %49 = vector.load %arg24[%c9, %c0_49] : memref<16x32xf32, #tpu.memory_space<vmem>>, vector<1x32xf32>
    tpu.vector_store %arg24[%c9, %c0_49], %48 {strides = array<i32>} : memref<16x32xf32, #tpu.memory_space<vmem>>, vector<1x32xf32>,
    %c5_50 = arith.constant 5 : index
    %c0_51 = arith.constant 0 : index
    %50 = memref.load %arg1[%c5_50, %c0_51] : memref<8x2xi32, #tpu.memory_space<smem>>
    %51 = arith.index_cast %50 : i32 to index
    %c0_52 = arith.constant 0 : index
    %c0_53 = arith.constant 0 : index
    %52 = vector.load %arg3[%51, %c0_52, %c0_53] : memref<50x1x32xf32, #tpu.memory_space<vmem>>, vector<1x1x32xf32>
    %53 = vector.shape_cast %52 : vector<1x1x32xf32> to vector<1x32xf32>
    %c10 = arith.constant 10 : index
    %c0_54 = arith.constant 0 : index
    %54 = vector.load %arg24[%c10, %c0_54] : memref<16x32xf32, #tpu.memory_space<vmem>>, vector<1x32xf32>
    tpu.vector_store %arg24[%c10, %c0_54], %53 {strides = array<i32>} : memref<16x32xf32, #tpu.memory_space<vmem>>, vector<1x32xf32>,
    %c5_55 = arith.constant 5 : index
    %c1_56 = arith.constant 1 : index
    %55 = memref.load %arg1[%c5_55, %c1_56] : memref<8x2xi32, #tpu.memory_space<smem>>
    %56 = arith.index_cast %55 : i32 to index
    %c0_57 = arith.constant 0 : index
    %c0_58 = arith.constant 0 : index
    %57 = vector.load %arg3[%56, %c0_57, %c0_58] : memref<50x1x32xf32, #tpu.memory_space<vmem>>, vector<1x1x32xf32>
    %58 = vector.shape_cast %57 : vector<1x1x32xf32> to vector<1x32xf32>
    %c11 = arith.constant 11 : index
    %c0_59 = arith.constant 0 : index
    %59 = vector.load %arg24[%c11, %c0_59] : memref<16x32xf32, #tpu.memory_space<vmem>>, vector<1x32xf32>
    tpu.vector_store %arg24[%c11, %c0_59], %58 {strides = array<i32>} : memref<16x32xf32, #tpu.memory_space<vmem>>, vector<1x32xf32>,
    %c6_60 = arith.constant 6 : index
    %c0_61 = arith.constant 0 : index
    %60 = memref.load %arg1[%c6_60, %c0_61] : memref<8x2xi32, #tpu.memory_space<smem>>
    %61 = arith.index_cast %60 : i32 to index
    %c0_62 = arith.constant 0 : index
    %c0_63 = arith.constant 0 : index
    %62 = vector.load %arg3[%61, %c0_62, %c0_63] : memref<50x1x32xf32, #tpu.memory_space<vmem>>, vector<1x1x32xf32>
    %63 = vector.shape_cast %62 : vector<1x1x32xf32> to vector<1x32xf32>
    %c12 = arith.constant 12 : index
    %c0_64 = arith.constant 0 : index
    %64 = vector.load %arg24[%c12, %c0_64] : memref<16x32xf32, #tpu.memory_space<vmem>>, vector<1x32xf32>
    tpu.vector_store %arg24[%c12, %c0_64], %63 {strides = array<i32>} : memref<16x32xf32, #tpu.memory_space<vmem>>, vector<1x32xf32>,
    %c6_65 = arith.constant 6 : index
    %c1_66 = arith.constant 1 : index
    %65 = memref.load %arg1[%c6_65, %c1_66] : memref<8x2xi32, #tpu.memory_space<smem>>
    %66 = arith.index_cast %65 : i32 to index
    %c0_67 = arith.constant 0 : index
    %c0_68 = arith.constant 0 : index
    %67 = vector.load %arg3[%66, %c0_67, %c0_68] : memref<50x1x32xf32, #tpu.memory_space<vmem>>, vector<1x1x32xf32>
    %68 = vector.shape_cast %67 : vector<1x1x32xf32> to vector<1x32xf32>
    %c13 = arith.constant 13 : index
    %c0_69 = arith.constant 0 : index
    %69 = vector.load %arg24[%c13, %c0_69] : memref<16x32xf32, #tpu.memory_space<vmem>>, vector<1x32xf32>
    tpu.vector_store %arg24[%c13, %c0_69], %68 {strides = array<i32>} : memref<16x32xf32, #tpu.memory_space<vmem>>, vector<1x32xf32>,
    %c7_70 = arith.constant 7 : index
    %c0_71 = arith.constant 0 : index
    %70 = memref.load %arg1[%c7_70, %c0_71] : memref<8x2xi32, #tpu.memory_space<smem>>
    %71 = arith.index_cast %70 : i32 to index
    %c0_72 = arith.constant 0 : index
    %c0_73 = arith.constant 0 : index
    %72 = vector.load %arg3[%71, %c0_72, %c0_73] : memref<50x1x32xf32, #tpu.memory_space<vmem>>, vector<1x1x32xf32>
    %73 = vector.shape_cast %72 : vector<1x1x32xf32> to vector<1x32xf32>
    %c14 = arith.constant 14 : index
    %c0_74 = arith.constant 0 : index
    %74 = vector.load %arg24[%c14, %c0_74] : memref<16x32xf32, #tpu.memory_space<vmem>>, vector<1x32xf32>
    tpu.vector_store %arg24[%c14, %c0_74], %73 {strides = array<i32>} : memref<16x32xf32, #tpu.memory_space<vmem>>, vector<1x32xf32>,
    %c7_75 = arith.constant 7 : index
    %c1_76 = arith.constant 1 : index
    %75 = memref.load %arg1[%c7_75, %c1_76] : memref<8x2xi32, #tpu.memory_space<smem>>
    %76 = arith.index_cast %75 : i32 to index
    %c0_77 = arith.constant 0 : index
    %c0_78 = arith.constant 0 : index
    %77 = vector.load %arg3[%76, %c0_77, %c0_78] : memref<50x1x32xf32, #tpu.memory_space<vmem>>, vector<1x1x32xf32>
    %78 = vector.shape_cast %77 : vector<1x1x32xf32> to vector<1x32xf32>
    %c15 = arith.constant 15 : index
    %c0_79 = arith.constant 0 : index
    %79 = vector.load %arg24[%c15, %c0_79] : memref<16x32xf32, #tpu.memory_space<vmem>>, vector<1x32xf32>
    tpu.vector_store %arg24[%c15, %c0_79], %78 {strides = array<i32>} : memref<16x32xf32, #tpu.memory_space<vmem>>, vector<1x32xf32>,
    %c0_80 = arith.constant 0 : index
    %c0_81 = arith.constant 0 : index
    %80 = vector.load %arg24[%c0_80, %c0_81] : memref<16x32xf32, #tpu.memory_space<vmem>>, vector<16x32xf32>
    %c0_82 = arith.constant 0 : index
    %c0_83 = arith.constant 0 : index
    %81 = vector.load %arg4[%c0_82, %c0_83] : memref<32x128xf32, #tpu.memory_space<vmem>>, vector<32x128xf32>
    %cst = arith.constant dense<0.000000e+00> : vector<16x128xf32>
    %82 = tpu.matmul %80, %81, %cst {dimension_numbers = #tpu.dot_dimension_numbers<[1], [0], [0], [1], [0, 0, 1, 1], [], []>} : vector<16x32xf32>, vector<32x128xf32>, vector<16x128xf32> -> vector<16x128xf32>
    %c0_84 = arith.constant 0 : index
    %c0_85 = arith.constant 0 : index
    %83 = vector.load %arg6[%c0_84, %c0_85] : memref<1x128xf32, #tpu.memory_space<vmem>>, vector<1x128xf32>
    %84 = vector.broadcast %83 : vector<1x128xf32> to vector<16x128xf32>
    %85 = arith.addf %82, %84 : vector<16x128xf32>
    %c0_86 = arith.constant 0 : index
    %c0_87 = arith.constant 0 : index
    %86 = vector.load %arg7[%c0_86, %c0_87] : memref<32x128xf32, #tpu.memory_space<vmem>>, vector<32x128xf32>
    %cst_88 = arith.constant dense<0.000000e+00> : vector<16x128xf32>
    %87 = tpu.matmul %80, %86, %cst_88 {dimension_numbers = #tpu.dot_dimension_numbers<[1], [0], [0], [1], [0, 0, 1, 1], [], []>} : vector<16x32xf32>, vector<32x128xf32>, vector<16x128xf32> -> vector<16x128xf32>
    %c0_89 = arith.constant 0 : index
    %c0_90 = arith.constant 0 : index
    %88 = vector.load %arg9[%c0_89, %c0_90] : memref<1x128xf32, #tpu.memory_space<vmem>>, vector<1x128xf32>
    %89 = vector.broadcast %88 : vector<1x128xf32> to vector<16x128xf32>
    %90 = arith.addf %87, %89 : vector<16x128xf32>
    %c0_91 = arith.constant 0 : index
    %c0_92 = arith.constant 0 : index
    %91 = vector.load %arg5[%c0_91, %c0_92] : memref<32x128xf32, #tpu.memory_space<vmem>>, vector<32x128xf32>
    %c0_93 = arith.constant 0 : index
    %c0_94 = arith.constant 0 : index
    %92 = vector.load %arg8[%c0_93, %c0_94] : memref<32x128xf32, #tpu.memory_space<vmem>>, vector<32x128xf32>
    %cst_95 = arith.constant 0.000000e+00 : f32
    %93 = vector.broadcast %cst_95 : f32 to vector<2x32xf32>
    %cst_96 = arith.constant 0.000000e+00 : f32
    %94 = vector.broadcast %cst_96 : f32 to vector<2x32xf32>
    %cst_97 = arith.constant 0.000000e+00 : f32
    %95 = vector.broadcast %cst_97 : f32 to vector<2x32xf32>
    %cst_98 = arith.constant 0.000000e+00 : f32
    %96 = vector.broadcast %cst_98 : f32 to vector<2x32xf32>
    %97 = vector.extract_strided_slice %85 {offsets = [0, 0], sizes = [2, 128], strides = [1, 1]} : vector<16x128xf32> to vector<2x128xf32>
    %cst_99 = arith.constant dense<0.000000e+00> : vector<2x128xf32>
    %98 = tpu.matmul %93, %91, %cst_99 {dimension_numbers = #tpu.dot_dimension_numbers<[1], [0], [0], [1], [0, 0, 1, 1], [], []>} : vector<2x32xf32>, vector<32x128xf32>, vector<2x128xf32> -> vector<2x128xf32>
    %99 = arith.addf %97, %98 : vector<2x128xf32>
    %100 = vector.extract_strided_slice %90 {offsets = [14, 0], sizes = [2, 128], strides = [1, 1]} : vector<16x128xf32> to vector<2x128xf32>
    %cst_100 = arith.constant dense<0.000000e+00> : vector<2x128xf32>
    %101 = tpu.matmul %95, %92, %cst_100 {dimension_numbers = #tpu.dot_dimension_numbers<[1], [0], [0], [1], [0, 0, 1, 1], [], []>} : vector<2x32xf32>, vector<32x128xf32>, vector<2x128xf32> -> vector<2x128xf32>
    %102 = arith.addf %100, %101 : vector<2x128xf32>
    %103 = arith.negf %99 : vector<2x128xf32>
    %104 = math.exp %103 : vector<2x128xf32>
    %cst_101 = arith.constant 1.000000e+00 : f32
    %105 = vector.broadcast %cst_101 : f32 to vector<2x128xf32>
    %106 = arith.addf %105, %104 : vector<2x128xf32>
    %107 = arith.divf %105, %106 : vector<2x128xf32>
    %108 = math.tanh %99 : vector<2x128xf32>
    %109 = vector.extract_strided_slice %107 {offsets = [0, 0], sizes = [2, 32], strides = [1, 1]} : vector<2x128xf32> to vector<2x32xf32>
    %110 = vector.extract_strided_slice %107 {offsets = [0, 32], sizes = [2, 32], strides = [1, 1]} : vector<2x128xf32> to vector<2x32xf32>
    %111 = vector.extract_strided_slice %108 {offsets = [0, 64], sizes = [2, 32], strides = [1, 1]} : vector<2x128xf32> to vector<2x32xf32>
    %112 = vector.extract_strided_slice %107 {offsets = [0, 96], sizes = [2, 32], strides = [1, 1]} : vector<2x128xf32> to vector<2x32xf32>
    %113 = arith.mulf %110, %94 : vector<2x32xf32>
    %114 = arith.mulf %109, %111 : vector<2x32xf32>
    %115 = arith.addf %113, %114 : vector<2x32xf32>
    %116 = math.tanh %115 : vector<2x32xf32>
    %117 = arith.mulf %112, %116 : vector<2x32xf32>
    %118 = arith.negf %102 : vector<2x128xf32>
    %119 = math.exp %118 : vector<2x128xf32>
    %cst_102 = arith.constant 1.000000e+00 : f32
    %120 = vector.broadcast %cst_102 : f32 to vector<2x128xf32>
    %121 = arith.addf %120, %119 : vector<2x128xf32>
    %122 = arith.divf %120, %121 : vector<2x128xf32>
    %123 = math.tanh %102 : vector<2x128xf32>
    %124 = vector.extract_strided_slice %122 {offsets = [0, 0], sizes = [2, 32], strides = [1, 1]} : vector<2x128xf32> to vector<2x32xf32>
    %125 = vector.extract_strided_slice %122 {offsets = [0, 32], sizes = [2, 32], strides = [1, 1]} : vector<2x128xf32> to vector<2x32xf32>
    %126 = vector.extract_strided_slice %123 {offsets = [0, 64], sizes = [2, 32], strides = [1, 1]} : vector<2x128xf32> to vector<2x32xf32>
    %127 = vector.extract_strided_slice %122 {offsets = [0, 96], sizes = [2, 32], strides = [1, 1]} : vector<2x128xf32> to vector<2x32xf32>
    %128 = arith.mulf %125, %96 : vector<2x32xf32>
    %129 = arith.mulf %124, %126 : vector<2x32xf32>
    %130 = arith.addf %128, %129 : vector<2x32xf32>
    %131 = math.tanh %130 : vector<2x32xf32>
    %132 = arith.mulf %127, %131 : vector<2x32xf32>
    %c0_103 = arith.constant 0 : index
    %c0_104 = arith.constant 0 : index
    %133 = vector.load %arg25[%c0_103, %c0_104] : memref<16x64xf32, #tpu.memory_space<vmem>>, vector<2x32xf32>
    tpu.vector_store %arg25[%c0_103, %c0_104], %117 {strides = array<i32>} : memref<16x64xf32, #tpu.memory_space<vmem>>, vector<2x32xf32>,
    %c14_105 = arith.constant 14 : index
    %c32 = arith.constant 32 : index
    %134 = vector.load %arg25[%c14_105, %c32] : memref<16x64xf32, #tpu.memory_space<vmem>>, vector<2x32xf32>
    tpu.vector_store %arg25[%c14_105, %c32], %132 {strides = array<i32>} : memref<16x64xf32, #tpu.memory_space<vmem>>, vector<2x32xf32>,
    %135 = vector.extract_strided_slice %85 {offsets = [2, 0], sizes = [2, 128], strides = [1, 1]} : vector<16x128xf32> to vector<2x128xf32>
    %cst_106 = arith.constant dense<0.000000e+00> : vector<2x128xf32>
    %136 = tpu.matmul %117, %91, %cst_106 {dimension_numbers = #tpu.dot_dimension_numbers<[1], [0], [0], [1], [0, 0, 1, 1], [], []>} : vector<2x32xf32>, vector<32x128xf32>, vector<2x128xf32> -> vector<2x128xf32>
    %137 = arith.addf %135, %136 : vector<2x128xf32>
    %138 = vector.extract_strided_slice %90 {offsets = [12, 0], sizes = [2, 128], strides = [1, 1]} : vector<16x128xf32> to vector<2x128xf32>
    %cst_107 = arith.constant dense<0.000000e+00> : vector<2x128xf32>
    %139 = tpu.matmul %132, %92, %cst_107 {dimension_numbers = #tpu.dot_dimension_numbers<[1], [0], [0], [1], [0, 0, 1, 1], [], []>} : vector<2x32xf32>, vector<32x128xf32>, vector<2x128xf32> -> vector<2x128xf32>
    %140 = arith.addf %138, %139 : vector<2x128xf32>
    %141 = arith.negf %137 : vector<2x128xf32>
    %142 = math.exp %141 : vector<2x128xf32>
    %cst_108 = arith.constant 1.000000e+00 : f32
    %143 = vector.broadcast %cst_108 : f32 to vector<2x128xf32>
    %144 = arith.addf %143, %142 : vector<2x128xf32>
    %145 = arith.divf %143, %144 : vector<2x128xf32>
    %146 = math.tanh %137 : vector<2x128xf32>
    %147 = vector.extract_strided_slice %145 {offsets = [0, 0], sizes = [2, 32], strides = [1, 1]} : vector<2x128xf32> to vector<2x32xf32>
    %148 = vector.extract_strided_slice %145 {offsets = [0, 32], sizes = [2, 32], strides = [1, 1]} : vector<2x128xf32> to vector<2x32xf32>
    %149 = vector.extract_strided_slice %146 {offsets = [0, 64], sizes = [2, 32], strides = [1, 1]} : vector<2x128xf32> to vector<2x32xf32>
    %150 = vector.extract_strided_slice %145 {offsets = [0, 96], sizes = [2, 32], strides = [1, 1]} : vector<2x128xf32> to vector<2x32xf32>
    %151 = arith.mulf %148, %115 : vector<2x32xf32>
    %152 = arith.mulf %147, %149 : vector<2x32xf32>
    %153 = arith.addf %151, %152 : vector<2x32xf32>
    %154 = math.tanh %153 : vector<2x32xf32>
    %155 = arith.mulf %150, %154 : vector<2x32xf32>
    %156 = arith.negf %140 : vector<2x128xf32>
    %157 = math.exp %156 : vector<2x128xf32>
    %cst_109 = arith.constant 1.000000e+00 : f32
    %158 = vector.broadcast %cst_109 : f32 to vector<2x128xf32>
    %159 = arith.addf %158, %157 : vector<2x128xf32>
    %160 = arith.divf %158, %159 : vector<2x128xf32>
    %161 = math.tanh %140 : vector<2x128xf32>
    %162 = vector.extract_strided_slice %160 {offsets = [0, 0], sizes = [2, 32], strides = [1, 1]} : vector<2x128xf32> to vector<2x32xf32>
    %163 = vector.extract_strided_slice %160 {offsets = [0, 32], sizes = [2, 32], strides = [1, 1]} : vector<2x128xf32> to vector<2x32xf32>
    %164 = vector.extract_strided_slice %161 {offsets = [0, 64], sizes = [2, 32], strides = [1, 1]} : vector<2x128xf32> to vector<2x32xf32>
    %165 = vector.extract_strided_slice %160 {offsets = [0, 96], sizes = [2, 32], strides = [1, 1]} : vector<2x128xf32> to vector<2x32xf32>
    %166 = arith.mulf %163, %130 : vector<2x32xf32>
    %167 = arith.mulf %162, %164 : vector<2x32xf32>
    %168 = arith.addf %166, %167 : vector<2x32xf32>
    %169 = math.tanh %168 : vector<2x32xf32>
    %170 = arith.mulf %165, %169 : vector<2x32xf32>
    %c2_110 = arith.constant 2 : index
    %c0_111 = arith.constant 0 : index
    %171 = vector.load %arg25[%c2_110, %c0_111] : memref<16x64xf32, #tpu.memory_space<vmem>>, vector<2x32xf32>
    tpu.vector_store %arg25[%c2_110, %c0_111], %155 {strides = array<i32>} : memref<16x64xf32, #tpu.memory_space<vmem>>, vector<2x32xf32>,
    %c12_112 = arith.constant 12 : index
    %c32_113 = arith.constant 32 : index
    %172 = vector.load %arg25[%c12_112, %c32_113] : memref<16x64xf32, #tpu.memory_space<vmem>>, vector<2x32xf32>
    tpu.vector_store %arg25[%c12_112, %c32_113], %170 {strides = array<i32>} : memref<16x64xf32, #tpu.memory_space<vmem>>, vector<2x32xf32>,
    %173 = vector.extract_strided_slice %85 {offsets = [4, 0], sizes = [2, 128], strides = [1, 1]} : vector<16x128xf32> to vector<2x128xf32>
    %cst_114 = arith.constant dense<0.000000e+00> : vector<2x128xf32>
    %174 = tpu.matmul %155, %91, %cst_114 {dimension_numbers = #tpu.dot_dimension_numbers<[1], [0], [0], [1], [0, 0, 1, 1], [], []>} : vector<2x32xf32>, vector<32x128xf32>, vector<2x128xf32> -> vector<2x128xf32>
    %175 = arith.addf %173, %174 : vector<2x128xf32>
    %176 = vector.extract_strided_slice %90 {offsets = [10, 0], sizes = [2, 128], strides = [1, 1]} : vector<16x128xf32> to vector<2x128xf32>
    %cst_115 = arith.constant dense<0.000000e+00> : vector<2x128xf32>
    %177 = tpu.matmul %170, %92, %cst_115 {dimension_numbers = #tpu.dot_dimension_numbers<[1], [0], [0], [1], [0, 0, 1, 1], [], []>} : vector<2x32xf32>, vector<32x128xf32>, vector<2x128xf32> -> vector<2x128xf32>
    %178 = arith.addf %176, %177 : vector<2x128xf32>
    %179 = arith.negf %175 : vector<2x128xf32>
    %180 = math.exp %179 : vector<2x128xf32>
    %cst_116 = arith.constant 1.000000e+00 : f32
    %181 = vector.broadcast %cst_116 : f32 to vector<2x128xf32>
    %182 = arith.addf %181, %180 : vector<2x128xf32>
    %183 = arith.divf %181, %182 : vector<2x128xf32>
    %184 = math.tanh %175 : vector<2x128xf32>
    %185 = vector.extract_strided_slice %183 {offsets = [0, 0], sizes = [2, 32], strides = [1, 1]} : vector<2x128xf32> to vector<2x32xf32>
    %186 = vector.extract_strided_slice %183 {offsets = [0, 32], sizes = [2, 32], strides = [1, 1]} : vector<2x128xf32> to vector<2x32xf32>
    %187 = vector.extract_strided_slice %184 {offsets = [0, 64], sizes = [2, 32], strides = [1, 1]} : vector<2x128xf32> to vector<2x32xf32>
    %188 = vector.extract_strided_slice %183 {offsets = [0, 96], sizes = [2, 32], strides = [1, 1]} : vector<2x128xf32> to vector<2x32xf32>
    %189 = arith.mulf %186, %153 : vector<2x32xf32>
    %190 = arith.mulf %185, %187 : vector<2x32xf32>
    %191 = arith.addf %189, %190 : vector<2x32xf32>
    %192 = math.tanh %191 : vector<2x32xf32>
    %193 = arith.mulf %188, %192 : vector<2x32xf32>
    %194 = arith.negf %178 : vector<2x128xf32>
    %195 = math.exp %194 : vector<2x128xf32>
    %cst_117 = arith.constant 1.000000e+00 : f32
    %196 = vector.broadcast %cst_117 : f32 to vector<2x128xf32>
    %197 = arith.addf %196, %195 : vector<2x128xf32>
    %198 = arith.divf %196, %197 : vector<2x128xf32>
    %199 = math.tanh %178 : vector<2x128xf32>
    %200 = vector.extract_strided_slice %198 {offsets = [0, 0], sizes = [2, 32], strides = [1, 1]} : vector<2x128xf32> to vector<2x32xf32>
    %201 = vector.extract_strided_slice %198 {offsets = [0, 32], sizes = [2, 32], strides = [1, 1]} : vector<2x128xf32> to vector<2x32xf32>
    %202 = vector.extract_strided_slice %199 {offsets = [0, 64], sizes = [2, 32], strides = [1, 1]} : vector<2x128xf32> to vector<2x32xf32>
    %203 = vector.extract_strided_slice %198 {offsets = [0, 96], sizes = [2, 32], strides = [1, 1]} : vector<2x128xf32> to vector<2x32xf32>
    %204 = arith.mulf %201, %168 : vector<2x32xf32>
    %205 = arith.mulf %200, %202 : vector<2x32xf32>
    %206 = arith.addf %204, %205 : vector<2x32xf32>
    %207 = math.tanh %206 : vector<2x32xf32>
    %208 = arith.mulf %203, %207 : vector<2x32xf32>
    %c4_118 = arith.constant 4 : index
    %c0_119 = arith.constant 0 : index
    %209 = vector.load %arg25[%c4_118, %c0_119] : memref<16x64xf32, #tpu.memory_space<vmem>>, vector<2x32xf32>
    tpu.vector_store %arg25[%c4_118, %c0_119], %193 {strides = array<i32>} : memref<16x64xf32, #tpu.memory_space<vmem>>, vector<2x32xf32>,
    %c10_120 = arith.constant 10 : index
    %c32_121 = arith.constant 32 : index
    %210 = vector.load %arg25[%c10_120, %c32_121] : memref<16x64xf32, #tpu.memory_space<vmem>>, vector<2x32xf32>
    tpu.vector_store %arg25[%c10_120, %c32_121], %208 {strides = array<i32>} : memref<16x64xf32, #tpu.memory_space<vmem>>, vector<2x32xf32>,
    %211 = vector.extract_strided_slice %85 {offsets = [6, 0], sizes = [2, 128], strides = [1, 1]} : vector<16x128xf32> to vector<2x128xf32>
    %cst_122 = arith.constant dense<0.000000e+00> : vector<2x128xf32>
    %212 = tpu.matmul %193, %91, %cst_122 {dimension_numbers = #tpu.dot_dimension_numbers<[1], [0], [0], [1], [0, 0, 1, 1], [], []>} : vector<2x32xf32>, vector<32x128xf32>, vector<2x128xf32> -> vector<2x128xf32>
    %213 = arith.addf %211, %212 : vector<2x128xf32>
    %214 = vector.extract_strided_slice %90 {offsets = [8, 0], sizes = [2, 128], strides = [1, 1]} : vector<16x128xf32> to vector<2x128xf32>
    %cst_123 = arith.constant dense<0.000000e+00> : vector<2x128xf32>
    %215 = tpu.matmul %208, %92, %cst_123 {dimension_numbers = #tpu.dot_dimension_numbers<[1], [0], [0], [1], [0, 0, 1, 1], [], []>} : vector<2x32xf32>, vector<32x128xf32>, vector<2x128xf32> -> vector<2x128xf32>
    %216 = arith.addf %214, %215 : vector<2x128xf32>
    %217 = arith.negf %213 : vector<2x128xf32>
    %218 = math.exp %217 : vector<2x128xf32>
    %cst_124 = arith.constant 1.000000e+00 : f32
    %219 = vector.broadcast %cst_124 : f32 to vector<2x128xf32>
    %220 = arith.addf %219, %218 : vector<2x128xf32>
    %221 = arith.divf %219, %220 : vector<2x128xf32>
    %222 = math.tanh %213 : vector<2x128xf32>
    %223 = vector.extract_strided_slice %221 {offsets = [0, 0], sizes = [2, 32], strides = [1, 1]} : vector<2x128xf32> to vector<2x32xf32>
    %224 = vector.extract_strided_slice %221 {offsets = [0, 32], sizes = [2, 32], strides = [1, 1]} : vector<2x128xf32> to vector<2x32xf32>
    %225 = vector.extract_strided_slice %222 {offsets = [0, 64], sizes = [2, 32], strides = [1, 1]} : vector<2x128xf32> to vector<2x32xf32>
    %226 = vector.extract_strided_slice %221 {offsets = [0, 96], sizes = [2, 32], strides = [1, 1]} : vector<2x128xf32> to vector<2x32xf32>
    %227 = arith.mulf %224, %191 : vector<2x32xf32>
    %228 = arith.mulf %223, %225 : vector<2x32xf32>
    %229 = arith.addf %227, %228 : vector<2x32xf32>
    %230 = math.tanh %229 : vector<2x32xf32>
    %231 = arith.mulf %226, %230 : vector<2x32xf32>
    %232 = arith.negf %216 : vector<2x128xf32>
    %233 = math.exp %232 : vector<2x128xf32>
    %cst_125 = arith.constant 1.000000e+00 : f32
    %234 = vector.broadcast %cst_125 : f32 to vector<2x128xf32>
    %235 = arith.addf %234, %233 : vector<2x128xf32>
    %236 = arith.divf %234, %235 : vector<2x128xf32>
    %237 = math.tanh %216 : vector<2x128xf32>
    %238 = vector.extract_strided_slice %236 {offsets = [0, 0], sizes = [2, 32], strides = [1, 1]} : vector<2x128xf32> to vector<2x32xf32>
    %239 = vector.extract_strided_slice %236 {offsets = [0, 32], sizes = [2, 32], strides = [1, 1]} : vector<2x128xf32> to vector<2x32xf32>
    %240 = vector.extract_strided_slice %237 {offsets = [0, 64], sizes = [2, 32], strides = [1, 1]} : vector<2x128xf32> to vector<2x32xf32>
    %241 = vector.extract_strided_slice %236 {offsets = [0, 96], sizes = [2, 32], strides = [1, 1]} : vector<2x128xf32> to vector<2x32xf32>
    %242 = arith.mulf %239, %206 : vector<2x32xf32>
    %243 = arith.mulf %238, %240 : vector<2x32xf32>
    %244 = arith.addf %242, %243 : vector<2x32xf32>
    %245 = math.tanh %244 : vector<2x32xf32>
    %246 = arith.mulf %241, %245 : vector<2x32xf32>
    %c6_126 = arith.constant 6 : index
    %c0_127 = arith.constant 0 : index
    %247 = vector.load %arg25[%c6_126, %c0_127] : memref<16x64xf32, #tpu.memory_space<vmem>>, vector<2x32xf32>
    tpu.vector_store %arg25[%c6_126, %c0_127], %231 {strides = array<i32>} : memref<16x64xf32, #tpu.memory_space<vmem>>, vector<2x32xf32>,
    %c8_128 = arith.constant 8 : index
    %c32_129 = arith.constant 32 : index
    %248 = vector.load %arg25[%c8_128, %c32_129] : memref<16x64xf32, #tpu.memory_space<vmem>>, vector<2x32xf32>
    tpu.vector_store %arg25[%c8_128, %c32_129], %246 {strides = array<i32>} : memref<16x64xf32, #tpu.memory_space<vmem>>, vector<2x32xf32>,
    %249 = vector.extract_strided_slice %85 {offsets = [8, 0], sizes = [2, 128], strides = [1, 1]} : vector<16x128xf32> to vector<2x128xf32>
    %cst_130 = arith.constant dense<0.000000e+00> : vector<2x128xf32>
    %250 = tpu.matmul %231, %91, %cst_130 {dimension_numbers = #tpu.dot_dimension_numbers<[1], [0], [0], [1], [0, 0, 1, 1], [], []>} : vector<2x32xf32>, vector<32x128xf32>, vector<2x128xf32> -> vector<2x128xf32>
    %251 = arith.addf %249, %250 : vector<2x128xf32>
    %252 = vector.extract_strided_slice %90 {offsets = [6, 0], sizes = [2, 128], strides = [1, 1]} : vector<16x128xf32> to vector<2x128xf32>
    %cst_131 = arith.constant dense<0.000000e+00> : vector<2x128xf32>
    %253 = tpu.matmul %246, %92, %cst_131 {dimension_numbers = #tpu.dot_dimension_numbers<[1], [0], [0], [1], [0, 0, 1, 1], [], []>} : vector<2x32xf32>, vector<32x128xf32>, vector<2x128xf32> -> vector<2x128xf32>
    %254 = arith.addf %252, %253 : vector<2x128xf32>
    %255 = arith.negf %251 : vector<2x128xf32>
    %256 = math.exp %255 : vector<2x128xf32>
    %cst_132 = arith.constant 1.000000e+00 : f32
    %257 = vector.broadcast %cst_132 : f32 to vector<2x128xf32>
    %258 = arith.addf %257, %256 : vector<2x128xf32>
    %259 = arith.divf %257, %258 : vector<2x128xf32>
    %260 = math.tanh %251 : vector<2x128xf32>
    %261 = vector.extract_strided_slice %259 {offsets = [0, 0], sizes = [2, 32], strides = [1, 1]} : vector<2x128xf32> to vector<2x32xf32>
    %262 = vector.extract_strided_slice %259 {offsets = [0, 32], sizes = [2, 32], strides = [1, 1]} : vector<2x128xf32> to vector<2x32xf32>
    %263 = vector.extract_strided_slice %260 {offsets = [0, 64], sizes = [2, 32], strides = [1, 1]} : vector<2x128xf32> to vector<2x32xf32>
    %264 = vector.extract_strided_slice %259 {offsets = [0, 96], sizes = [2, 32], strides = [1, 1]} : vector<2x128xf32> to vector<2x32xf32>
    %265 = arith.mulf %262, %229 : vector<2x32xf32>
    %266 = arith.mulf %261, %263 : vector<2x32xf32>
    %267 = arith.addf %265, %266 : vector<2x32xf32>
    %268 = math.tanh %267 : vector<2x32xf32>
    %269 = arith.mulf %264, %268 : vector<2x32xf32>
    %270 = arith.negf %254 : vector<2x128xf32>
    %271 = math.exp %270 : vector<2x128xf32>
    %cst_133 = arith.constant 1.000000e+00 : f32
    %272 = vector.broadcast %cst_133 : f32 to vector<2x128xf32>
    %273 = arith.addf %272, %271 : vector<2x128xf32>
    %274 = arith.divf %272, %273 : vector<2x128xf32>
    %275 = math.tanh %254 : vector<2x128xf32>
    %276 = vector.extract_strided_slice %274 {offsets = [0, 0], sizes = [2, 32], strides = [1, 1]} : vector<2x128xf32> to vector<2x32xf32>
    %277 = vector.extract_strided_slice %274 {offsets = [0, 32], sizes = [2, 32], strides = [1, 1]} : vector<2x128xf32> to vector<2x32xf32>
    %278 = vector.extract_strided_slice %275 {offsets = [0, 64], sizes = [2, 32], strides = [1, 1]} : vector<2x128xf32> to vector<2x32xf32>
    %279 = vector.extract_strided_slice %274 {offsets = [0, 96], sizes = [2, 32], strides = [1, 1]} : vector<2x128xf32> to vector<2x32xf32>
    %280 = arith.mulf %277, %244 : vector<2x32xf32>
    %281 = arith.mulf %276, %278 : vector<2x32xf32>
    %282 = arith.addf %280, %281 : vector<2x32xf32>
    %283 = math.tanh %282 : vector<2x32xf32>
    %284 = arith.mulf %279, %283 : vector<2x32xf32>
    %c8_134 = arith.constant 8 : index
    %c0_135 = arith.constant 0 : index
    %285 = vector.load %arg25[%c8_134, %c0_135] : memref<16x64xf32, #tpu.memory_space<vmem>>, vector<2x32xf32>
    tpu.vector_store %arg25[%c8_134, %c0_135], %269 {strides = array<i32>} : memref<16x64xf32, #tpu.memory_space<vmem>>, vector<2x32xf32>,
    %c6_136 = arith.constant 6 : index
    %c32_137 = arith.constant 32 : index
    %286 = vector.load %arg25[%c6_136, %c32_137] : memref<16x64xf32, #tpu.memory_space<vmem>>, vector<2x32xf32>
    tpu.vector_store %arg25[%c6_136, %c32_137], %284 {strides = array<i32>} : memref<16x64xf32, #tpu.memory_space<vmem>>, vector<2x32xf32>,
    %287 = vector.extract_strided_slice %85 {offsets = [10, 0], sizes = [2, 128], strides = [1, 1]} : vector<16x128xf32> to vector<2x128xf32>
    %cst_138 = arith.constant dense<0.000000e+00> : vector<2x128xf32>
    %288 = tpu.matmul %269, %91, %cst_138 {dimension_numbers = #tpu.dot_dimension_numbers<[1], [0], [0], [1], [0, 0, 1, 1], [], []>} : vector<2x32xf32>, vector<32x128xf32>, vector<2x128xf32> -> vector<2x128xf32>
    %289 = arith.addf %287, %288 : vector<2x128xf32>
    %290 = vector.extract_strided_slice %90 {offsets = [4, 0], sizes = [2, 128], strides = [1, 1]} : vector<16x128xf32> to vector<2x128xf32>
    %cst_139 = arith.constant dense<0.000000e+00> : vector<2x128xf32>
    %291 = tpu.matmul %284, %92, %cst_139 {dimension_numbers = #tpu.dot_dimension_numbers<[1], [0], [0], [1], [0, 0, 1, 1], [], []>} : vector<2x32xf32>, vector<32x128xf32>, vector<2x128xf32> -> vector<2x128xf32>
    %292 = arith.addf %290, %291 : vector<2x128xf32>
    %293 = arith.negf %289 : vector<2x128xf32>
    %294 = math.exp %293 : vector<2x128xf32>
    %cst_140 = arith.constant 1.000000e+00 : f32
    %295 = vector.broadcast %cst_140 : f32 to vector<2x128xf32>
    %296 = arith.addf %295, %294 : vector<2x128xf32>
    %297 = arith.divf %295, %296 : vector<2x128xf32>
    %298 = math.tanh %289 : vector<2x128xf32>
    %299 = vector.extract_strided_slice %297 {offsets = [0, 0], sizes = [2, 32], strides = [1, 1]} : vector<2x128xf32> to vector<2x32xf32>
    %300 = vector.extract_strided_slice %297 {offsets = [0, 32], sizes = [2, 32], strides = [1, 1]} : vector<2x128xf32> to vector<2x32xf32>
    %301 = vector.extract_strided_slice %298 {offsets = [0, 64], sizes = [2, 32], strides = [1, 1]} : vector<2x128xf32> to vector<2x32xf32>
    %302 = vector.extract_strided_slice %297 {offsets = [0, 96], sizes = [2, 32], strides = [1, 1]} : vector<2x128xf32> to vector<2x32xf32>
    %303 = arith.mulf %300, %267 : vector<2x32xf32>
    %304 = arith.mulf %299, %301 : vector<2x32xf32>
    %305 = arith.addf %303, %304 : vector<2x32xf32>
    %306 = math.tanh %305 : vector<2x32xf32>
    %307 = arith.mulf %302, %306 : vector<2x32xf32>
    %308 = arith.negf %292 : vector<2x128xf32>
    %309 = math.exp %308 : vector<2x128xf32>
    %cst_141 = arith.constant 1.000000e+00 : f32
    %310 = vector.broadcast %cst_141 : f32 to vector<2x128xf32>
    %311 = arith.addf %310, %309 : vector<2x128xf32>
    %312 = arith.divf %310, %311 : vector<2x128xf32>
    %313 = math.tanh %292 : vector<2x128xf32>
    %314 = vector.extract_strided_slice %312 {offsets = [0, 0], sizes = [2, 32], strides = [1, 1]} : vector<2x128xf32> to vector<2x32xf32>
    %315 = vector.extract_strided_slice %312 {offsets = [0, 32], sizes = [2, 32], strides = [1, 1]} : vector<2x128xf32> to vector<2x32xf32>
    %316 = vector.extract_strided_slice %313 {offsets = [0, 64], sizes = [2, 32], strides = [1, 1]} : vector<2x128xf32> to vector<2x32xf32>
    %317 = vector.extract_strided_slice %312 {offsets = [0, 96], sizes = [2, 32], strides = [1, 1]} : vector<2x128xf32> to vector<2x32xf32>
    %318 = arith.mulf %315, %282 : vector<2x32xf32>
    %319 = arith.mulf %314, %316 : vector<2x32xf32>
    %320 = arith.addf %318, %319 : vector<2x32xf32>
    %321 = math.tanh %320 : vector<2x32xf32>
    %322 = arith.mulf %317, %321 : vector<2x32xf32>
    %c10_142 = arith.constant 10 : index
    %c0_143 = arith.constant 0 : index
    %323 = vector.load %arg25[%c10_142, %c0_143] : memref<16x64xf32, #tpu.memory_space<vmem>>, vector<2x32xf32>
    tpu.vector_store %arg25[%c10_142, %c0_143], %307 {strides = array<i32>} : memref<16x64xf32, #tpu.memory_space<vmem>>, vector<2x32xf32>,
    %c4_144 = arith.constant 4 : index
    %c32_145 = arith.constant 32 : index
    %324 = vector.load %arg25[%c4_144, %c32_145] : memref<16x64xf32, #tpu.memory_space<vmem>>, vector<2x32xf32>
    tpu.vector_store %arg25[%c4_144, %c32_145], %322 {strides = array<i32>} : memref<16x64xf32, #tpu.memory_space<vmem>>, vector<2x32xf32>,
    %325 = vector.extract_strided_slice %85 {offsets = [12, 0], sizes = [2, 128], strides = [1, 1]} : vector<16x128xf32> to vector<2x128xf32>
    %cst_146 = arith.constant dense<0.000000e+00> : vector<2x128xf32>
    %326 = tpu.matmul %307, %91, %cst_146 {dimension_numbers = #tpu.dot_dimension_numbers<[1], [0], [0], [1], [0, 0, 1, 1], [], []>} : vector<2x32xf32>, vector<32x128xf32>, vector<2x128xf32> -> vector<2x128xf32>
    %327 = arith.addf %325, %326 : vector<2x128xf32>
    %328 = vector.extract_strided_slice %90 {offsets = [2, 0], sizes = [2, 128], strides = [1, 1]} : vector<16x128xf32> to vector<2x128xf32>
    %cst_147 = arith.constant dense<0.000000e+00> : vector<2x128xf32>
    %329 = tpu.matmul %322, %92, %cst_147 {dimension_numbers = #tpu.dot_dimension_numbers<[1], [0], [0], [1], [0, 0, 1, 1], [], []>} : vector<2x32xf32>, vector<32x128xf32>, vector<2x128xf32> -> vector<2x128xf32>
    %330 = arith.addf %328, %329 : vector<2x128xf32>
    %331 = arith.negf %327 : vector<2x128xf32>
    %332 = math.exp %331 : vector<2x128xf32>
    %cst_148 = arith.constant 1.000000e+00 : f32
    %333 = vector.broadcast %cst_148 : f32 to vector<2x128xf32>
    %334 = arith.addf %333, %332 : vector<2x128xf32>
    %335 = arith.divf %333, %334 : vector<2x128xf32>
    %336 = math.tanh %327 : vector<2x128xf32>
    %337 = vector.extract_strided_slice %335 {offsets = [0, 0], sizes = [2, 32], strides = [1, 1]} : vector<2x128xf32> to vector<2x32xf32>
    %338 = vector.extract_strided_slice %335 {offsets = [0, 32], sizes = [2, 32], strides = [1, 1]} : vector<2x128xf32> to vector<2x32xf32>
    %339 = vector.extract_strided_slice %336 {offsets = [0, 64], sizes = [2, 32], strides = [1, 1]} : vector<2x128xf32> to vector<2x32xf32>
    %340 = vector.extract_strided_slice %335 {offsets = [0, 96], sizes = [2, 32], strides = [1, 1]} : vector<2x128xf32> to vector<2x32xf32>
    %341 = arith.mulf %338, %305 : vector<2x32xf32>
    %342 = arith.mulf %337, %339 : vector<2x32xf32>
    %343 = arith.addf %341, %342 : vector<2x32xf32>
    %344 = math.tanh %343 : vector<2x32xf32>
    %345 = arith.mulf %340, %344 : vector<2x32xf32>
    %346 = arith.negf %330 : vector<2x128xf32>
    %347 = math.exp %346 : vector<2x128xf32>
    %cst_149 = arith.constant 1.000000e+00 : f32
    %348 = vector.broadcast %cst_149 : f32 to vector<2x128xf32>
    %349 = arith.addf %348, %347 : vector<2x128xf32>
    %350 = arith.divf %348, %349 : vector<2x128xf32>
    %351 = math.tanh %330 : vector<2x128xf32>
    %352 = vector.extract_strided_slice %350 {offsets = [0, 0], sizes = [2, 32], strides = [1, 1]} : vector<2x128xf32> to vector<2x32xf32>
    %353 = vector.extract_strided_slice %350 {offsets = [0, 32], sizes = [2, 32], strides = [1, 1]} : vector<2x128xf32> to vector<2x32xf32>
    %354 = vector.extract_strided_slice %351 {offsets = [0, 64], sizes = [2, 32], strides = [1, 1]} : vector<2x128xf32> to vector<2x32xf32>
    %355 = vector.extract_strided_slice %350 {offsets = [0, 96], sizes = [2, 32], strides = [1, 1]} : vector<2x128xf32> to vector<2x32xf32>
    %356 = arith.mulf %353, %320 : vector<2x32xf32>
    %357 = arith.mulf %352, %354 : vector<2x32xf32>
    %358 = arith.addf %356, %357 : vector<2x32xf32>
    %359 = math.tanh %358 : vector<2x32xf32>
    %360 = arith.mulf %355, %359 : vector<2x32xf32>
    %c12_150 = arith.constant 12 : index
    %c0_151 = arith.constant 0 : index
    %361 = vector.load %arg25[%c12_150, %c0_151] : memref<16x64xf32, #tpu.memory_space<vmem>>, vector<2x32xf32>
    tpu.vector_store %arg25[%c12_150, %c0_151], %345 {strides = array<i32>} : memref<16x64xf32, #tpu.memory_space<vmem>>, vector<2x32xf32>,
    %c2_152 = arith.constant 2 : index
    %c32_153 = arith.constant 32 : index
    %362 = vector.load %arg25[%c2_152, %c32_153] : memref<16x64xf32, #tpu.memory_space<vmem>>, vector<2x32xf32>
    tpu.vector_store %arg25[%c2_152, %c32_153], %360 {strides = array<i32>} : memref<16x64xf32, #tpu.memory_space<vmem>>, vector<2x32xf32>,
    %363 = vector.extract_strided_slice %85 {offsets = [14, 0], sizes = [2, 128], strides = [1, 1]} : vector<16x128xf32> to vector<2x128xf32>
    %cst_154 = arith.constant dense<0.000000e+00> : vector<2x128xf32>
    %364 = tpu.matmul %345, %91, %cst_154 {dimension_numbers = #tpu.dot_dimension_numbers<[1], [0], [0], [1], [0, 0, 1, 1], [], []>} : vector<2x32xf32>, vector<32x128xf32>, vector<2x128xf32> -> vector<2x128xf32>
    %365 = arith.addf %363, %364 : vector<2x128xf32>
    %366 = vector.extract_strided_slice %90 {offsets = [0, 0], sizes = [2, 128], strides = [1, 1]} : vector<16x128xf32> to vector<2x128xf32>
    %cst_155 = arith.constant dense<0.000000e+00> : vector<2x128xf32>
    %367 = tpu.matmul %360, %92, %cst_155 {dimension_numbers = #tpu.dot_dimension_numbers<[1], [0], [0], [1], [0, 0, 1, 1], [], []>} : vector<2x32xf32>, vector<32x128xf32>, vector<2x128xf32> -> vector<2x128xf32>
    %368 = arith.addf %366, %367 : vector<2x128xf32>
    %369 = arith.negf %365 : vector<2x128xf32>
    %370 = math.exp %369 : vector<2x128xf32>
    %cst_156 = arith.constant 1.000000e+00 : f32
    %371 = vector.broadcast %cst_156 : f32 to vector<2x128xf32>
    %372 = arith.addf %371, %370 : vector<2x128xf32>
    %373 = arith.divf %371, %372 : vector<2x128xf32>
    %374 = math.tanh %365 : vector<2x128xf32>
    %375 = vector.extract_strided_slice %373 {offsets = [0, 0], sizes = [2, 32], strides = [1, 1]} : vector<2x128xf32> to vector<2x32xf32>
    %376 = vector.extract_strided_slice %373 {offsets = [0, 32], sizes = [2, 32], strides = [1, 1]} : vector<2x128xf32> to vector<2x32xf32>
    %377 = vector.extract_strided_slice %374 {offsets = [0, 64], sizes = [2, 32], strides = [1, 1]} : vector<2x128xf32> to vector<2x32xf32>
    %378 = vector.extract_strided_slice %373 {offsets = [0, 96], sizes = [2, 32], strides = [1, 1]} : vector<2x128xf32> to vector<2x32xf32>
    %379 = arith.mulf %376, %343 : vector<2x32xf32>
    %380 = arith.mulf %375, %377 : vector<2x32xf32>
    %381 = arith.addf %379, %380 : vector<2x32xf32>
    %382 = math.tanh %381 : vector<2x32xf32>
    %383 = arith.mulf %378, %382 : vector<2x32xf32>
    %384 = arith.negf %368 : vector<2x128xf32>
    %385 = math.exp %384 : vector<2x128xf32>
    %cst_157 = arith.constant 1.000000e+00 : f32
    %386 = vector.broadcast %cst_157 : f32 to vector<2x128xf32>
    %387 = arith.addf %386, %385 : vector<2x128xf32>
    %388 = arith.divf %386, %387 : vector<2x128xf32>
    %389 = math.tanh %368 : vector<2x128xf32>
    %390 = vector.extract_strided_slice %388 {offsets = [0, 0], sizes = [2, 32], strides = [1, 1]} : vector<2x128xf32> to vector<2x32xf32>
    %391 = vector.extract_strided_slice %388 {offsets = [0, 32], sizes = [2, 32], strides = [1, 1]} : vector<2x128xf32> to vector<2x32xf32>
    %392 = vector.extract_strided_slice %389 {offsets = [0, 64], sizes = [2, 32], strides = [1, 1]} : vector<2x128xf32> to vector<2x32xf32>
    %393 = vector.extract_strided_slice %388 {offsets = [0, 96], sizes = [2, 32], strides = [1, 1]} : vector<2x128xf32> to vector<2x32xf32>
    %394 = arith.mulf %391, %358 : vector<2x32xf32>
    %395 = arith.mulf %390, %392 : vector<2x32xf32>
    %396 = arith.addf %394, %395 : vector<2x32xf32>
    %397 = math.tanh %396 : vector<2x32xf32>
    %398 = arith.mulf %393, %397 : vector<2x32xf32>
    %c14_158 = arith.constant 14 : index
    %c0_159 = arith.constant 0 : index
    %399 = vector.load %arg25[%c14_158, %c0_159] : memref<16x64xf32, #tpu.memory_space<vmem>>, vector<2x32xf32>
    tpu.vector_store %arg25[%c14_158, %c0_159], %383 {strides = array<i32>} : memref<16x64xf32, #tpu.memory_space<vmem>>, vector<2x32xf32>,
    %c0_160 = arith.constant 0 : index
    %c32_161 = arith.constant 32 : index
    %400 = vector.load %arg25[%c0_160, %c32_161] : memref<16x64xf32, #tpu.memory_space<vmem>>, vector<2x32xf32>
    tpu.vector_store %arg25[%c0_160, %c32_161], %398 {strides = array<i32>} : memref<16x64xf32, #tpu.memory_space<vmem>>, vector<2x32xf32>,
    %c0_162 = arith.constant 0 : index
    %c0_163 = arith.constant 0 : index
    %401 = vector.load %arg25[%c0_162, %c0_163] : memref<16x64xf32, #tpu.memory_space<vmem>>, vector<16x64xf32>
    %c0_164 = arith.constant 0 : index
    %c0_165 = arith.constant 0 : index
    %402 = vector.load %arg10[%c0_164, %c0_165] : memref<64x128xf32, #tpu.memory_space<vmem>>, vector<64x128xf32>
    %cst_166 = arith.constant dense<0.000000e+00> : vector<16x128xf32>
    %403 = tpu.matmul %401, %402, %cst_166 {dimension_numbers = #tpu.dot_dimension_numbers<[1], [0], [0], [1], [0, 0, 1, 1], [], []>} : vector<16x64xf32>, vector<64x128xf32>, vector<16x128xf32> -> vector<16x128xf32>
    %c0_167 = arith.constant 0 : index
    %c0_168 = arith.constant 0 : index
    %404 = vector.load %arg12[%c0_167, %c0_168] : memref<1x128xf32, #tpu.memory_space<vmem>>, vector<1x128xf32>
    %405 = vector.broadcast %404 : vector<1x128xf32> to vector<16x128xf32>
    %406 = arith.addf %403, %405 : vector<16x128xf32>
    %c0_169 = arith.constant 0 : index
    %c0_170 = arith.constant 0 : index
    %407 = vector.load %arg13[%c0_169, %c0_170] : memref<64x128xf32, #tpu.memory_space<vmem>>, vector<64x128xf32>
    %cst_171 = arith.constant dense<0.000000e+00> : vector<16x128xf32>
    %408 = tpu.matmul %401, %407, %cst_171 {dimension_numbers = #tpu.dot_dimension_numbers<[1], [0], [0], [1], [0, 0, 1, 1], [], []>} : vector<16x64xf32>, vector<64x128xf32>, vector<16x128xf32> -> vector<16x128xf32>
    %c0_172 = arith.constant 0 : index
    %c0_173 = arith.constant 0 : index
    %409 = vector.load %arg15[%c0_172, %c0_173] : memref<1x128xf32, #tpu.memory_space<vmem>>, vector<1x128xf32>
    %410 = vector.broadcast %409 : vector<1x128xf32> to vector<16x128xf32>
    %411 = arith.addf %408, %410 : vector<16x128xf32>
    %c0_174 = arith.constant 0 : index
    %c0_175 = arith.constant 0 : index
    %412 = vector.load %arg11[%c0_174, %c0_175] : memref<32x128xf32, #tpu.memory_space<vmem>>, vector<32x128xf32>
    %c0_176 = arith.constant 0 : index
    %c0_177 = arith.constant 0 : index
    %413 = vector.load %arg14[%c0_176, %c0_177] : memref<32x128xf32, #tpu.memory_space<vmem>>, vector<32x128xf32>
    %cst_178 = arith.constant 0.000000e+00 : f32
    %414 = vector.broadcast %cst_178 : f32 to vector<2x32xf32>
    %cst_179 = arith.constant 0.000000e+00 : f32
    %415 = vector.broadcast %cst_179 : f32 to vector<2x32xf32>
    %cst_180 = arith.constant 0.000000e+00 : f32
    %416 = vector.broadcast %cst_180 : f32 to vector<2x32xf32>
    %cst_181 = arith.constant 0.000000e+00 : f32
    %417 = vector.broadcast %cst_181 : f32 to vector<2x32xf32>
    %418 = vector.extract_strided_slice %406 {offsets = [0, 0], sizes = [2, 128], strides = [1, 1]} : vector<16x128xf32> to vector<2x128xf32>
    %cst_182 = arith.constant dense<0.000000e+00> : vector<2x128xf32>
    %419 = tpu.matmul %414, %412, %cst_182 {dimension_numbers = #tpu.dot_dimension_numbers<[1], [0], [0], [1], [0, 0, 1, 1], [], []>} : vector<2x32xf32>, vector<32x128xf32>, vector<2x128xf32> -> vector<2x128xf32>
    %420 = arith.addf %418, %419 : vector<2x128xf32>
    %421 = vector.extract_strided_slice %411 {offsets = [14, 0], sizes = [2, 128], strides = [1, 1]} : vector<16x128xf32> to vector<2x128xf32>
    %cst_183 = arith.constant dense<0.000000e+00> : vector<2x128xf32>
    %422 = tpu.matmul %416, %413, %cst_183 {dimension_numbers = #tpu.dot_dimension_numbers<[1], [0], [0], [1], [0, 0, 1, 1], [], []>} : vector<2x32xf32>, vector<32x128xf32>, vector<2x128xf32> -> vector<2x128xf32>
    %423 = arith.addf %421, %422 : vector<2x128xf32>
    %424 = arith.negf %420 : vector<2x128xf32>
    %425 = math.exp %424 : vector<2x128xf32>
    %cst_184 = arith.constant 1.000000e+00 : f32
    %426 = vector.broadcast %cst_184 : f32 to vector<2x128xf32>
    %427 = arith.addf %426, %425 : vector<2x128xf32>
    %428 = arith.divf %426, %427 : vector<2x128xf32>
    %429 = math.tanh %420 : vector<2x128xf32>
    %430 = vector.extract_strided_slice %428 {offsets = [0, 0], sizes = [2, 32], strides = [1, 1]} : vector<2x128xf32> to vector<2x32xf32>
    %431 = vector.extract_strided_slice %428 {offsets = [0, 32], sizes = [2, 32], strides = [1, 1]} : vector<2x128xf32> to vector<2x32xf32>
    %432 = vector.extract_strided_slice %429 {offsets = [0, 64], sizes = [2, 32], strides = [1, 1]} : vector<2x128xf32> to vector<2x32xf32>
    %433 = vector.extract_strided_slice %428 {offsets = [0, 96], sizes = [2, 32], strides = [1, 1]} : vector<2x128xf32> to vector<2x32xf32>
    %434 = arith.mulf %431, %415 : vector<2x32xf32>
    %435 = arith.mulf %430, %432 : vector<2x32xf32>
    %436 = arith.addf %434, %435 : vector<2x32xf32>
    %437 = math.tanh %436 : vector<2x32xf32>
    %438 = arith.mulf %433, %437 : vector<2x32xf32>
    %439 = arith.negf %423 : vector<2x128xf32>
    %440 = math.exp %439 : vector<2x128xf32>
    %cst_185 = arith.constant 1.000000e+00 : f32
    %441 = vector.broadcast %cst_185 : f32 to vector<2x128xf32>
    %442 = arith.addf %441, %440 : vector<2x128xf32>
    %443 = arith.divf %441, %442 : vector<2x128xf32>
    %444 = math.tanh %423 : vector<2x128xf32>
    %445 = vector.extract_strided_slice %443 {offsets = [0, 0], sizes = [2, 32], strides = [1, 1]} : vector<2x128xf32> to vector<2x32xf32>
    %446 = vector.extract_strided_slice %443 {offsets = [0, 32], sizes = [2, 32], strides = [1, 1]} : vector<2x128xf32> to vector<2x32xf32>
    %447 = vector.extract_strided_slice %444 {offsets = [0, 64], sizes = [2, 32], strides = [1, 1]} : vector<2x128xf32> to vector<2x32xf32>
    %448 = vector.extract_strided_slice %443 {offsets = [0, 96], sizes = [2, 32], strides = [1, 1]} : vector<2x128xf32> to vector<2x32xf32>
    %449 = arith.mulf %446, %417 : vector<2x32xf32>
    %450 = arith.mulf %445, %447 : vector<2x32xf32>
    %451 = arith.addf %449, %450 : vector<2x32xf32>
    %452 = math.tanh %451 : vector<2x32xf32>
    %453 = arith.mulf %448, %452 : vector<2x32xf32>
    %454 = vector.extract_strided_slice %438 {offsets = [0, 0], sizes = [1, 32], strides = [1, 1]} : vector<2x32xf32> to vector<1x32xf32>
    %c0_186 = arith.constant 0 : index
    %c0_187 = arith.constant 0 : index
    %455 = vector.load %arg26[%c0_186, %c0_187] : memref<16x64xf32, #tpu.memory_space<vmem>>, vector<1x32xf32>
    tpu.vector_store %arg26[%c0_186, %c0_187], %454 {strides = array<i32>} : memref<16x64xf32, #tpu.memory_space<vmem>>, vector<1x32xf32>,
    %456 = vector.extract_strided_slice %453 {offsets = [0, 0], sizes = [1, 32], strides = [1, 1]} : vector<2x32xf32> to vector<1x32xf32>
    %c7_188 = arith.constant 7 : index
    %c32_189 = arith.constant 32 : index
    %457 = vector.load %arg26[%c7_188, %c32_189] : memref<16x64xf32, #tpu.memory_space<vmem>>, vector<1x32xf32>
    tpu.vector_store %arg26[%c7_188, %c32_189], %456 {strides = array<i32>} : memref<16x64xf32, #tpu.memory_space<vmem>>, vector<1x32xf32>,
    %458 = vector.extract_strided_slice %438 {offsets = [1, 0], sizes = [1, 32], strides = [1, 1]} : vector<2x32xf32> to vector<1x32xf32>
    %c8_190 = arith.constant 8 : index
    %c0_191 = arith.constant 0 : index
    %459 = vector.load %arg26[%c8_190, %c0_191] : memref<16x64xf32, #tpu.memory_space<vmem>>, vector<1x32xf32>
    tpu.vector_store %arg26[%c8_190, %c0_191], %458 {strides = array<i32>} : memref<16x64xf32, #tpu.memory_space<vmem>>, vector<1x32xf32>,
    %460 = vector.extract_strided_slice %453 {offsets = [1, 0], sizes = [1, 32], strides = [1, 1]} : vector<2x32xf32> to vector<1x32xf32>
    %c15_192 = arith.constant 15 : index
    %c32_193 = arith.constant 32 : index
    %461 = vector.load %arg26[%c15_192, %c32_193] : memref<16x64xf32, #tpu.memory_space<vmem>>, vector<1x32xf32>
    tpu.vector_store %arg26[%c15_192, %c32_193], %460 {strides = array<i32>} : memref<16x64xf32, #tpu.memory_space<vmem>>, vector<1x32xf32>,
    %462 = vector.extract_strided_slice %406 {offsets = [2, 0], sizes = [2, 128], strides = [1, 1]} : vector<16x128xf32> to vector<2x128xf32>
    %cst_194 = arith.constant dense<0.000000e+00> : vector<2x128xf32>
    %463 = tpu.matmul %438, %412, %cst_194 {dimension_numbers = #tpu.dot_dimension_numbers<[1], [0], [0], [1], [0, 0, 1, 1], [], []>} : vector<2x32xf32>, vector<32x128xf32>, vector<2x128xf32> -> vector<2x128xf32>
    %464 = arith.addf %462, %463 : vector<2x128xf32>
    %465 = vector.extract_strided_slice %411 {offsets = [12, 0], sizes = [2, 128], strides = [1, 1]} : vector<16x128xf32> to vector<2x128xf32>
    %cst_195 = arith.constant dense<0.000000e+00> : vector<2x128xf32>
    %466 = tpu.matmul %453, %413, %cst_195 {dimension_numbers = #tpu.dot_dimension_numbers<[1], [0], [0], [1], [0, 0, 1, 1], [], []>} : vector<2x32xf32>, vector<32x128xf32>, vector<2x128xf32> -> vector<2x128xf32>
    %467 = arith.addf %465, %466 : vector<2x128xf32>
    %468 = arith.negf %464 : vector<2x128xf32>
    %469 = math.exp %468 : vector<2x128xf32>
    %cst_196 = arith.constant 1.000000e+00 : f32
    %470 = vector.broadcast %cst_196 : f32 to vector<2x128xf32>
    %471 = arith.addf %470, %469 : vector<2x128xf32>
    %472 = arith.divf %470, %471 : vector<2x128xf32>
    %473 = math.tanh %464 : vector<2x128xf32>
    %474 = vector.extract_strided_slice %472 {offsets = [0, 0], sizes = [2, 32], strides = [1, 1]} : vector<2x128xf32> to vector<2x32xf32>
    %475 = vector.extract_strided_slice %472 {offsets = [0, 32], sizes = [2, 32], strides = [1, 1]} : vector<2x128xf32> to vector<2x32xf32>
    %476 = vector.extract_strided_slice %473 {offsets = [0, 64], sizes = [2, 32], strides = [1, 1]} : vector<2x128xf32> to vector<2x32xf32>
    %477 = vector.extract_strided_slice %472 {offsets = [0, 96], sizes = [2, 32], strides = [1, 1]} : vector<2x128xf32> to vector<2x32xf32>
    %478 = arith.mulf %475, %436 : vector<2x32xf32>
    %479 = arith.mulf %474, %476 : vector<2x32xf32>
    %480 = arith.addf %478, %479 : vector<2x32xf32>
    %481 = math.tanh %480 : vector<2x32xf32>
    %482 = arith.mulf %477, %481 : vector<2x32xf32>
    %483 = arith.negf %467 : vector<2x128xf32>
    %484 = math.exp %483 : vector<2x128xf32>
    %cst_197 = arith.constant 1.000000e+00 : f32
    %485 = vector.broadcast %cst_197 : f32 to vector<2x128xf32>
    %486 = arith.addf %485, %484 : vector<2x128xf32>
    %487 = arith.divf %485, %486 : vector<2x128xf32>
    %488 = math.tanh %467 : vector<2x128xf32>
    %489 = vector.extract_strided_slice %487 {offsets = [0, 0], sizes = [2, 32], strides = [1, 1]} : vector<2x128xf32> to vector<2x32xf32>
    %490 = vector.extract_strided_slice %487 {offsets = [0, 32], sizes = [2, 32], strides = [1, 1]} : vector<2x128xf32> to vector<2x32xf32>
    %491 = vector.extract_strided_slice %488 {offsets = [0, 64], sizes = [2, 32], strides = [1, 1]} : vector<2x128xf32> to vector<2x32xf32>
    %492 = vector.extract_strided_slice %487 {offsets = [0, 96], sizes = [2, 32], strides = [1, 1]} : vector<2x128xf32> to vector<2x32xf32>
    %493 = arith.mulf %490, %451 : vector<2x32xf32>
    %494 = arith.mulf %489, %491 : vector<2x32xf32>
    %495 = arith.addf %493, %494 : vector<2x32xf32>
    %496 = math.tanh %495 : vector<2x32xf32>
    %497 = arith.mulf %492, %496 : vector<2x32xf32>
    %498 = vector.extract_strided_slice %482 {offsets = [0, 0], sizes = [1, 32], strides = [1, 1]} : vector<2x32xf32> to vector<1x32xf32>
    %c1_198 = arith.constant 1 : index
    %c0_199 = arith.constant 0 : index
    %499 = vector.load %arg26[%c1_198, %c0_199] : memref<16x64xf32, #tpu.memory_space<vmem>>, vector<1x32xf32>
    tpu.vector_store %arg26[%c1_198, %c0_199], %498 {strides = array<i32>} : memref<16x64xf32, #tpu.memory_space<vmem>>, vector<1x32xf32>,
    %500 = vector.extract_strided_slice %497 {offsets = [0, 0], sizes = [1, 32], strides = [1, 1]} : vector<2x32xf32> to vector<1x32xf32>
    %c6_200 = arith.constant 6 : index
    %c32_201 = arith.constant 32 : index
    %501 = vector.load %arg26[%c6_200, %c32_201] : memref<16x64xf32, #tpu.memory_space<vmem>>, vector<1x32xf32>
    tpu.vector_store %arg26[%c6_200, %c32_201], %500 {strides = array<i32>} : memref<16x64xf32, #tpu.memory_space<vmem>>, vector<1x32xf32>,
    %502 = vector.extract_strided_slice %482 {offsets = [1, 0], sizes = [1, 32], strides = [1, 1]} : vector<2x32xf32> to vector<1x32xf32>
    %c9_202 = arith.constant 9 : index
    %c0_203 = arith.constant 0 : index
    %503 = vector.load %arg26[%c9_202, %c0_203] : memref<16x64xf32, #tpu.memory_space<vmem>>, vector<1x32xf32>
    tpu.vector_store %arg26[%c9_202, %c0_203], %502 {strides = array<i32>} : memref<16x64xf32, #tpu.memory_space<vmem>>, vector<1x32xf32>,
    %504 = vector.extract_strided_slice %497 {offsets = [1, 0], sizes = [1, 32], strides = [1, 1]} : vector<2x32xf32> to vector<1x32xf32>
    %c14_204 = arith.constant 14 : index
    %c32_205 = arith.constant 32 : index
    %505 = vector.load %arg26[%c14_204, %c32_205] : memref<16x64xf32, #tpu.memory_space<vmem>>, vector<1x32xf32>
    tpu.vector_store %arg26[%c14_204, %c32_205], %504 {strides = array<i32>} : memref<16x64xf32, #tpu.memory_space<vmem>>, vector<1x32xf32>,
    %506 = vector.extract_strided_slice %406 {offsets = [4, 0], sizes = [2, 128], strides = [1, 1]} : vector<16x128xf32> to vector<2x128xf32>
    %cst_206 = arith.constant dense<0.000000e+00> : vector<2x128xf32>
    %507 = tpu.matmul %482, %412, %cst_206 {dimension_numbers = #tpu.dot_dimension_numbers<[1], [0], [0], [1], [0, 0, 1, 1], [], []>} : vector<2x32xf32>, vector<32x128xf32>, vector<2x128xf32> -> vector<2x128xf32>
    %508 = arith.addf %506, %507 : vector<2x128xf32>
    %509 = vector.extract_strided_slice %411 {offsets = [10, 0], sizes = [2, 128], strides = [1, 1]} : vector<16x128xf32> to vector<2x128xf32>
    %cst_207 = arith.constant dense<0.000000e+00> : vector<2x128xf32>
    %510 = tpu.matmul %497, %413, %cst_207 {dimension_numbers = #tpu.dot_dimension_numbers<[1], [0], [0], [1], [0, 0, 1, 1], [], []>} : vector<2x32xf32>, vector<32x128xf32>, vector<2x128xf32> -> vector<2x128xf32>
    %511 = arith.addf %509, %510 : vector<2x128xf32>
    %512 = arith.negf %508 : vector<2x128xf32>
    %513 = math.exp %512 : vector<2x128xf32>
    %cst_208 = arith.constant 1.000000e+00 : f32
    %514 = vector.broadcast %cst_208 : f32 to vector<2x128xf32>
    %515 = arith.addf %514, %513 : vector<2x128xf32>
    %516 = arith.divf %514, %515 : vector<2x128xf32>
    %517 = math.tanh %508 : vector<2x128xf32>
    %518 = vector.extract_strided_slice %516 {offsets = [0, 0], sizes = [2, 32], strides = [1, 1]} : vector<2x128xf32> to vector<2x32xf32>
    %519 = vector.extract_strided_slice %516 {offsets = [0, 32], sizes = [2, 32], strides = [1, 1]} : vector<2x128xf32> to vector<2x32xf32>
    %520 = vector.extract_strided_slice %517 {offsets = [0, 64], sizes = [2, 32], strides = [1, 1]} : vector<2x128xf32> to vector<2x32xf32>
    %521 = vector.extract_strided_slice %516 {offsets = [0, 96], sizes = [2, 32], strides = [1, 1]} : vector<2x128xf32> to vector<2x32xf32>
    %522 = arith.mulf %519, %480 : vector<2x32xf32>
    %523 = arith.mulf %518, %520 : vector<2x32xf32>
    %524 = arith.addf %522, %523 : vector<2x32xf32>
    %525 = math.tanh %524 : vector<2x32xf32>
    %526 = arith.mulf %521, %525 : vector<2x32xf32>
    %527 = arith.negf %511 : vector<2x128xf32>
    %528 = math.exp %527 : vector<2x128xf32>
    %cst_209 = arith.constant 1.000000e+00 : f32
    %529 = vector.broadcast %cst_209 : f32 to vector<2x128xf32>
    %530 = arith.addf %529, %528 : vector<2x128xf32>
    %531 = arith.divf %529, %530 : vector<2x128xf32>
    %532 = math.tanh %511 : vector<2x128xf32>
    %533 = vector.extract_strided_slice %531 {offsets = [0, 0], sizes = [2, 32], strides = [1, 1]} : vector<2x128xf32> to vector<2x32xf32>
    %534 = vector.extract_strided_slice %531 {offsets = [0, 32], sizes = [2, 32], strides = [1, 1]} : vector<2x128xf32> to vector<2x32xf32>
    %535 = vector.extract_strided_slice %532 {offsets = [0, 64], sizes = [2, 32], strides = [1, 1]} : vector<2x128xf32> to vector<2x32xf32>
    %536 = vector.extract_strided_slice %531 {offsets = [0, 96], sizes = [2, 32], strides = [1, 1]} : vector<2x128xf32> to vector<2x32xf32>
    %537 = arith.mulf %534, %495 : vector<2x32xf32>
    %538 = arith.mulf %533, %535 : vector<2x32xf32>
    %539 = arith.addf %537, %538 : vector<2x32xf32>
    %540 = math.tanh %539 : vector<2x32xf32>
    %541 = arith.mulf %536, %540 : vector<2x32xf32>
    %542 = vector.extract_strided_slice %526 {offsets = [0, 0], sizes = [1, 32], strides = [1, 1]} : vector<2x32xf32> to vector<1x32xf32>
    %c2_210 = arith.constant 2 : index
    %c0_211 = arith.constant 0 : index
    %543 = vector.load %arg26[%c2_210, %c0_211] : memref<16x64xf32, #tpu.memory_space<vmem>>, vector<1x32xf32>
    tpu.vector_store %arg26[%c2_210, %c0_211], %542 {strides = array<i32>} : memref<16x64xf32, #tpu.memory_space<vmem>>, vector<1x32xf32>,
    %544 = vector.extract_strided_slice %541 {offsets = [0, 0], sizes = [1, 32], strides = [1, 1]} : vector<2x32xf32> to vector<1x32xf32>
    %c5_212 = arith.constant 5 : index
    %c32_213 = arith.constant 32 : index
    %545 = vector.load %arg26[%c5_212, %c32_213] : memref<16x64xf32, #tpu.memory_space<vmem>>, vector<1x32xf32>
    tpu.vector_store %arg26[%c5_212, %c32_213], %544 {strides = array<i32>} : memref<16x64xf32, #tpu.memory_space<vmem>>, vector<1x32xf32>,
    %546 = vector.extract_strided_slice %526 {offsets = [1, 0], sizes = [1, 32], strides = [1, 1]} : vector<2x32xf32> to vector<1x32xf32>
    %c10_214 = arith.constant 10 : index
    %c0_215 = arith.constant 0 : index
    %547 = vector.load %arg26[%c10_214, %c0_215] : memref<16x64xf32, #tpu.memory_space<vmem>>, vector<1x32xf32>
    tpu.vector_store %arg26[%c10_214, %c0_215], %546 {strides = array<i32>} : memref<16x64xf32, #tpu.memory_space<vmem>>, vector<1x32xf32>,
    %548 = vector.extract_strided_slice %541 {offsets = [1, 0], sizes = [1, 32], strides = [1, 1]} : vector<2x32xf32> to vector<1x32xf32>
    %c13_216 = arith.constant 13 : index
    %c32_217 = arith.constant 32 : index
    %549 = vector.load %arg26[%c13_216, %c32_217] : memref<16x64xf32, #tpu.memory_space<vmem>>, vector<1x32xf32>
    tpu.vector_store %arg26[%c13_216, %c32_217], %548 {strides = array<i32>} : memref<16x64xf32, #tpu.memory_space<vmem>>, vector<1x32xf32>,
    %550 = vector.extract_strided_slice %406 {offsets = [6, 0], sizes = [2, 128], strides = [1, 1]} : vector<16x128xf32> to vector<2x128xf32>
    %cst_218 = arith.constant dense<0.000000e+00> : vector<2x128xf32>
    %551 = tpu.matmul %526, %412, %cst_218 {dimension_numbers = #tpu.dot_dimension_numbers<[1], [0], [0], [1], [0, 0, 1, 1], [], []>} : vector<2x32xf32>, vector<32x128xf32>, vector<2x128xf32> -> vector<2x128xf32>
    %552 = arith.addf %550, %551 : vector<2x128xf32>
    %553 = vector.extract_strided_slice %411 {offsets = [8, 0], sizes = [2, 128], strides = [1, 1]} : vector<16x128xf32> to vector<2x128xf32>
    %cst_219 = arith.constant dense<0.000000e+00> : vector<2x128xf32>
    %554 = tpu.matmul %541, %413, %cst_219 {dimension_numbers = #tpu.dot_dimension_numbers<[1], [0], [0], [1], [0, 0, 1, 1], [], []>} : vector<2x32xf32>, vector<32x128xf32>, vector<2x128xf32> -> vector<2x128xf32>
    %555 = arith.addf %553, %554 : vector<2x128xf32>
    %556 = arith.negf %552 : vector<2x128xf32>
    %557 = math.exp %556 : vector<2x128xf32>
    %cst_220 = arith.constant 1.000000e+00 : f32
    %558 = vector.broadcast %cst_220 : f32 to vector<2x128xf32>
    %559 = arith.addf %558, %557 : vector<2x128xf32>
    %560 = arith.divf %558, %559 : vector<2x128xf32>
    %561 = math.tanh %552 : vector<2x128xf32>
    %562 = vector.extract_strided_slice %560 {offsets = [0, 0], sizes = [2, 32], strides = [1, 1]} : vector<2x128xf32> to vector<2x32xf32>
    %563 = vector.extract_strided_slice %560 {offsets = [0, 32], sizes = [2, 32], strides = [1, 1]} : vector<2x128xf32> to vector<2x32xf32>
    %564 = vector.extract_strided_slice %561 {offsets = [0, 64], sizes = [2, 32], strides = [1, 1]} : vector<2x128xf32> to vector<2x32xf32>
    %565 = vector.extract_strided_slice %560 {offsets = [0, 96], sizes = [2, 32], strides = [1, 1]} : vector<2x128xf32> to vector<2x32xf32>
    %566 = arith.mulf %563, %524 : vector<2x32xf32>
    %567 = arith.mulf %562, %564 : vector<2x32xf32>
    %568 = arith.addf %566, %567 : vector<2x32xf32>
    %569 = math.tanh %568 : vector<2x32xf32>
    %570 = arith.mulf %565, %569 : vector<2x32xf32>
    %571 = arith.negf %555 : vector<2x128xf32>
    %572 = math.exp %571 : vector<2x128xf32>
    %cst_221 = arith.constant 1.000000e+00 : f32
    %573 = vector.broadcast %cst_221 : f32 to vector<2x128xf32>
    %574 = arith.addf %573, %572 : vector<2x128xf32>
    %575 = arith.divf %573, %574 : vector<2x128xf32>
    %576 = math.tanh %555 : vector<2x128xf32>
    %577 = vector.extract_strided_slice %575 {offsets = [0, 0], sizes = [2, 32], strides = [1, 1]} : vector<2x128xf32> to vector<2x32xf32>
    %578 = vector.extract_strided_slice %575 {offsets = [0, 32], sizes = [2, 32], strides = [1, 1]} : vector<2x128xf32> to vector<2x32xf32>
    %579 = vector.extract_strided_slice %576 {offsets = [0, 64], sizes = [2, 32], strides = [1, 1]} : vector<2x128xf32> to vector<2x32xf32>
    %580 = vector.extract_strided_slice %575 {offsets = [0, 96], sizes = [2, 32], strides = [1, 1]} : vector<2x128xf32> to vector<2x32xf32>
    %581 = arith.mulf %578, %539 : vector<2x32xf32>
    %582 = arith.mulf %577, %579 : vector<2x32xf32>
    %583 = arith.addf %581, %582 : vector<2x32xf32>
    %584 = math.tanh %583 : vector<2x32xf32>
    %585 = arith.mulf %580, %584 : vector<2x32xf32>
    %586 = vector.extract_strided_slice %570 {offsets = [0, 0], sizes = [1, 32], strides = [1, 1]} : vector<2x32xf32> to vector<1x32xf32>
    %c3_222 = arith.constant 3 : index
    %c0_223 = arith.constant 0 : index
    %587 = vector.load %arg26[%c3_222, %c0_223] : memref<16x64xf32, #tpu.memory_space<vmem>>, vector<1x32xf32>
    tpu.vector_store %arg26[%c3_222, %c0_223], %586 {strides = array<i32>} : memref<16x64xf32, #tpu.memory_space<vmem>>, vector<1x32xf32>,
    %588 = vector.extract_strided_slice %585 {offsets = [0, 0], sizes = [1, 32], strides = [1, 1]} : vector<2x32xf32> to vector<1x32xf32>
    %c4_224 = arith.constant 4 : index
    %c32_225 = arith.constant 32 : index
    %589 = vector.load %arg26[%c4_224, %c32_225] : memref<16x64xf32, #tpu.memory_space<vmem>>, vector<1x32xf32>
    tpu.vector_store %arg26[%c4_224, %c32_225], %588 {strides = array<i32>} : memref<16x64xf32, #tpu.memory_space<vmem>>, vector<1x32xf32>,
    %590 = vector.extract_strided_slice %570 {offsets = [1, 0], sizes = [1, 32], strides = [1, 1]} : vector<2x32xf32> to vector<1x32xf32>
    %c11_226 = arith.constant 11 : index
    %c0_227 = arith.constant 0 : index
    %591 = vector.load %arg26[%c11_226, %c0_227] : memref<16x64xf32, #tpu.memory_space<vmem>>, vector<1x32xf32>
    tpu.vector_store %arg26[%c11_226, %c0_227], %590 {strides = array<i32>} : memref<16x64xf32, #tpu.memory_space<vmem>>, vector<1x32xf32>,
    %592 = vector.extract_strided_slice %585 {offsets = [1, 0], sizes = [1, 32], strides = [1, 1]} : vector<2x32xf32> to vector<1x32xf32>
    %c12_228 = arith.constant 12 : index
    %c32_229 = arith.constant 32 : index
    %593 = vector.load %arg26[%c12_228, %c32_229] : memref<16x64xf32, #tpu.memory_space<vmem>>, vector<1x32xf32>
    tpu.vector_store %arg26[%c12_228, %c32_229], %592 {strides = array<i32>} : memref<16x64xf32, #tpu.memory_space<vmem>>, vector<1x32xf32>,
    %594 = vector.extract_strided_slice %406 {offsets = [8, 0], sizes = [2, 128], strides = [1, 1]} : vector<16x128xf32> to vector<2x128xf32>
    %cst_230 = arith.constant dense<0.000000e+00> : vector<2x128xf32>
    %595 = tpu.matmul %570, %412, %cst_230 {dimension_numbers = #tpu.dot_dimension_numbers<[1], [0], [0], [1], [0, 0, 1, 1], [], []>} : vector<2x32xf32>, vector<32x128xf32>, vector<2x128xf32> -> vector<2x128xf32>
    %596 = arith.addf %594, %595 : vector<2x128xf32>
    %597 = vector.extract_strided_slice %411 {offsets = [6, 0], sizes = [2, 128], strides = [1, 1]} : vector<16x128xf32> to vector<2x128xf32>
    %cst_231 = arith.constant dense<0.000000e+00> : vector<2x128xf32>
    %598 = tpu.matmul %585, %413, %cst_231 {dimension_numbers = #tpu.dot_dimension_numbers<[1], [0], [0], [1], [0, 0, 1, 1], [], []>} : vector<2x32xf32>, vector<32x128xf32>, vector<2x128xf32> -> vector<2x128xf32>
    %599 = arith.addf %597, %598 : vector<2x128xf32>
    %600 = arith.negf %596 : vector<2x128xf32>
    %601 = math.exp %600 : vector<2x128xf32>
    %cst_232 = arith.constant 1.000000e+00 : f32
    %602 = vector.broadcast %cst_232 : f32 to vector<2x128xf32>
    %603 = arith.addf %602, %601 : vector<2x128xf32>
    %604 = arith.divf %602, %603 : vector<2x128xf32>
    %605 = math.tanh %596 : vector<2x128xf32>
    %606 = vector.extract_strided_slice %604 {offsets = [0, 0], sizes = [2, 32], strides = [1, 1]} : vector<2x128xf32> to vector<2x32xf32>
    %607 = vector.extract_strided_slice %604 {offsets = [0, 32], sizes = [2, 32], strides = [1, 1]} : vector<2x128xf32> to vector<2x32xf32>
    %608 = vector.extract_strided_slice %605 {offsets = [0, 64], sizes = [2, 32], strides = [1, 1]} : vector<2x128xf32> to vector<2x32xf32>
    %609 = vector.extract_strided_slice %604 {offsets = [0, 96], sizes = [2, 32], strides = [1, 1]} : vector<2x128xf32> to vector<2x32xf32>
    %610 = arith.mulf %607, %568 : vector<2x32xf32>
    %611 = arith.mulf %606, %608 : vector<2x32xf32>
    %612 = arith.addf %610, %611 : vector<2x32xf32>
    %613 = math.tanh %612 : vector<2x32xf32>
    %614 = arith.mulf %609, %613 : vector<2x32xf32>
    %615 = arith.negf %599 : vector<2x128xf32>
    %616 = math.exp %615 : vector<2x128xf32>
    %cst_233 = arith.constant 1.000000e+00 : f32
    %617 = vector.broadcast %cst_233 : f32 to vector<2x128xf32>
    %618 = arith.addf %617, %616 : vector<2x128xf32>
    %619 = arith.divf %617, %618 : vector<2x128xf32>
    %620 = math.tanh %599 : vector<2x128xf32>
    %621 = vector.extract_strided_slice %619 {offsets = [0, 0], sizes = [2, 32], strides = [1, 1]} : vector<2x128xf32> to vector<2x32xf32>
    %622 = vector.extract_strided_slice %619 {offsets = [0, 32], sizes = [2, 32], strides = [1, 1]} : vector<2x128xf32> to vector<2x32xf32>
    %623 = vector.extract_strided_slice %620 {offsets = [0, 64], sizes = [2, 32], strides = [1, 1]} : vector<2x128xf32> to vector<2x32xf32>
    %624 = vector.extract_strided_slice %619 {offsets = [0, 96], sizes = [2, 32], strides = [1, 1]} : vector<2x128xf32> to vector<2x32xf32>
    %625 = arith.mulf %622, %583 : vector<2x32xf32>
    %626 = arith.mulf %621, %623 : vector<2x32xf32>
    %627 = arith.addf %625, %626 : vector<2x32xf32>
    %628 = math.tanh %627 : vector<2x32xf32>
    %629 = arith.mulf %624, %628 : vector<2x32xf32>
    %630 = vector.extract_strided_slice %614 {offsets = [0, 0], sizes = [1, 32], strides = [1, 1]} : vector<2x32xf32> to vector<1x32xf32>
    %c4_234 = arith.constant 4 : index
    %c0_235 = arith.constant 0 : index
    %631 = vector.load %arg26[%c4_234, %c0_235] : memref<16x64xf32, #tpu.memory_space<vmem>>, vector<1x32xf32>
    tpu.vector_store %arg26[%c4_234, %c0_235], %630 {strides = array<i32>} : memref<16x64xf32, #tpu.memory_space<vmem>>, vector<1x32xf32>,
    %632 = vector.extract_strided_slice %629 {offsets = [0, 0], sizes = [1, 32], strides = [1, 1]} : vector<2x32xf32> to vector<1x32xf32>
    %c3_236 = arith.constant 3 : index
    %c32_237 = arith.constant 32 : index
    %633 = vector.load %arg26[%c3_236, %c32_237] : memref<16x64xf32, #tpu.memory_space<vmem>>, vector<1x32xf32>
    tpu.vector_store %arg26[%c3_236, %c32_237], %632 {strides = array<i32>} : memref<16x64xf32, #tpu.memory_space<vmem>>, vector<1x32xf32>,
    %634 = vector.extract_strided_slice %614 {offsets = [1, 0], sizes = [1, 32], strides = [1, 1]} : vector<2x32xf32> to vector<1x32xf32>
    %c12_238 = arith.constant 12 : index
    %c0_239 = arith.constant 0 : index
    %635 = vector.load %arg26[%c12_238, %c0_239] : memref<16x64xf32, #tpu.memory_space<vmem>>, vector<1x32xf32>
    tpu.vector_store %arg26[%c12_238, %c0_239], %634 {strides = array<i32>} : memref<16x64xf32, #tpu.memory_space<vmem>>, vector<1x32xf32>,
    %636 = vector.extract_strided_slice %629 {offsets = [1, 0], sizes = [1, 32], strides = [1, 1]} : vector<2x32xf32> to vector<1x32xf32>
    %c11_240 = arith.constant 11 : index
    %c32_241 = arith.constant 32 : index
    %637 = vector.load %arg26[%c11_240, %c32_241] : memref<16x64xf32, #tpu.memory_space<vmem>>, vector<1x32xf32>
    tpu.vector_store %arg26[%c11_240, %c32_241], %636 {strides = array<i32>} : memref<16x64xf32, #tpu.memory_space<vmem>>, vector<1x32xf32>,
    %638 = vector.extract_strided_slice %406 {offsets = [10, 0], sizes = [2, 128], strides = [1, 1]} : vector<16x128xf32> to vector<2x128xf32>
    %cst_242 = arith.constant dense<0.000000e+00> : vector<2x128xf32>
    %639 = tpu.matmul %614, %412, %cst_242 {dimension_numbers = #tpu.dot_dimension_numbers<[1], [0], [0], [1], [0, 0, 1, 1], [], []>} : vector<2x32xf32>, vector<32x128xf32>, vector<2x128xf32> -> vector<2x128xf32>
    %640 = arith.addf %638, %639 : vector<2x128xf32>
    %641 = vector.extract_strided_slice %411 {offsets = [4, 0], sizes = [2, 128], strides = [1, 1]} : vector<16x128xf32> to vector<2x128xf32>
    %cst_243 = arith.constant dense<0.000000e+00> : vector<2x128xf32>
    %642 = tpu.matmul %629, %413, %cst_243 {dimension_numbers = #tpu.dot_dimension_numbers<[1], [0], [0], [1], [0, 0, 1, 1], [], []>} : vector<2x32xf32>, vector<32x128xf32>, vector<2x128xf32> -> vector<2x128xf32>
    %643 = arith.addf %641, %642 : vector<2x128xf32>
    %644 = arith.negf %640 : vector<2x128xf32>
    %645 = math.exp %644 : vector<2x128xf32>
    %cst_244 = arith.constant 1.000000e+00 : f32
    %646 = vector.broadcast %cst_244 : f32 to vector<2x128xf32>
    %647 = arith.addf %646, %645 : vector<2x128xf32>
    %648 = arith.divf %646, %647 : vector<2x128xf32>
    %649 = math.tanh %640 : vector<2x128xf32>
    %650 = vector.extract_strided_slice %648 {offsets = [0, 0], sizes = [2, 32], strides = [1, 1]} : vector<2x128xf32> to vector<2x32xf32>
    %651 = vector.extract_strided_slice %648 {offsets = [0, 32], sizes = [2, 32], strides = [1, 1]} : vector<2x128xf32> to vector<2x32xf32>
    %652 = vector.extract_strided_slice %649 {offsets = [0, 64], sizes = [2, 32], strides = [1, 1]} : vector<2x128xf32> to vector<2x32xf32>
    %653 = vector.extract_strided_slice %648 {offsets = [0, 96], sizes = [2, 32], strides = [1, 1]} : vector<2x128xf32> to vector<2x32xf32>
    %654 = arith.mulf %651, %612 : vector<2x32xf32>
    %655 = arith.mulf %650, %652 : vector<2x32xf32>
    %656 = arith.addf %654, %655 : vector<2x32xf32>
    %657 = math.tanh %656 : vector<2x32xf32>
    %658 = arith.mulf %653, %657 : vector<2x32xf32>
    %659 = arith.negf %643 : vector<2x128xf32>
    %660 = math.exp %659 : vector<2x128xf32>
    %cst_245 = arith.constant 1.000000e+00 : f32
    %661 = vector.broadcast %cst_245 : f32 to vector<2x128xf32>
    %662 = arith.addf %661, %660 : vector<2x128xf32>
    %663 = arith.divf %661, %662 : vector<2x128xf32>
    %664 = math.tanh %643 : vector<2x128xf32>
    %665 = vector.extract_strided_slice %663 {offsets = [0, 0], sizes = [2, 32], strides = [1, 1]} : vector<2x128xf32> to vector<2x32xf32>
    %666 = vector.extract_strided_slice %663 {offsets = [0, 32], sizes = [2, 32], strides = [1, 1]} : vector<2x128xf32> to vector<2x32xf32>
    %667 = vector.extract_strided_slice %664 {offsets = [0, 64], sizes = [2, 32], strides = [1, 1]} : vector<2x128xf32> to vector<2x32xf32>
    %668 = vector.extract_strided_slice %663 {offsets = [0, 96], sizes = [2, 32], strides = [1, 1]} : vector<2x128xf32> to vector<2x32xf32>
    %669 = arith.mulf %666, %627 : vector<2x32xf32>
    %670 = arith.mulf %665, %667 : vector<2x32xf32>
    %671 = arith.addf %669, %670 : vector<2x32xf32>
    %672 = math.tanh %671 : vector<2x32xf32>
    %673 = arith.mulf %668, %672 : vector<2x32xf32>
    %674 = vector.extract_strided_slice %658 {offsets = [0, 0], sizes = [1, 32], strides = [1, 1]} : vector<2x32xf32> to vector<1x32xf32>
    %c5_246 = arith.constant 5 : index
    %c0_247 = arith.constant 0 : index
    %675 = vector.load %arg26[%c5_246, %c0_247] : memref<16x64xf32, #tpu.memory_space<vmem>>, vector<1x32xf32>
    tpu.vector_store %arg26[%c5_246, %c0_247], %674 {strides = array<i32>} : memref<16x64xf32, #tpu.memory_space<vmem>>, vector<1x32xf32>,
    %676 = vector.extract_strided_slice %673 {offsets = [0, 0], sizes = [1, 32], strides = [1, 1]} : vector<2x32xf32> to vector<1x32xf32>
    %c2_248 = arith.constant 2 : index
    %c32_249 = arith.constant 32 : index
    %677 = vector.load %arg26[%c2_248, %c32_249] : memref<16x64xf32, #tpu.memory_space<vmem>>, vector<1x32xf32>
    tpu.vector_store %arg26[%c2_248, %c32_249], %676 {strides = array<i32>} : memref<16x64xf32, #tpu.memory_space<vmem>>, vector<1x32xf32>,
    %678 = vector.extract_strided_slice %658 {offsets = [1, 0], sizes = [1, 32], strides = [1, 1]} : vector<2x32xf32> to vector<1x32xf32>
    %c13_250 = arith.constant 13 : index
    %c0_251 = arith.constant 0 : index
    %679 = vector.load %arg26[%c13_250, %c0_251] : memref<16x64xf32, #tpu.memory_space<vmem>>, vector<1x32xf32>
    tpu.vector_store %arg26[%c13_250, %c0_251], %678 {strides = array<i32>} : memref<16x64xf32, #tpu.memory_space<vmem>>, vector<1x32xf32>,
    %680 = vector.extract_strided_slice %673 {offsets = [1, 0], sizes = [1, 32], strides = [1, 1]} : vector<2x32xf32> to vector<1x32xf32>
    %c10_252 = arith.constant 10 : index
    %c32_253 = arith.constant 32 : index
    %681 = vector.load %arg26[%c10_252, %c32_253] : memref<16x64xf32, #tpu.memory_space<vmem>>, vector<1x32xf32>
    tpu.vector_store %arg26[%c10_252, %c32_253], %680 {strides = array<i32>} : memref<16x64xf32, #tpu.memory_space<vmem>>, vector<1x32xf32>,
    %682 = vector.extract_strided_slice %406 {offsets = [12, 0], sizes = [2, 128], strides = [1, 1]} : vector<16x128xf32> to vector<2x128xf32>
    %cst_254 = arith.constant dense<0.000000e+00> : vector<2x128xf32>
    %683 = tpu.matmul %658, %412, %cst_254 {dimension_numbers = #tpu.dot_dimension_numbers<[1], [0], [0], [1], [0, 0, 1, 1], [], []>} : vector<2x32xf32>, vector<32x128xf32>, vector<2x128xf32> -> vector<2x128xf32>
    %684 = arith.addf %682, %683 : vector<2x128xf32>
    %685 = vector.extract_strided_slice %411 {offsets = [2, 0], sizes = [2, 128], strides = [1, 1]} : vector<16x128xf32> to vector<2x128xf32>
    %cst_255 = arith.constant dense<0.000000e+00> : vector<2x128xf32>
    %686 = tpu.matmul %673, %413, %cst_255 {dimension_numbers = #tpu.dot_dimension_numbers<[1], [0], [0], [1], [0, 0, 1, 1], [], []>} : vector<2x32xf32>, vector<32x128xf32>, vector<2x128xf32> -> vector<2x128xf32>
    %687 = arith.addf %685, %686 : vector<2x128xf32>
    %688 = arith.negf %684 : vector<2x128xf32>
    %689 = math.exp %688 : vector<2x128xf32>
    %cst_256 = arith.constant 1.000000e+00 : f32
    %690 = vector.broadcast %cst_256 : f32 to vector<2x128xf32>
    %691 = arith.addf %690, %689 : vector<2x128xf32>
    %692 = arith.divf %690, %691 : vector<2x128xf32>
    %693 = math.tanh %684 : vector<2x128xf32>
    %694 = vector.extract_strided_slice %692 {offsets = [0, 0], sizes = [2, 32], strides = [1, 1]} : vector<2x128xf32> to vector<2x32xf32>
    %695 = vector.extract_strided_slice %692 {offsets = [0, 32], sizes = [2, 32], strides = [1, 1]} : vector<2x128xf32> to vector<2x32xf32>
    %696 = vector.extract_strided_slice %693 {offsets = [0, 64], sizes = [2, 32], strides = [1, 1]} : vector<2x128xf32> to vector<2x32xf32>
    %697 = vector.extract_strided_slice %692 {offsets = [0, 96], sizes = [2, 32], strides = [1, 1]} : vector<2x128xf32> to vector<2x32xf32>
    %698 = arith.mulf %695, %656 : vector<2x32xf32>
    %699 = arith.mulf %694, %696 : vector<2x32xf32>
    %700 = arith.addf %698, %699 : vector<2x32xf32>
    %701 = math.tanh %700 : vector<2x32xf32>
    %702 = arith.mulf %697, %701 : vector<2x32xf32>
    %703 = arith.negf %687 : vector<2x128xf32>
    %704 = math.exp %703 : vector<2x128xf32>
    %cst_257 = arith.constant 1.000000e+00 : f32
    %705 = vector.broadcast %cst_257 : f32 to vector<2x128xf32>
    %706 = arith.addf %705, %704 : vector<2x128xf32>
    %707 = arith.divf %705, %706 : vector<2x128xf32>
    %708 = math.tanh %687 : vector<2x128xf32>
    %709 = vector.extract_strided_slice %707 {offsets = [0, 0], sizes = [2, 32], strides = [1, 1]} : vector<2x128xf32> to vector<2x32xf32>
    %710 = vector.extract_strided_slice %707 {offsets = [0, 32], sizes = [2, 32], strides = [1, 1]} : vector<2x128xf32> to vector<2x32xf32>
    %711 = vector.extract_strided_slice %708 {offsets = [0, 64], sizes = [2, 32], strides = [1, 1]} : vector<2x128xf32> to vector<2x32xf32>
    %712 = vector.extract_strided_slice %707 {offsets = [0, 96], sizes = [2, 32], strides = [1, 1]} : vector<2x128xf32> to vector<2x32xf32>
    %713 = arith.mulf %710, %671 : vector<2x32xf32>
    %714 = arith.mulf %709, %711 : vector<2x32xf32>
    %715 = arith.addf %713, %714 : vector<2x32xf32>
    %716 = math.tanh %715 : vector<2x32xf32>
    %717 = arith.mulf %712, %716 : vector<2x32xf32>
    %718 = vector.extract_strided_slice %702 {offsets = [0, 0], sizes = [1, 32], strides = [1, 1]} : vector<2x32xf32> to vector<1x32xf32>
    %c6_258 = arith.constant 6 : index
    %c0_259 = arith.constant 0 : index
    %719 = vector.load %arg26[%c6_258, %c0_259] : memref<16x64xf32, #tpu.memory_space<vmem>>, vector<1x32xf32>
    tpu.vector_store %arg26[%c6_258, %c0_259], %718 {strides = array<i32>} : memref<16x64xf32, #tpu.memory_space<vmem>>, vector<1x32xf32>,
    %720 = vector.extract_strided_slice %717 {offsets = [0, 0], sizes = [1, 32], strides = [1, 1]} : vector<2x32xf32> to vector<1x32xf32>
    %c1_260 = arith.constant 1 : index
    %c32_261 = arith.constant 32 : index
    %721 = vector.load %arg26[%c1_260, %c32_261] : memref<16x64xf32, #tpu.memory_space<vmem>>, vector<1x32xf32>
    tpu.vector_store %arg26[%c1_260, %c32_261], %720 {strides = array<i32>} : memref<16x64xf32, #tpu.memory_space<vmem>>, vector<1x32xf32>,
    %722 = vector.extract_strided_slice %702 {offsets = [1, 0], sizes = [1, 32], strides = [1, 1]} : vector<2x32xf32> to vector<1x32xf32>
    %c14_262 = arith.constant 14 : index
    %c0_263 = arith.constant 0 : index
    %723 = vector.load %arg26[%c14_262, %c0_263] : memref<16x64xf32, #tpu.memory_space<vmem>>, vector<1x32xf32>
    tpu.vector_store %arg26[%c14_262, %c0_263], %722 {strides = array<i32>} : memref<16x64xf32, #tpu.memory_space<vmem>>, vector<1x32xf32>,
    %724 = vector.extract_strided_slice %717 {offsets = [1, 0], sizes = [1, 32], strides = [1, 1]} : vector<2x32xf32> to vector<1x32xf32>
    %c9_264 = arith.constant 9 : index
    %c32_265 = arith.constant 32 : index
    %725 = vector.load %arg26[%c9_264, %c32_265] : memref<16x64xf32, #tpu.memory_space<vmem>>, vector<1x32xf32>
    tpu.vector_store %arg26[%c9_264, %c32_265], %724 {strides = array<i32>} : memref<16x64xf32, #tpu.memory_space<vmem>>, vector<1x32xf32>,
    %726 = vector.extract_strided_slice %406 {offsets = [14, 0], sizes = [2, 128], strides = [1, 1]} : vector<16x128xf32> to vector<2x128xf32>
    %cst_266 = arith.constant dense<0.000000e+00> : vector<2x128xf32>
    %727 = tpu.matmul %702, %412, %cst_266 {dimension_numbers = #tpu.dot_dimension_numbers<[1], [0], [0], [1], [0, 0, 1, 1], [], []>} : vector<2x32xf32>, vector<32x128xf32>, vector<2x128xf32> -> vector<2x128xf32>
    %728 = arith.addf %726, %727 : vector<2x128xf32>
    %729 = vector.extract_strided_slice %411 {offsets = [0, 0], sizes = [2, 128], strides = [1, 1]} : vector<16x128xf32> to vector<2x128xf32>
    %cst_267 = arith.constant dense<0.000000e+00> : vector<2x128xf32>
    %730 = tpu.matmul %717, %413, %cst_267 {dimension_numbers = #tpu.dot_dimension_numbers<[1], [0], [0], [1], [0, 0, 1, 1], [], []>} : vector<2x32xf32>, vector<32x128xf32>, vector<2x128xf32> -> vector<2x128xf32>
    %731 = arith.addf %729, %730 : vector<2x128xf32>
    %732 = arith.negf %728 : vector<2x128xf32>
    %733 = math.exp %732 : vector<2x128xf32>
    %cst_268 = arith.constant 1.000000e+00 : f32
    %734 = vector.broadcast %cst_268 : f32 to vector<2x128xf32>
    %735 = arith.addf %734, %733 : vector<2x128xf32>
    %736 = arith.divf %734, %735 : vector<2x128xf32>
    %737 = math.tanh %728 : vector<2x128xf32>
    %738 = vector.extract_strided_slice %736 {offsets = [0, 0], sizes = [2, 32], strides = [1, 1]} : vector<2x128xf32> to vector<2x32xf32>
    %739 = vector.extract_strided_slice %736 {offsets = [0, 32], sizes = [2, 32], strides = [1, 1]} : vector<2x128xf32> to vector<2x32xf32>
    %740 = vector.extract_strided_slice %737 {offsets = [0, 64], sizes = [2, 32], strides = [1, 1]} : vector<2x128xf32> to vector<2x32xf32>
    %741 = vector.extract_strided_slice %736 {offsets = [0, 96], sizes = [2, 32], strides = [1, 1]} : vector<2x128xf32> to vector<2x32xf32>
    %742 = arith.mulf %739, %700 : vector<2x32xf32>
    %743 = arith.mulf %738, %740 : vector<2x32xf32>
    %744 = arith.addf %742, %743 : vector<2x32xf32>
    %745 = math.tanh %744 : vector<2x32xf32>
    %746 = arith.mulf %741, %745 : vector<2x32xf32>
    %747 = arith.negf %731 : vector<2x128xf32>
    %748 = math.exp %747 : vector<2x128xf32>
    %cst_269 = arith.constant 1.000000e+00 : f32
    %749 = vector.broadcast %cst_269 : f32 to vector<2x128xf32>
    %750 = arith.addf %749, %748 : vector<2x128xf32>
    %751 = arith.divf %749, %750 : vector<2x128xf32>
    %752 = math.tanh %731 : vector<2x128xf32>
    %753 = vector.extract_strided_slice %751 {offsets = [0, 0], sizes = [2, 32], strides = [1, 1]} : vector<2x128xf32> to vector<2x32xf32>
    %754 = vector.extract_strided_slice %751 {offsets = [0, 32], sizes = [2, 32], strides = [1, 1]} : vector<2x128xf32> to vector<2x32xf32>
    %755 = vector.extract_strided_slice %752 {offsets = [0, 64], sizes = [2, 32], strides = [1, 1]} : vector<2x128xf32> to vector<2x32xf32>
    %756 = vector.extract_strided_slice %751 {offsets = [0, 96], sizes = [2, 32], strides = [1, 1]} : vector<2x128xf32> to vector<2x32xf32>
    %757 = arith.mulf %754, %715 : vector<2x32xf32>
    %758 = arith.mulf %753, %755 : vector<2x32xf32>
    %759 = arith.addf %757, %758 : vector<2x32xf32>
    %760 = math.tanh %759 : vector<2x32xf32>
    %761 = arith.mulf %756, %760 : vector<2x32xf32>
    %762 = vector.extract_strided_slice %746 {offsets = [0, 0], sizes = [1, 32], strides = [1, 1]} : vector<2x32xf32> to vector<1x32xf32>
    %c7_270 = arith.constant 7 : index
    %c0_271 = arith.constant 0 : index
    %763 = vector.load %arg26[%c7_270, %c0_271] : memref<16x64xf32, #tpu.memory_space<vmem>>, vector<1x32xf32>
    tpu.vector_store %arg26[%c7_270, %c0_271], %762 {strides = array<i32>} : memref<16x64xf32, #tpu.memory_space<vmem>>, vector<1x32xf32>,
    %764 = vector.extract_strided_slice %761 {offsets = [0, 0], sizes = [1, 32], strides = [1, 1]} : vector<2x32xf32> to vector<1x32xf32>
    %c0_272 = arith.constant 0 : index
    %c32_273 = arith.constant 32 : index
    %765 = vector.load %arg26[%c0_272, %c32_273] : memref<16x64xf32, #tpu.memory_space<vmem>>, vector<1x32xf32>
    tpu.vector_store %arg26[%c0_272, %c32_273], %764 {strides = array<i32>} : memref<16x64xf32, #tpu.memory_space<vmem>>, vector<1x32xf32>,
    %766 = vector.extract_strided_slice %746 {offsets = [1, 0], sizes = [1, 32], strides = [1, 1]} : vector<2x32xf32> to vector<1x32xf32>
    %c15_274 = arith.constant 15 : index
    %c0_275 = arith.constant 0 : index
    %767 = vector.load %arg26[%c15_274, %c0_275] : memref<16x64xf32, #tpu.memory_space<vmem>>, vector<1x32xf32>
    tpu.vector_store %arg26[%c15_274, %c0_275], %766 {strides = array<i32>} : memref<16x64xf32, #tpu.memory_space<vmem>>, vector<1x32xf32>,
    %768 = vector.extract_strided_slice %761 {offsets = [1, 0], sizes = [1, 32], strides = [1, 1]} : vector<2x32xf32> to vector<1x32xf32>
    %c8_276 = arith.constant 8 : index
    %c32_277 = arith.constant 32 : index
    %769 = vector.load %arg26[%c8_276, %c32_277] : memref<16x64xf32, #tpu.memory_space<vmem>>, vector<1x32xf32>
    tpu.vector_store %arg26[%c8_276, %c32_277], %768 {strides = array<i32>} : memref<16x64xf32, #tpu.memory_space<vmem>>, vector<1x32xf32>,
    %c0_278 = arith.constant 0 : index
    %c0_279 = arith.constant 0 : index
    %770 = vector.load %arg26[%c0_278, %c0_279] : memref<16x64xf32, #tpu.memory_space<vmem>>, vector<16x64xf32>
    %c0_280 = arith.constant 0 : index
    %c0_281 = arith.constant 0 : index
    %771 = vector.load %arg16[%c0_280, %c0_281] : memref<64x16xf32, #tpu.memory_space<vmem>>, vector<64x16xf32>
    %cst_282 = arith.constant dense<0.000000e+00> : vector<16x16xf32>
    %772 = tpu.matmul %770, %771, %cst_282 {dimension_numbers = #tpu.dot_dimension_numbers<[1], [0], [0], [1], [0, 0, 1, 1], [], []>} : vector<16x64xf32>, vector<64x16xf32>, vector<16x16xf32> -> vector<16x16xf32>
    %773 = math.tanh %772 : vector<16x16xf32>
    %c0_283 = arith.constant 0 : index
    %c0_284 = arith.constant 0 : index
    %774 = vector.load %arg17[%c0_283, %c0_284] : memref<16x4xf32, #tpu.memory_space<vmem>>, vector<16x4xf32>
    %cst_285 = arith.constant dense<0.000000e+00> : vector<16x4xf32>
    %775 = tpu.matmul %773, %774, %cst_285 {dimension_numbers = #tpu.dot_dimension_numbers<[1], [0], [0], [1], [0, 0, 1, 1], [], []>} : vector<16x16xf32>, vector<16x4xf32>, vector<16x4xf32> -> vector<16x4xf32>
    %c0_286 = arith.constant 0 : index
    %c0_287 = arith.constant 0 : index
    %776 = vector.load %arg2[%c0_286, %c0_287] : memref<8x2xi32, #tpu.memory_space<vmem>>, vector<8x2xi32>
    %c0_i32 = arith.constant 0 : i32
    %777 = vector.broadcast %c0_i32 : i32 to vector<8x2xi32>
    %778 = arith.cmpi eq, %776, %777 : vector<8x2xi32>
    %779 = arith.extui %778 : vector<8x2xi1> to vector<8x2xi32>
    %780 = arith.sitofp %779 : vector<8x2xi32> to vector<8x2xf32>
    %781 = tpu.iota {dimensions = array<i32: 0>} : vector<8x8xi32>
    %782 = tpu.iota {dimensions = array<i32: 1>} : vector<8x8xi32>
    %783 = arith.cmpi eq, %781, %782 : vector<8x8xi32>
    %784 = arith.extui %783 : vector<8x8xi1> to vector<8x8xi32>
    %785 = arith.sitofp %784 : vector<8x8xi32> to vector<8x8xf32>
    %786 = vector.extract_strided_slice %770 {offsets = [0, 0], sizes = [8, 64], strides = [1, 1]} : vector<16x64xf32> to vector<8x64xf32>
    %787 = vector.extract_strided_slice %775 {offsets = [0, 0], sizes = [8, 4], strides = [1, 1]} : vector<16x4xf32> to vector<8x4xf32>
    %788 = vector.extract_strided_slice %780 {offsets = [0, 0], sizes = [8, 1], strides = [1, 1]} : vector<8x2xf32> to vector<8x1xf32>
    %cst_288 = arith.constant 1.000000e+04 : f32
    %789 = vector.broadcast %cst_288 : f32 to vector<8x1xf32>
    %790 = arith.mulf %789, %788 : vector<8x1xf32>
    %791 = vector.broadcast %790 : vector<8x1xf32> to vector<8x4xf32>
    %792 = arith.subf %787, %791 : vector<8x4xf32>
    %cst_289 = arith.constant dense<0xFF800000> : vector<4xf32>
    %793 = vector.multi_reduction <maximumf>, %792, %cst_289 [0] : vector<8x4xf32> to vector<4xf32>
    %794 = vector.shape_cast %793 : vector<4xf32> to vector<1x4xf32>
    %795 = vector.broadcast %794 : vector<1x4xf32> to vector<8x4xf32>
    %796 = arith.subf %792, %795 : vector<8x4xf32>
    %797 = math.exp %796 : vector<8x4xf32>
    %cst_290 = arith.constant dense<0.000000e+00> : vector<4xf32>
    %798 = vector.multi_reduction <add>, %797, %cst_290 [0] : vector<8x4xf32> to vector<4xf32>
    %799 = vector.shape_cast %798 : vector<4xf32> to vector<1x4xf32>
    %800 = vector.broadcast %799 : vector<1x4xf32> to vector<8x4xf32>
    %801 = arith.divf %797, %800 : vector<8x4xf32>
    %cst_291 = arith.constant dense<0.000000e+00> : vector<4x8xf32>
    %802 = tpu.matmul %801, %785, %cst_291 {dimension_numbers = #tpu.dot_dimension_numbers<[0], [0], [1], [1], [0, 1, 1, 1], [], []>} : vector<8x4xf32>, vector<8x8xf32>, vector<4x8xf32> -> vector<4x8xf32>
    %c0_292 = arith.constant 0 : index
    %c0_293 = arith.constant 0 : index
    %c0_294 = arith.constant 0 : index
    %803 = vector.load %arg23[%c0_292, %c0_293, %c0_294] : memref<2x4x8xf32, #tpu.memory_space<vmem>>, vector<1x4x8xf32>
    %804 = vector.shape_cast %803 : vector<1x4x8xf32> to vector<4x8xf32>
    %805 = vector.shape_cast %802 : vector<4x8xf32> to vector<1x4x8xf32>
    tpu.vector_store %arg23[%c0_292, %c0_293, %c0_294], %805 {strides = array<i32>} : memref<2x4x8xf32, #tpu.memory_space<vmem>>, vector<1x4x8xf32>,
    %cst_295 = arith.constant dense<0.000000e+00> : vector<4x64xf32>
    %806 = tpu.matmul %801, %786, %cst_295 {dimension_numbers = #tpu.dot_dimension_numbers<[0], [0], [1], [1], [0, 1, 1, 1], [], []>} : vector<8x4xf32>, vector<8x64xf32>, vector<4x64xf32> -> vector<4x64xf32>
    %807 = vector.extract_strided_slice %806 {offsets = [0, 0], sizes = [1, 64], strides = [1, 1]} : vector<4x64xf32> to vector<1x64xf32>
    %808 = vector.extract_strided_slice %806 {offsets = [1, 0], sizes = [1, 64], strides = [1, 1]} : vector<4x64xf32> to vector<1x64xf32>
    %809 = vector.extract_strided_slice %806 {offsets = [2, 0], sizes = [1, 64], strides = [1, 1]} : vector<4x64xf32> to vector<1x64xf32>
    %810 = vector.extract_strided_slice %806 {offsets = [3, 0], sizes = [1, 64], strides = [1, 1]} : vector<4x64xf32> to vector<1x64xf32>
    %811 = tpu.concatenate %807, %808, %809, %810 in 1 : vector<1x64xf32>, vector<1x64xf32>, vector<1x64xf32>, vector<1x64xf32> -> vector<1x256xf32>
    %812 = vector.extract_strided_slice %770 {offsets = [8, 0], sizes = [8, 64], strides = [1, 1]} : vector<16x64xf32> to vector<8x64xf32>
    %813 = vector.extract_strided_slice %775 {offsets = [8, 0], sizes = [8, 4], strides = [1, 1]} : vector<16x4xf32> to vector<8x4xf32>
    %814 = vector.extract_strided_slice %780 {offsets = [0, 1], sizes = [8, 1], strides = [1, 1]} : vector<8x2xf32> to vector<8x1xf32>
    %cst_296 = arith.constant 1.000000e+04 : f32
    %815 = vector.broadcast %cst_296 : f32 to vector<8x1xf32>
    %816 = arith.mulf %815, %814 : vector<8x1xf32>
    %817 = vector.broadcast %816 : vector<8x1xf32> to vector<8x4xf32>
    %818 = arith.subf %813, %817 : vector<8x4xf32>
    %cst_297 = arith.constant dense<0xFF800000> : vector<4xf32>
    %819 = vector.multi_reduction <maximumf>, %818, %cst_297 [0] : vector<8x4xf32> to vector<4xf32>
    %820 = vector.shape_cast %819 : vector<4xf32> to vector<1x4xf32>
    %821 = vector.broadcast %820 : vector<1x4xf32> to vector<8x4xf32>
    %822 = arith.subf %818, %821 : vector<8x4xf32>
    %823 = math.exp %822 : vector<8x4xf32>
    %cst_298 = arith.constant dense<0.000000e+00> : vector<4xf32>
    %824 = vector.multi_reduction <add>, %823, %cst_298 [0] : vector<8x4xf32> to vector<4xf32>
    %825 = vector.shape_cast %824 : vector<4xf32> to vector<1x4xf32>
    %826 = vector.broadcast %825 : vector<1x4xf32> to vector<8x4xf32>
    %827 = arith.divf %823, %826 : vector<8x4xf32>
    %cst_299 = arith.constant dense<0.000000e+00> : vector<4x8xf32>
    %828 = tpu.matmul %827, %785, %cst_299 {dimension_numbers = #tpu.dot_dimension_numbers<[0], [0], [1], [1], [0, 1, 1, 1], [], []>} : vector<8x4xf32>, vector<8x8xf32>, vector<4x8xf32> -> vector<4x8xf32>
    %c1_300 = arith.constant 1 : index
    %c0_301 = arith.constant 0 : index
    %c0_302 = arith.constant 0 : index
    %829 = vector.load %arg23[%c1_300, %c0_301, %c0_302] : memref<2x4x8xf32, #tpu.memory_space<vmem>>, vector<1x4x8xf32>
    %830 = vector.shape_cast %829 : vector<1x4x8xf32> to vector<4x8xf32>
    %831 = vector.shape_cast %828 : vector<4x8xf32> to vector<1x4x8xf32>
    tpu.vector_store %arg23[%c1_300, %c0_301, %c0_302], %831 {strides = array<i32>} : memref<2x4x8xf32, #tpu.memory_space<vmem>>, vector<1x4x8xf32>,
    %cst_303 = arith.constant dense<0.000000e+00> : vector<4x64xf32>
    %832 = tpu.matmul %827, %812, %cst_303 {dimension_numbers = #tpu.dot_dimension_numbers<[0], [0], [1], [1], [0, 1, 1, 1], [], []>} : vector<8x4xf32>, vector<8x64xf32>, vector<4x64xf32> -> vector<4x64xf32>
    %833 = vector.extract_strided_slice %832 {offsets = [0, 0], sizes = [1, 64], strides = [1, 1]} : vector<4x64xf32> to vector<1x64xf32>
    %834 = vector.extract_strided_slice %832 {offsets = [1, 0], sizes = [1, 64], strides = [1, 1]} : vector<4x64xf32> to vector<1x64xf32>
    %835 = vector.extract_strided_slice %832 {offsets = [2, 0], sizes = [1, 64], strides = [1, 1]} : vector<4x64xf32> to vector<1x64xf32>
    %836 = vector.extract_strided_slice %832 {offsets = [3, 0], sizes = [1, 64], strides = [1, 1]} : vector<4x64xf32> to vector<1x64xf32>
    %837 = tpu.concatenate %833, %834, %835, %836 in 1 : vector<1x64xf32>, vector<1x64xf32>, vector<1x64xf32>, vector<1x64xf32> -> vector<1x256xf32>
    %838 = tpu.concatenate %811, %837 in 0 : vector<1x256xf32>, vector<1x256xf32> -> vector<2x256xf32>
    %c0_304 = arith.constant 0 : index
    %c0_305 = arith.constant 0 : index
    %839 = vector.load %arg18[%c0_304, %c0_305] : memref<256x16xf32, #tpu.memory_space<vmem>>, vector<256x16xf32>
    %cst_306 = arith.constant dense<0.000000e+00> : vector<2x16xf32>
    %840 = tpu.matmul %838, %839, %cst_306 {dimension_numbers = #tpu.dot_dimension_numbers<[1], [0], [0], [1], [0, 0, 1, 1], [], []>} : vector<2x256xf32>, vector<256x16xf32>, vector<2x16xf32> -> vector<2x16xf32>
    %c0_307 = arith.constant 0 : index
    %c0_308 = arith.constant 0 : index
    %841 = vector.load %arg19[%c0_307, %c0_308] : memref<1x16xf32, #tpu.memory_space<vmem>>, vector<1x16xf32>
    %842 = vector.broadcast %841 : vector<1x16xf32> to vector<2x16xf32>
    %843 = arith.addf %840, %842 : vector<2x16xf32>
    %844 = math.tanh %843 : vector<2x16xf32>
    %c0_309 = arith.constant 0 : index
    %c0_310 = arith.constant 0 : index
    %845 = vector.load %arg20[%c0_309, %c0_310] : memref<16x3xf32, #tpu.memory_space<vmem>>, vector<16x3xf32>
    %cst_311 = arith.constant dense<0.000000e+00> : vector<2x3xf32>
    %846 = tpu.matmul %844, %845, %cst_311 {dimension_numbers = #tpu.dot_dimension_numbers<[1], [0], [0], [1], [0, 0, 1, 1], [], []>} : vector<2x16xf32>, vector<16x3xf32>, vector<2x3xf32> -> vector<2x3xf32>
    %c0_312 = arith.constant 0 : index
    %c0_313 = arith.constant 0 : index
    %847 = vector.load %arg21[%c0_312, %c0_313] : memref<1x3xf32, #tpu.memory_space<vmem>>, vector<1x3xf32>
    %848 = vector.broadcast %847 : vector<1x3xf32> to vector<2x3xf32>
    %849 = arith.addf %846, %848 : vector<2x3xf32>
    %c0_314 = arith.constant 0 : index
    %c0_315 = arith.constant 0 : index
    %850 = vector.load %arg22[%c0_314, %c0_315] : memref<2x3xf32, #tpu.memory_space<vmem>>, vector<2x3xf32>
    tpu.vector_store %arg22[%c0_314, %c0_315], %849 {strides = array<i32>} : memref<2x3xf32, #tpu.memory_space<vmem>>, vector<2x3xf32>,
    return
  }
  func.func @transform_0(%arg0: i32, %arg1: memref<8x2xi32, #tpu.memory_space<smem>>) -> (i32, i32) {
    %c0_i32 = arith.constant 0 : i32
    %c0_i32_0 = arith.constant 0 : i32
    %c0_i32_1 = arith.constant 0 : i32
    return %c0_i32, %c0_i32_0 : i32, i32
  }
  func.func @transform_1(%arg0: i32, %arg1: memref<8x2xi32, #tpu.memory_space<smem>>) -> (i32, i32, i32) {
    %c0_i32 = arith.constant 0 : i32
    %c0_i32_0 = arith.constant 0 : i32
    %c0_i32_1 = arith.constant 0 : i32
    %c0_i32_2 = arith.constant 0 : i32
    return %c0_i32, %c0_i32_0, %c0_i32_1 : i32, i32, i32
  }
  func.func @transform_2(%arg0: i32, %arg1: memref<8x2xi32, #tpu.memory_space<smem>>) -> (i32, i32) {
    %c0_i32 = arith.constant 0 : i32
    %c0_i32_0 = arith.constant 0 : i32
    %c0_i32_1 = arith.constant 0 : i32
    return %c0_i32, %c0_i32_0 : i32, i32
  }
  func.func @transform_3(%arg0: i32, %arg1: memref<8x2xi32, #tpu.memory_space<smem>>) -> (i32, i32) {
    %c0_i32 = arith.constant 0 : i32
    %c0_i32_0 = arith.constant 0 : i32
    %c0_i32_1 = arith.constant 0 : i32
    return %c0_i32, %c0_i32_0 : i32, i32
  }
  func.func @transform_4(%arg0: i32, %arg1: memref<8x2xi32, #tpu.memory_space<smem>>) -> (i32, i32) {
    %c0_i32 = arith.constant 0 : i32
    %c0_i32_0 = arith.constant 0 : i32
    %c0_i32_1 = arith.constant 0 : i32
    return %c0_i32, %c0_i32_0 : i32, i32
  }
  func.func @transform_5(%arg0: i32, %arg1: memref<8x2xi32, #tpu.memory_space<smem>>) -> (i32, i32) {
    %c0_i32 = arith.constant 0 : i32
    %c0_i32_0 = arith.constant 0 : i32
    %c0_i32_1 = arith.constant 0 : i32
    return %c0_i32, %c0_i32_0 : i32, i32
  }
  func.func @transform_6(%arg0: i32, %arg1: memref<8x2xi32, #tpu.memory_space<smem>>) -> (i32, i32) {
    %c0_i32 = arith.constant 0 : i32
    %c0_i32_0 = arith.constant 0 : i32
    %c0_i32_1 = arith.constant 0 : i32
    return %c0_i32, %c0_i32_0 : i32, i32
  }
  func.func @transform_7(%arg0: i32, %arg1: memref<8x2xi32, #tpu.memory_space<smem>>) -> (i32, i32) {
    %c0_i32 = arith.constant 0 : i32
    %c0_i32_0 = arith.constant 0 : i32
    %c0_i32_1 = arith.constant 0 : i32
    return %c0_i32, %c0_i32_0 : i32, i32
  }
  func.func @transform_8(%arg0: i32, %arg1: memref<8x2xi32, #tpu.memory_space<smem>>) -> (i32, i32) {
    %c0_i32 = arith.constant 0 : i32
    %c0_i32_0 = arith.constant 0 : i32
    %c0_i32_1 = arith.constant 0 : i32
    return %c0_i32, %c0_i32_0 : i32, i32
  }
  func.func @transform_9(%arg0: i32, %arg1: memref<8x2xi32, #tpu.memory_space<smem>>) -> (i32, i32) {
    %c0_i32 = arith.constant 0 : i32
    %c0_i32_0 = arith.constant 0 : i32
    %c0_i32_1 = arith.constant 0 : i32
    return %c0_i32, %c0_i32_0 : i32, i32
  }
  func.func @transform_10(%arg0: i32, %arg1: memref<8x2xi32, #tpu.memory_space<smem>>) -> (i32, i32) {
    %c0_i32 = arith.constant 0 : i32
    %c0_i32_0 = arith.constant 0 : i32
    %c0_i32_1 = arith.constant 0 : i32
    return %c0_i32, %c0_i32_0 : i32, i32
  }
  func.func @transform_11(%arg0: i32, %arg1: memref<8x2xi32, #tpu.memory_space<smem>>) -> (i32, i32) {
    %c0_i32 = arith.constant 0 : i32
    %c0_i32_0 = arith.constant 0 : i32
    %c0_i32_1 = arith.constant 0 : i32
    return %c0_i32, %c0_i32_0 : i32, i32
  }
  func.func @transform_12(%arg0: i32, %arg1: memref<8x2xi32, #tpu.memory_space<smem>>) -> (i32, i32) {
    %c0_i32 = arith.constant 0 : i32
    %c0_i32_0 = arith.constant 0 : i32
    %c0_i32_1 = arith.constant 0 : i32
    return %c0_i32, %c0_i32_0 : i32, i32
  }
  func.func @transform_13(%arg0: i32, %arg1: memref<8x2xi32, #tpu.memory_space<smem>>) -> (i32, i32) {
    %c0_i32 = arith.constant 0 : i32
    %c0_i32_0 = arith.constant 0 : i32
    %c0_i32_1 = arith.constant 0 : i32
    return %c0_i32, %c0_i32_0 : i32, i32
  }
  func.func @transform_14(%arg0: i32, %arg1: memref<8x2xi32, #tpu.memory_space<smem>>) -> (i32, i32) {
    %c0_i32 = arith.constant 0 : i32
    %c0_i32_0 = arith.constant 0 : i32
    %c0_i32_1 = arith.constant 0 : i32
    return %c0_i32, %c0_i32_0 : i32, i32
  }
  func.func @transform_15(%arg0: i32, %arg1: memref<8x2xi32, #tpu.memory_space<smem>>) -> (i32, i32) {
    %c0_i32 = arith.constant 0 : i32
    %c0_i32_0 = arith.constant 0 : i32
    %c0_i32_1 = arith.constant 0 : i32
    return %c0_i32, %c0_i32_0 : i32, i32
  }
  func.func @transform_16(%arg0: i32, %arg1: memref<8x2xi32, #tpu.memory_space<smem>>) -> (i32, i32) {
    %c0_i32 = arith.constant 0 : i32
    %c0_i32_0 = arith.constant 0 : i32
    %c0_i32_1 = arith.constant 0 : i32
    return %c0_i32, %c0_i32_0 : i32, i32
  }
  func.func @transform_17(%arg0: i32, %arg1: memref<8x2xi32, #tpu.memory_space<smem>>) -> (i32, i32) {
    %c0_i32 = arith.constant 0 : i32
    %c0_i32_0 = arith.constant 0 : i32
    %c0_i32_1 = arith.constant 0 : i32
    return %c0_i32, %c0_i32_0 : i32, i32
  }
  func.func @transform_18(%arg0: i32, %arg1: memref<8x2xi32, #tpu.memory_space<smem>>) -> (i32, i32) {
    %c0_i32 = arith.constant 0 : i32
    %c0_i32_0 = arith.constant 0 : i32
    %c0_i32_1 = arith.constant 0 : i32
    return %c0_i32, %c0_i32_0 : i32, i32
  }
  func.func @transform_19(%arg0: i32, %arg1: memref<8x2xi32, #tpu.memory_space<smem>>) -> (i32, i32) {
    %c0_i32 = arith.constant 0 : i32
    %c0_i32_0 = arith.constant 0 : i32
    %c0_i32_1 = arith.constant 0 : i32
    return %c0_i32, %c0_i32_0 : i32, i32
  }
  func.func @transform_20(%arg0: i32, %arg1: memref<8x2xi32, #tpu.memory_space<smem>>) -> (i32, i32) {
    %c0_i32 = arith.constant 0 : i32
    %c0_i32_0 = arith.constant 0 : i32
    %c0_i32_1 = arith.constant 0 : i32
    return %c0_i32, %c0_i32_0 : i32, i32
  }
  func.func @transform_21(%arg0: i32, %arg1: memref<8x2xi32, #tpu.memory_space<smem>>) -> (i32, i32, i32) {
    %c0_i32 = arith.constant 0 : i32
    %c0_i32_0 = arith.constant 0 : i32
    %c0_i32_1 = arith.constant 0 : i32
    %c0_i32_2 = arith.constant 0 : i32
    return %c0_i32, %c0_i32_0, %c0_i32_1 : i32, i32, i32
  }
}

</mosaic_0001>

<llo_original>
// kernel: tpu_custom_call.1
$region0: #{tpu_custom_call.1}
  #allocation0 [shape = 'u32[]', space=smem, size = 0x4, offset = 0x4, fixed_abs, tag = 'smem constant byte address 0x4 - core index']
  #allocation1 [shape = 'u32[72,128]{1,0:T(1,128)}', space=vmem, size = 0x9000, scoped, tag = 'internal scratch']
  #allocation2 [shape = 'f32[16,32]{1,0:T(8,128)}', space=vmem, size = 0x2000, scoped, tag = 'scratch operand']
  #allocation3 [shape = 'f32[16,64]{1,0:T(8,128)}', space=vmem, size = 0x2000, scoped, tag = 'scratch operand']
  #allocation4 [shape = 'f32[16,64]{1,0:T(8,128)}', space=vmem, size = 0x2000, scoped, tag = 'scratch operand']
  #allocation5 [shape = 's32[1]{0}', space=sflag, size = 0x4, scoped, tag = 'scoped memory for tpu_custom_call.1']
  #allocation6 [shape = 'u8[4096]{0}', space=smem, size = 0x1000, scoped, tag = 'prefetched SMEM operand 0']
  %s0 = inlined_call_operand.vmem [shape: s32[8,2], index: 0, kind: input, shape index: {}]
  %s1 = inlined_call_operand.vmem [shape: s32[8,2], index: 1, kind: input, shape index: {}]
  %s2 = inlined_call_operand.vmem [shape: f32[50,1,32], index: 2, kind: input, shape index: {}]
  %s3 = inlined_call_operand.vmem [shape: f32[32,128], index: 3, kind: input, shape index: {}]
  %s4 = inlined_call_operand.vmem [shape: f32[32,128], index: 4, kind: input, shape index: {}]
  %s5 = inlined_call_operand.vmem [shape: f32[1,128], index: 5, kind: input, shape index: {}]
  %s6 = inlined_call_operand.vmem [shape: f32[32,128], index: 6, kind: input, shape index: {}]
  %s7 = inlined_call_operand.vmem [shape: f32[32,128], index: 7, kind: input, shape index: {}]
  %s8 = inlined_call_operand.vmem [shape: f32[1,128], index: 8, kind: input, shape index: {}]
  %s9 = inlined_call_operand.vmem [shape: f32[64,128], index: 9, kind: input, shape index: {}]
  %s10 = inlined_call_operand.vmem [shape: f32[32,128], index: 10, kind: input, shape index: {}]
  %s11 = inlined_call_operand.vmem [shape: f32[1,128], index: 11, kind: input, shape index: {}]
  %s12 = inlined_call_operand.vmem [shape: f32[64,128], index: 12, kind: input, shape index: {}]
  %s13 = inlined_call_operand.vmem [shape: f32[32,128], index: 13, kind: input, shape index: {}]
  %s14 = inlined_call_operand.vmem [shape: f32[1,128], index: 14, kind: input, shape index: {}]
  %s15 = inlined_call_operand.vmem [shape: f32[64,16], index: 15, kind: input, shape index: {}]
  %s16 = inlined_call_operand.vmem [shape: f32[16,4], index: 16, kind: input, shape index: {}]
  %s17 = inlined_call_operand.vmem [shape: f32[256,16], index: 17, kind: input, shape index: {}]
  %s18 = inlined_call_operand.vmem [shape: f32[1,16], index: 18, kind: input, shape index: {}]
  %s19 = inlined_call_operand.vmem [shape: f32[16,3], index: 19, kind: input, shape index: {}]
  %s20 = inlined_call_operand.vmem [shape: f32[1,3], index: 20, kind: input, shape index: {}]
  %s21 = inlined_call_operand.hbm [shape: f32[2,3], index: 21, kind: output, shape index: {0}]
  %s22 = inlined_call_operand.hbm [shape: f32[2,4,8], index: 22, kind: output, shape index: {1}]
  %23 = xla_tuple %s21, %s22
  %s24 = sld [smem:[#allocation0]]
  $region98: #{tpu_custom_call.1} parent=0
    _
  %s26 = ssub.s32 1, %s24
  %s27 = scalar_select 0, %s26, %s24
  %s29 = sshll.u32 %s0, 4
  %s30 = int_to_ptr.vmem [resolvable:$true] %s29
  %32 = dma.vmem_to_smem %s30, 128, [#allocation6], [#allocation5]
  %34 = dma.done [#allocation5], 128
  %35 = sfence
  $region1: #{tpu_custom_call.1} parent=0
    #allocation7 [shape = 'u8[1024]{0}', space=vmem, size = 0x400, scoped, tag = 'output window, operand 0, single buffered']
    #allocation8 [shape = 's32[1]{0}', space=sflag, size = 0x4, scoped, tag = 'scoped memory for tpu_custom_call.1']
    #allocation9 [shape = 'u8[4096]{0}', space=vmem, size = 0x1000, scoped, tag = 'output window, operand 1, single buffered']
    #allocation10 [shape = 's32[1]{0}', space=sflag, size = 0x4, scoped, tag = 'scoped memory for tpu_custom_call.1']
    %36 = vsyncpa [#allocation8], 0
    %37 = vsyncpa [#allocation10], 0
    // Predicated region
    $region2: #{tpu_custom_call.1} parent=1 // pred_check
      _
    $region3: #{tpu_custom_call.1} parent=1 // pred_check_branch
      %39 = sbr.rel (0) target = $region5
    $region4: #{tpu_custom_call.1} parent=1 // pred_region
      _
    $region5: #{tpu_custom_call.1} parent=1 // pred_fallthru
      _
    // Predicated region
    $region6: #{tpu_custom_call.1} parent=1 // pred_check
      _
    $region7: #{tpu_custom_call.1} parent=1 // pred_check_branch
      %41 = sbr.rel (0) target = $region9
    $region8: #{tpu_custom_call.1} parent=1 // pred_region
      _
    $region9: #{tpu_custom_call.1} parent=1 // pred_fallthru
      _
    // Predicated region
    $region10: #{tpu_custom_call.1} parent=1 // pred_check
      _
    $region11: #{tpu_custom_call.1} parent=1 // pred_check_branch
      %43 = sbr.rel (0) target = $region13
    $region12: #{tpu_custom_call.1} parent=1 // pred_region
      _
    $region13: #{tpu_custom_call.1} parent=1 // pred_fallthru
      _
    // Predicated region
    $region14: #{tpu_custom_call.1} parent=1 // pred_check
      _
    $region15: #{tpu_custom_call.1} parent=1 // pred_check_branch
      %45 = sbr.rel (0) target = $region17
    $region16: #{tpu_custom_call.1} parent=1 // pred_region
      _
    $region17: #{tpu_custom_call.1} parent=1 // pred_fallthru
      _
    // Predicated region
    $region18: #{tpu_custom_call.1} parent=1 // pred_check
      _
    $region19: #{tpu_custom_call.1} parent=1 // pred_check_branch
      %47 = sbr.rel (0) target = $region21
    $region20: #{tpu_custom_call.1} parent=1 // pred_region
      _
    $region21: #{tpu_custom_call.1} parent=1 // pred_fallthru
      _
    // Predicated region
    $region22: #{tpu_custom_call.1} parent=1 // pred_check
      _
    $region23: #{tpu_custom_call.1} parent=1 // pred_check_branch
      %49 = sbr.rel (0) target = $region25
    $region24: #{tpu_custom_call.1} parent=1 // pred_region
      _
    $region25: #{tpu_custom_call.1} parent=1 // pred_fallthru
      _
    // Predicated region
    $region26: #{tpu_custom_call.1} parent=1 // pred_check
      _
    $region27: #{tpu_custom_call.1} parent=1 // pred_check_branch
      %51 = sbr.rel (0) target = $region29
    $region28: #{tpu_custom_call.1} parent=1 // pred_region
      _
    $region29: #{tpu_custom_call.1} parent=1 // pred_fallthru
      _
    // Predicated region
    $region30: #{tpu_custom_call.1} parent=1 // pred_check
      _
    $region31: #{tpu_custom_call.1} parent=1 // pred_check_branch
      %53 = sbr.rel (0) target = $region33
    $region32: #{tpu_custom_call.1} parent=1 // pred_region
      _
    $region33: #{tpu_custom_call.1} parent=1 // pred_fallthru
      _
    // Predicated region
    $region34: #{tpu_custom_call.1} parent=1 // pred_check
      _
    $region35: #{tpu_custom_call.1} parent=1 // pred_check_branch
      %55 = sbr.rel (0) target = $region37
    $region36: #{tpu_custom_call.1} parent=1 // pred_region
      _
    $region37: #{tpu_custom_call.1} parent=1 // pred_fallthru
      _
    // Predicated region
    $region38: #{tpu_custom_call.1} parent=1 // pred_check
      _
    $region39: #{tpu_custom_call.1} parent=1 // pred_check_branch
      %57 = sbr.rel (0) target = $region41
    $region40: #{tpu_custom_call.1} parent=1 // pred_region
      _
    $region41: #{tpu_custom_call.1} parent=1 // pred_fallthru
      _
    // Predicated region
    $region42: #{tpu_custom_call.1} parent=1 // pred_check
      _
    $region43: #{tpu_custom_call.1} parent=1 // pred_check_branch
      %59 = sbr.rel (0) target = $region45
    $region44: #{tpu_custom_call.1} parent=1 // pred_region
      _
    $region45: #{tpu_custom_call.1} parent=1 // pred_fallthru
      _
    // Predicated region
    $region46: #{tpu_custom_call.1} parent=1 // pred_check
      _
    $region47: #{tpu_custom_call.1} parent=1 // pred_check_branch
      %61 = sbr.rel (0) target = $region49
    $region48: #{tpu_custom_call.1} parent=1 // pred_region
      _
    $region49: #{tpu_custom_call.1} parent=1 // pred_fallthru
      _
    // Predicated region
    $region50: #{tpu_custom_call.1} parent=1 // pred_check
      _
    $region51: #{tpu_custom_call.1} parent=1 // pred_check_branch
      %63 = sbr.rel (0) target = $region53
    $region52: #{tpu_custom_call.1} parent=1 // pred_region
      _
    $region53: #{tpu_custom_call.1} parent=1 // pred_fallthru
      _
    // Predicated region
    $region54: #{tpu_custom_call.1} parent=1 // pred_check
      _
    $region55: #{tpu_custom_call.1} parent=1 // pred_check_branch
      %65 = sbr.rel (0) target = $region57
    $region56: #{tpu_custom_call.1} parent=1 // pred_region
      _
    $region57: #{tpu_custom_call.1} parent=1 // pred_fallthru
      _
    // Predicated region
    $region58: #{tpu_custom_call.1} parent=1 // pred_check
      _
    $region59: #{tpu_custom_call.1} parent=1 // pred_check_branch
      %67 = sbr.rel (0) target = $region61
    $region60: #{tpu_custom_call.1} parent=1 // pred_region
      _
    $region61: #{tpu_custom_call.1} parent=1 // pred_fallthru
      _
    // Predicated region
    $region62: #{tpu_custom_call.1} parent=1 // pred_check
      _
    $region63: #{tpu_custom_call.1} parent=1 // pred_check_branch
      %69 = sbr.rel (0) target = $region65
    $region64: #{tpu_custom_call.1} parent=1 // pred_region
      _
    $region65: #{tpu_custom_call.1} parent=1 // pred_fallthru
      _
    // Predicated region
    $region66: #{tpu_custom_call.1} parent=1 // pred_check
      _
    $region67: #{tpu_custom_call.1} parent=1 // pred_check_branch
      %71 = sbr.rel (0) target = $region69
    $region68: #{tpu_custom_call.1} parent=1 // pred_region
      _
    $region69: #{tpu_custom_call.1} parent=1 // pred_fallthru
      _
    // Predicated region
    $region70: #{tpu_custom_call.1} parent=1 // pred_check
      _
    $region71: #{tpu_custom_call.1} parent=1 // pred_check_branch
      %73 = sbr.rel (0) target = $region73
    $region72: #{tpu_custom_call.1} parent=1 // pred_region
      _
    $region73: #{tpu_custom_call.1} parent=1 // pred_fallthru
      _
    // Predicated region
    $region74: #{tpu_custom_call.1} parent=1 // pred_check
      _
    $region75: #{tpu_custom_call.1} parent=1 // pred_check_branch
      %75 = sbr.rel (0) target = $region77
    $region76: #{tpu_custom_call.1} parent=1 // pred_region
      _
    $region77: #{tpu_custom_call.1} parent=1 // pred_fallthru
      _
    // Predicated region
    $region78: #{tpu_custom_call.1} parent=1 // pred_check
      _
    $region79: #{tpu_custom_call.1} parent=1 // pred_check_branch
      %77 = sbr.rel (0) target = $region81
    $region80: #{tpu_custom_call.1} parent=1 // pred_region
      _
    $region81: #{tpu_custom_call.1} parent=1 // pred_fallthru
      _
    %s78 = sld [smem:[#allocation6]]
    %s79 = scalar_lea.vmem %s2, %s78
    %v80 = vld [vmem:[%s79] sm:$0x1]
    %vm81 = vcmask 253952
    %82 = vst.msk [vmem:[#allocation2] sm:$0x1] %vm81, %v80
    %s83 = sld [smem:[#allocation6 + $0x1]]
    %s84 = scalar_lea.vmem %s2, %s83
    %v85 = vld [vmem:[%s84] sm:$0x1]
    %86 = vst.msk [vmem:[#allocation2 + $0x1] sm:$0x1] %vm81, %v85
    %s87 = sld [smem:[#allocation6 + $0x80]]
    %s88 = scalar_lea.vmem %s2, %s87
    %v89 = vld [vmem:[%s88] sm:$0x1]
    %90 = vst.msk [vmem:[#allocation2 + $0x2] sm:$0x1] %vm81, %v89
    %s91 = sld [smem:[#allocation6 + $0x81]]
    %s92 = scalar_lea.vmem %s2, %s91
    %v93 = vld [vmem:[%s92] sm:$0x1]
    %94 = vst.msk [vmem:[#allocation2 + $0x3] sm:$0x1] %vm81, %v93
    %s95 = sld [smem:[#allocation6 + $0x100]]
    %s96 = scalar_lea.vmem %s2, %s95
    %v97 = vld [vmem:[%s96] sm:$0x1]
    %98 = vst.msk [vmem:[#allocation2 + $0x4] sm:$0x1] %vm81, %v97
    %s99 = sld [smem:[#allocation6 + $0x101]]
    %s100 = scalar_lea.vmem %s2, %s99
    %v101 = vld [vmem:[%s100] sm:$0x1]
    %102 = vst.msk [vmem:[#allocation2 + $0x5] sm:$0x1] %vm81, %v101
    %s103 = sld [smem:[#allocation6 + $0x180]]
    %s104 = scalar_lea.vmem %s2, %s103
    %v105 = vld [vmem:[%s104] sm:$0x1]
    %106 = vst.msk [vmem:[#allocation2 + $0x6] sm:$0x1] %vm81, %v105
    %s107 = sld [smem:[#allocation6 + $0x181]]
    %s108 = scalar_lea.vmem %s2, %s107
    %v109 = vld [vmem:[%s108] sm:$0x1]
    %110 = vst.msk [vmem:[#allocation2 + $0x7] sm:$0x1] %vm81, %v109
    %s111 = sld [smem:[#allocation6 + $0x200]]
    %s112 = scalar_lea.vmem %s2, %s111
    %v113 = vld [vmem:[%s112] sm:$0x1]
    %114 = vst.msk [vmem:[#allocation2 + $0x8] sm:$0x1] %vm81, %v113
    %s115 = sld [smem:[#allocation6 + $0x201]]
    %s116 = scalar_lea.vmem %s2, %s115
    %v117 = vld [vmem:[%s116] sm:$0x1]
    %118 = vst.msk [vmem:[#allocation2 + $0x9] sm:$0x1] %vm81, %v117
    %s119 = sld [smem:[#allocation6 + $0x280]]
    %s120 = scalar_lea.vmem %s2, %s119
    %v121 = vld [vmem:[%s120] sm:$0x1]
    %122 = vst.msk [vmem:[#allocation2 + $0xa] sm:$0x1] %vm81, %v121
    %s123 = sld [smem:[#allocation6 + $0x281]]
    %s124 = scalar_lea.vmem %s2, %s123
    %v125 = vld [vmem:[%s124] sm:$0x1]
    %126 = vst.msk [vmem:[#allocation2 + $0xb] sm:$0x1] %vm81, %v125
    %s127 = sld [smem:[#allocation6 + $0x300]]
    %s128 = scalar_lea.vmem %s2, %s127
    %v129 = vld [vmem:[%s128] sm:$0x1]
    %130 = vst.msk [vmem:[#allocation2 + $0xc] sm:$0x1] %vm81, %v129
    %s131 = sld [smem:[#allocation6 + $0x301]]
    %s132 = scalar_lea.vmem %s2, %s131
    %v133 = vld [vmem:[%s132] sm:$0x1]
    %134 = vst.msk [vmem:[#allocation2 + $0xd] sm:$0x1] %vm81, %v133
    %s135 = sld [smem:[#allocation6 + $0x380]]
    %s136 = scalar_lea.vmem %s2, %s135
    %v137 = vld [vmem:[%s136] sm:$0x1]
    %138 = vst.msk [vmem:[#allocation2 + $0xe] sm:$0x1] %vm81, %v137
    %s139 = sld [smem:[#allocation6 + $0x381]]
    %s140 = scalar_lea.vmem %s2, %s139
    %v141 = vld [vmem:[%s140] sm:$0x1]
    %142 = vst.msk [vmem:[#allocation2 + $0xf] sm:$0x1] %vm81, %v141
    %v143 = vld [vmem:[#allocation2] sm:$0xff]
    %v144 = vld [vmem:[#allocation2 + $0x8] sm:$0xff]
    %v145 = vld [vmem:[%s3] sm:$0xff]
    %v146 = vld [vmem:[%s3 + $0x8] sm:$0xff]
    %v147 = vld [vmem:[%s3 + $0x10] sm:$0xff]
    %v148 = vld [vmem:[%s3 + $0x18] sm:$0xff]
    %v149 = vld [vmem:[%s5] sm:$0x1]
    %v151 = vperm.slane %v149, 0
    %vm153 = vcmask 261120
    %v155 = vsel %vm153, %v143, 0
    %v158 = vsel %vm153, %v144, 0
    %160 = vmatpush.msra.mxu0 0.0
    %161 = vmatpush.msra.mxu0 0.0
    %162 = vmatpush.msra.mxu0 0.0
    %163 = vmatpush.msra.mxu0 0.0
    %164 = vmatpush.msra.mxu0 0.0
    %165 = vmatpush.msra.mxu0 0.0
    %166 = vmatpush.msra.mxu0 0.0
    %167 = vmatpush.msra.mxu0 0.0
    %168 = vmatpush.msra.mxu0 0.0
    %169 = vmatpush.msra.mxu0 0.0
    %170 = vmatpush.msra.mxu0 0.0
    %171 = vmatpush.msra.mxu0 0.0
    %172 = vmatpush.msra.mxu0 %v148
    %173 = vmatpush.msra.mxu0 %v147
    %174 = vmatpush.msra.mxu0 %v146
    %175 = vmatpush.msra.mxu0 %v145
    %176 = vmatmul.f32.gmra.mxu0 %v155
    %v177 = vpop.f32.mrf.mxu0
    %v178 = vadd.f32 %v151, %v177
    %179 = vmatmul.f32.gmra.mxu0 %v158
    %v180 = vpop.f32.mrf.mxu0
    %v181 = vadd.f32 %v151, %v180
    %182 = vdwg.mxu0
    %v183 = vld [vmem:[%s6] sm:$0xff]
    %v184 = vld [vmem:[%s6 + $0x8] sm:$0xff]
    %v185 = vld [vmem:[%s6 + $0x10] sm:$0xff]
    %v186 = vld [vmem:[%s6 + $0x18] sm:$0xff]
    %v187 = vld [vmem:[%s8] sm:$0x1]
    %v189 = vperm.slane %v187, 0
    %191 = vmatpush.msra.mxu0 0.0
    %192 = vmatpush.msra.mxu0 0.0
    %193 = vmatpush.msra.mxu0 0.0
    %194 = vmatpush.msra.mxu0 0.0
    %195 = vmatpush.msra.mxu0 0.0
    %196 = vmatpush.msra.mxu0 0.0
    %197 = vmatpush.msra.mxu0 0.0
    %198 = vmatpush.msra.mxu0 0.0
    %199 = vmatpush.msra.mxu0 0.0
    %200 = vmatpush.msra.mxu0 0.0
    %201 = vmatpush.msra.mxu0 0.0
    %202 = vmatpush.msra.mxu0 0.0
    %203 = vmatpush.msra.mxu0 %v186
    %204 = vmatpush.msra.mxu0 %v185
    %205 = vmatpush.msra.mxu0 %v184
    %206 = vmatpush.msra.mxu0 %v183
    %207 = vmatmul.f32.gmra.mxu0 %v155
    %v208 = vpop.f32.mrf.mxu0
    %v209 = vadd.f32 %v189, %v208
    %210 = vmatmul.f32.gmra.mxu0 %v158
    %v211 = vpop.f32.mrf.mxu0
    %v212 = vadd.f32 %v189, %v211
    %213 = vdwg.mxu0
    %v214 = vld [vmem:[%s4] sm:$0xff]
    %v215 = vld [vmem:[%s4 + $0x8] sm:$0xff]
    %v216 = vld [vmem:[%s4 + $0x10] sm:$0xff]
    %v217 = vld [vmem:[%s4 + $0x18] sm:$0xff]
    %v218 = vld [vmem:[%s7] sm:$0xff]
    %v219 = vld [vmem:[%s7 + $0x8] sm:$0xff]
    %v220 = vld [vmem:[%s7 + $0x10] sm:$0xff]
    %v221 = vld [vmem:[%s7 + $0x18] sm:$0xff]
    %v223 = vsel %vm153, 0.0, 0
    %225 = vmatpush.msra.mxu0 0.0
    %226 = vmatpush.msra.mxu0 0.0
    %227 = vmatpush.msra.mxu0 0.0
    %228 = vmatpush.msra.mxu0 0.0
    %229 = vmatpush.msra.mxu0 0.0
    %230 = vmatpush.msra.mxu0 0.0
    %231 = vmatpush.msra.mxu0 0.0
    %232 = vmatpush.msra.mxu0 0.0
    %233 = vmatpush.msra.mxu0 0.0
    %234 = vmatpush.msra.mxu0 0.0
    %235 = vmatpush.msra.mxu0 0.0
    %236 = vmatpush.msra.mxu0 0.0
    %237 = vmatpush.msra.mxu0 %v217
    %238 = vmatpush.msra.mxu0 %v216
    %239 = vmatpush.msra.mxu0 %v215
    %240 = vmatpush.msra.mxu0 %v214
    %241 = vmatmul.f32.gmra.mxu0 %v223
    %v242 = vpop.f32.mrf.mxu0
    %v243 = vadd.f32 0.0, %v242
    %244 = vdwg.mxu0
    %v245 = vadd.f32 %v178, %v243
    %246 = vmatpush.msra.mxu0 0.0
    %247 = vmatpush.msra.mxu0 0.0
    %248 = vmatpush.msra.mxu0 0.0
    %249 = vmatpush.msra.mxu0 0.0
    %250 = vmatpush.msra.mxu0 0.0
    %251 = vmatpush.msra.mxu0 0.0
    %252 = vmatpush.msra.mxu0 0.0
    %253 = vmatpush.msra.mxu0 0.0
    %254 = vmatpush.msra.mxu0 0.0
    %255 = vmatpush.msra.mxu0 0.0
    %256 = vmatpush.msra.mxu0 0.0
    %257 = vmatpush.msra.mxu0 0.0
    %258 = vmatpush.msra.mxu0 %v221
    %259 = vmatpush.msra.mxu0 %v220
    %260 = vmatpush.msra.mxu0 %v219
    %261 = vmatpush.msra.mxu0 %v218
    %262 = vmatmul.f32.gmra.mxu0 %v223
    %v263 = vpop.f32.mrf.mxu0
    %v264 = vadd.f32 0.0, %v263
    %265 = vdwg.mxu0
    %v267 = vrot.slane %v264, 2
    %v269 = vadd.f32 %v212, %v267
    %v270 = vxor.u32 %v245, 2147483648
    %v271 = vmul.f32 %v270, 1.442695
    %v272 = vpow.pop %v271
    %v273 = vadd.f32 %v272, 1.0
    %v274 = vrcp.pop %v273
    %v275 = vmul.f32 %v273, %v274
    %v276 = vsub.f32 1.0, %v275
    %v277 = vmul.f32 %v274, %v276
    %v278 = vadd.f32 %v274, %v277
    %vm279 = vweird.f32 %v273
    %vm280 = vweird.f32 %v274
    %vm281 = vmor %vm279, %vm280
    %v282 = vsel %vm281, %v274, %v278
    %v283 = vand.u32 2147483647, %v273
    %vm284 = vcmp.eq.f32.partialorder %v283, 8.507059e+37
    %v285 = vand.u32 %v273, 2147483648
    %v286 = vor.u32 1.1754944e-38, %v285
    %v287 = vsel %vm284, %v286, %v282
    %v288 = vmul.f32 1.0, %v287
    %v289 = vtanh.pop %v245
    %v290 = vmul.f32 %v288, 0.0
    %292 = vrot.lane.b32.xlu0 %v289, 64
    %v293 = vpop.permute.xlu0 %292
    %v295 = vmul.f32 %v288, %v293
    %297 = vrot.lane.b32.xlu0 %v295, 32
    %v298 = vpop.permute.xlu0 %297
    %v300 = vadd.f32 %v290, %v298
    %v301 = vtanh.pop %v300
    %303 = vrot.lane.b32.xlu0 %v301, 64
    %v304 = vpop.permute.xlu0 %303
    %v306 = vmul.f32 %v288, %v304
    %v307 = vxor.u32 %v269, 2147483648
    %v308 = vmul.f32 %v307, 1.442695
    %v309 = vpow.pop %v308
    %v310 = vadd.f32 %v309, 1.0
    %v311 = vrcp.pop %v310
    %v312 = vmul.f32 %v310, %v311
    %v313 = vsub.f32 1.0, %v312
    %v314 = vmul.f32 %v311, %v313
    %v315 = vadd.f32 %v311, %v314
    %vm316 = vweird.f32 %v310
    %vm317 = vweird.f32 %v311
    %vm318 = vmor %vm316, %vm317
    %v319 = vsel %vm318, %v311, %v315
    %v320 = vand.u32 2147483647, %v310
    %vm321 = vcmp.eq.f32.partialorder %v320, 8.507059e+37
    %v322 = vand.u32 %v310, 2147483648
    %v323 = vor.u32 1.1754944e-38, %v322
    %v324 = vsel %vm321, %v323, %v319
    %v325 = vmul.f32 1.0, %v324
    %v326 = vtanh.pop %v269
    %v327 = vmul.f32 %v325, 0.0
    %329 = vrot.lane.b32.xlu0 %v326, 64
    %v330 = vpop.permute.xlu0 %329
    %v332 = vmul.f32 %v325, %v330
    %334 = vrot.lane.b32.xlu0 %v332, 32
    %v335 = vpop.permute.xlu0 %334
    %v337 = vadd.f32 %v327, %v335
    %v338 = vtanh.pop %v337
    %340 = vrot.lane.b32.xlu0 %v338, 64
    %v341 = vpop.permute.xlu0 %340
    %v343 = vmul.f32 %v325, %v341
    %345 = vrot.lane.b32.xlu0 %v306, 32
    %v346 = vpop.permute.xlu0 %345
    %vm348 = vcmask 254976
    %349 = vst.msk [vmem:[#allocation3] sm:$0x3] %vm348, %v346
    %351 = vrot.lane.b32.xlu0 %v343, 64
    %v352 = vpop.permute.xlu0 %351
    %vm354 = vcmask 523526
    %355 = vst.msk [vmem:[#allocation3 + $0x8] sm:$0xc0] %vm354, %v352
    %v356 = vsel %vm153, %v346, 0
    %358 = vmatpush.msra.mxu0 0.0
    %359 = vmatpush.msra.mxu0 0.0
    %360 = vmatpush.msra.mxu0 0.0
    %361 = vmatpush.msra.mxu0 0.0
    %362 = vmatpush.msra.mxu0 0.0
    %363 = vmatpush.msra.mxu0 0.0
    %364 = vmatpush.msra.mxu0 0.0
    %365 = vmatpush.msra.mxu0 0.0
    %366 = vmatpush.msra.mxu0 0.0
    %367 = vmatpush.msra.mxu0 0.0
    %368 = vmatpush.msra.mxu0 0.0
    %369 = vmatpush.msra.mxu0 0.0
    %370 = vmatpush.msra.mxu0 %v217
    %371 = vmatpush.msra.mxu0 %v216
    %372 = vmatpush.msra.mxu0 %v215
    %373 = vmatpush.msra.mxu0 %v214
    %374 = vmatmul.f32.gmra.mxu0 %v356
    %v375 = vpop.f32.mrf.mxu0
    %v376 = vadd.f32 0.0, %v375
    %377 = vdwg.mxu0
    %v379 = vrot.slane %v376, 6
    %v381 = vadd.f32 %v178, %v379
    %v382 = vrot.slane %v343, 6
    %383 = vrot.lane.b32.xlu0 %v382, 32
    %v384 = vpop.permute.xlu0 %383
    %v385 = vsel %vm153, %v384, 0
    %387 = vmatpush.msra.mxu0 0.0
    %388 = vmatpush.msra.mxu0 0.0
    %389 = vmatpush.msra.mxu0 0.0
    %390 = vmatpush.msra.mxu0 0.0
    %391 = vmatpush.msra.mxu0 0.0
    %392 = vmatpush.msra.mxu0 0.0
    %393 = vmatpush.msra.mxu0 0.0
    %394 = vmatpush.msra.mxu0 0.0
    %395 = vmatpush.msra.mxu0 0.0
    %396 = vmatpush.msra.mxu0 0.0
    %397 = vmatpush.msra.mxu0 0.0
    %398 = vmatpush.msra.mxu0 0.0
    %399 = vmatpush.msra.mxu0 %v221
    %400 = vmatpush.msra.mxu0 %v220
    %401 = vmatpush.msra.mxu0 %v219
    %402 = vmatpush.msra.mxu0 %v218
    %403 = vmatmul.f32.gmra.mxu0 %v385
    %v404 = vpop.f32.mrf.mxu0
    %v405 = vadd.f32 0.0, %v404
    %406 = vdwg.mxu0
    %v408 = vrot.slane %v405, 4
    %v410 = vadd.f32 %v212, %v408
    %v411 = vxor.u32 %v381, 2147483648
    %v412 = vmul.f32 %v411, 1.442695
    %v413 = vpow.pop %v412
    %v414 = vadd.f32 %v413, 1.0
    %v415 = vrcp.pop %v414
    %v416 = vmul.f32 %v414, %v415
    %v417 = vsub.f32 1.0, %v416
    %v418 = vmul.f32 %v415, %v417
    %v419 = vadd.f32 %v415, %v418
    %vm420 = vweird.f32 %v414
    %vm421 = vweird.f32 %v415
    %vm422 = vmor %vm420, %vm421
    %v423 = vsel %vm422, %v415, %v419
    %v424 = vand.u32 2147483647, %v414
    %vm425 = vcmp.eq.f32.partialorder %v424, 8.507059e+37
    %v426 = vand.u32 %v414, 2147483648
    %v427 = vor.u32 1.1754944e-38, %v426
    %v428 = vsel %vm425, %v427, %v423
    %v429 = vmul.f32 1.0, %v428
    %v430 = vtanh.pop %v381
    %v432 = vrot.slane %v300, 6
    %v434 = vmul.f32 %v429, %v432
    %436 = vrot.lane.b32.xlu0 %v430, 64
    %v437 = vpop.permute.xlu0 %436
    %v439 = vmul.f32 %v429, %v437
    %441 = vrot.lane.b32.xlu0 %v439, 32
    %v442 = vpop.permute.xlu0 %441
    %v444 = vadd.f32 %v434, %v442
    %v445 = vtanh.pop %v444
    %447 = vrot.lane.b32.xlu0 %v445, 64
    %v448 = vpop.permute.xlu0 %447
    %v450 = vmul.f32 %v429, %v448
    %v451 = vxor.u32 %v410, 2147483648
    %v452 = vmul.f32 %v451, 1.442695
    %v453 = vpow.pop %v452
    %v454 = vadd.f32 %v453, 1.0
    %v455 = vrcp.pop %v454
    %v456 = vmul.f32 %v454, %v455
    %v457 = vsub.f32 1.0, %v456
    %v458 = vmul.f32 %v455, %v457
    %v459 = vadd.f32 %v455, %v458
    %vm460 = vweird.f32 %v454
    %vm461 = vweird.f32 %v455
    %vm462 = vmor %vm460, %vm461
    %v463 = vsel %vm462, %v455, %v459
    %v464 = vand.u32 2147483647, %v454
    %vm465 = vcmp.eq.f32.partialorder %v464, 8.507059e+37
    %v466 = vand.u32 %v454, 2147483648
    %v467 = vor.u32 1.1754944e-38, %v466
    %v468 = vsel %vm465, %v467, %v463
    %v469 = vmul.f32 1.0, %v468
    %v470 = vtanh.pop %v410
    %v472 = vrot.slane %v337, 2
    %v474 = vmul.f32 %v469, %v472
    %476 = vrot.lane.b32.xlu0 %v470, 64
    %v477 = vpop.permute.xlu0 %476
    %v479 = vmul.f32 %v469, %v477
    %481 = vrot.lane.b32.xlu0 %v479, 32
    %v482 = vpop.permute.xlu0 %481
    %v484 = vadd.f32 %v474, %v482
    %v485 = vtanh.pop %v484
    %487 = vrot.lane.b32.xlu0 %v485, 64
    %v488 = vpop.permute.xlu0 %487
    %v490 = vmul.f32 %v469, %v488
    %492 = vrot.lane.b32.xlu0 %v450, 32
    %v493 = vpop.permute.xlu0 %492
    %vm495 = vcmask 257026
    %496 = vst.msk [vmem:[#allocation3] sm:$0xc] %vm495, %v493
    %498 = vrot.lane.b32.xlu0 %v490, 64
    %v499 = vpop.permute.xlu0 %498
    %vm501 = vcmask 521476
    %502 = vst.msk [vmem:[#allocation3 + $0x8] sm:$0x30] %vm501, %v499
    %v503 = vrot.slane %v450, 2
    %504 = vrot.lane.b32.xlu0 %v503, 32
    %v505 = vpop.permute.xlu0 %504
    %v506 = vsel %vm153, %v505, 0
    %508 = vmatpush.msra.mxu0 0.0
    %509 = vmatpush.msra.mxu0 0.0
    %510 = vmatpush.msra.mxu0 0.0
    %511 = vmatpush.msra.mxu0 0.0
    %512 = vmatpush.msra.mxu0 0.0
    %513 = vmatpush.msra.mxu0 0.0
    %514 = vmatpush.msra.mxu0 0.0
    %515 = vmatpush.msra.mxu0 0.0
    %516 = vmatpush.msra.mxu0 0.0
    %517 = vmatpush.msra.mxu0 0.0
    %518 = vmatpush.msra.mxu0 0.0
    %519 = vmatpush.msra.mxu0 0.0
    %520 = vmatpush.msra.mxu0 %v217
    %521 = vmatpush.msra.mxu0 %v216
    %522 = vmatpush.msra.mxu0 %v215
    %523 = vmatpush.msra.mxu0 %v214
    %524 = vmatmul.f32.gmra.mxu0 %v506
    %v525 = vpop.f32.mrf.mxu0
    %v526 = vadd.f32 0.0, %v525
    %527 = vdwg.mxu0
    %v529 = vrot.slane %v526, 4
    %v531 = vadd.f32 %v178, %v529
    %v532 = vrot.slane %v490, 4
    %533 = vrot.lane.b32.xlu0 %v532, 32
    %v534 = vpop.permute.xlu0 %533
    %v535 = vsel %vm153, %v534, 0
    %537 = vmatpush.msra.mxu0 0.0
    %538 = vmatpush.msra.mxu0 0.0
    %539 = vmatpush.msra.mxu0 0.0
    %540 = vmatpush.msra.mxu0 0.0
    %541 = vmatpush.msra.mxu0 0.0
    %542 = vmatpush.msra.mxu0 0.0
    %543 = vmatpush.msra.mxu0 0.0
    %544 = vmatpush.msra.mxu0 0.0
    %545 = vmatpush.msra.mxu0 0.0
    %546 = vmatpush.msra.mxu0 0.0
    %547 = vmatpush.msra.mxu0 0.0
    %548 = vmatpush.msra.mxu0 0.0
    %549 = vmatpush.msra.mxu0 %v221
    %550 = vmatpush.msra.mxu0 %v220
    %551 = vmatpush.msra.mxu0 %v219
    %552 = vmatpush.msra.mxu0 %v218
    %553 = vmatmul.f32.gmra.mxu0 %v535
    %v554 = vpop.f32.mrf.mxu0
    %v555 = vadd.f32 0.0, %v554
    %556 = vdwg.mxu0
    %v558 = vrot.slane %v555, 6
    %v560 = vadd.f32 %v212, %v558
    %v561 = vxor.u32 %v531, 2147483648
    %v562 = vmul.f32 %v561, 1.442695
    %v563 = vpow.pop %v562
    %v564 = vadd.f32 %v563, 1.0
    %v565 = vrcp.pop %v564
    %v566 = vmul.f32 %v564, %v565
    %v567 = vsub.f32 1.0, %v566
    %v568 = vmul.f32 %v565, %v567
    %v569 = vadd.f32 %v565, %v568
    %vm570 = vweird.f32 %v564
    %vm571 = vweird.f32 %v565
    %vm572 = vmor %vm570, %vm571
    %v573 = vsel %vm572, %v565, %v569
    %v574 = vand.u32 2147483647, %v564
    %vm575 = vcmp.eq.f32.partialorder %v574, 8.507059e+37
    %v576 = vand.u32 %v564, 2147483648
    %v577 = vor.u32 1.1754944e-38, %v576
    %v578 = vsel %vm575, %v577, %v573
    %v579 = vmul.f32 1.0, %v578
    %v580 = vtanh.pop %v531
    %v582 = vrot.slane %v444, 6
    %v584 = vmul.f32 %v579, %v582
    %586 = vrot.lane.b32.xlu0 %v580, 64
    %v587 = vpop.permute.xlu0 %586
    %v589 = vmul.f32 %v579, %v587
    %591 = vrot.lane.b32.xlu0 %v589, 32
    %v592 = vpop.permute.xlu0 %591
    %v594 = vadd.f32 %v584, %v592
    %v595 = vtanh.pop %v594
    %597 = vrot.lane.b32.xlu0 %v595, 64
    %v598 = vpop.permute.xlu0 %597
    %v600 = vmul.f32 %v579, %v598
    %v601 = vxor.u32 %v560, 2147483648
    %v602 = vmul.f32 %v601, 1.442695
    %v603 = vpow.pop %v602
    %v604 = vadd.f32 %v603, 1.0
    %v605 = vrcp.pop %v604
    %v606 = vmul.f32 %v604, %v605
    %v607 = vsub.f32 1.0, %v606
    %v608 = vmul.f32 %v605, %v607
    %v609 = vadd.f32 %v605, %v608
    %vm610 = vweird.f32 %v604
    %vm611 = vweird.f32 %v605
    %vm612 = vmor %vm610, %vm611
    %v613 = vsel %vm612, %v605, %v609
    %v614 = vand.u32 2147483647, %v604
    %vm615 = vcmp.eq.f32.partialorder %v614, 8.507059e+37
    %v616 = vand.u32 %v604, 2147483648
    %v617 = vor.u32 1.1754944e-38, %v616
    %v618 = vsel %vm615, %v617, %v613
    %v619 = vmul.f32 1.0, %v618
    %v620 = vtanh.pop %v560
    %v622 = vrot.slane %v484, 2
    %v624 = vmul.f32 %v619, %v622
    %626 = vrot.lane.b32.xlu0 %v620, 64
    %v627 = vpop.permute.xlu0 %626
    %v629 = vmul.f32 %v619, %v627
    %631 = vrot.lane.b32.xlu0 %v629, 32
    %v632 = vpop.permute.xlu0 %631
    %v634 = vadd.f32 %v624, %v632
    %v635 = vtanh.pop %v634
    %637 = vrot.lane.b32.xlu0 %v635, 64
    %v638 = vpop.permute.xlu0 %637
    %v640 = vmul.f32 %v619, %v638
    %642 = vrot.lane.b32.xlu0 %v600, 32
    %v643 = vpop.permute.xlu0 %642
    %vm645 = vcmask 259076
    %646 = vst.msk [vmem:[#allocation3] sm:$0x30] %vm645, %v643
    %648 = vrot.lane.b32.xlu0 %v640, 64
    %v649 = vpop.permute.xlu0 %648
    %vm651 = vcmask 519426
    %652 = vst.msk [vmem:[#allocation3 + $0x8] sm:$0xc] %vm651, %v649
    %v653 = vrot.slane %v600, 4
    %654 = vrot.lane.b32.xlu0 %v653, 32
    %v655 = vpop.permute.xlu0 %654
    %v656 = vsel %vm153, %v655, 0
    %658 = vmatpush.msra.mxu0 0.0
    %659 = vmatpush.msra.mxu0 0.0
    %660 = vmatpush.msra.mxu0 0.0
    %661 = vmatpush.msra.mxu0 0.0
    %662 = vmatpush.msra.mxu0 0.0
    %663 = vmatpush.msra.mxu0 0.0
    %664 = vmatpush.msra.mxu0 0.0
    %665 = vmatpush.msra.mxu0 0.0
    %666 = vmatpush.msra.mxu0 0.0
    %667 = vmatpush.msra.mxu0 0.0
    %668 = vmatpush.msra.mxu0 0.0
    %669 = vmatpush.msra.mxu0 0.0
    %670 = vmatpush.msra.mxu0 %v217
    %671 = vmatpush.msra.mxu0 %v216
    %672 = vmatpush.msra.mxu0 %v215
    %673 = vmatpush.msra.mxu0 %v214
    %674 = vmatmul.f32.gmra.mxu0 %v656
    %v675 = vpop.f32.mrf.mxu0
    %v676 = vadd.f32 0.0, %v675
    %677 = vdwg.mxu0
    %v679 = vrot.slane %v676, 2
    %v681 = vadd.f32 %v178, %v679
    %v682 = vrot.slane %v640, 2
    %683 = vrot.lane.b32.xlu0 %v682, 32
    %v684 = vpop.permute.xlu0 %683
    %v685 = vsel %vm153, %v684, 0
    %687 = vmatpush.msra.mxu0 0.0
    %688 = vmatpush.msra.mxu0 0.0
    %689 = vmatpush.msra.mxu0 0.0
    %690 = vmatpush.msra.mxu0 0.0
    %691 = vmatpush.msra.mxu0 0.0
    %692 = vmatpush.msra.mxu0 0.0
    %693 = vmatpush.msra.mxu0 0.0
    %694 = vmatpush.msra.mxu0 0.0
    %695 = vmatpush.msra.mxu0 0.0
    %696 = vmatpush.msra.mxu0 0.0
    %697 = vmatpush.msra.mxu0 0.0
    %698 = vmatpush.msra.mxu0 0.0
    %699 = vmatpush.msra.mxu0 %v221
    %700 = vmatpush.msra.mxu0 %v220
    %701 = vmatpush.msra.mxu0 %v219
    %702 = vmatpush.msra.mxu0 %v218
    %703 = vmatmul.f32.gmra.mxu0 %v685
    %v704 = vpop.f32.mrf.mxu0
    %v705 = vadd.f32 0.0, %v704
    %706 = vdwg.mxu0
    %v707 = vadd.f32 %v212, %v705
    %v708 = vxor.u32 %v681, 2147483648
    %v709 = vmul.f32 %v708, 1.442695
    %v710 = vpow.pop %v709
    %v711 = vadd.f32 %v710, 1.0
    %v712 = vrcp.pop %v711
    %v713 = vmul.f32 %v711, %v712
    %v714 = vsub.f32 1.0, %v713
    %v715 = vmul.f32 %v712, %v714
    %v716 = vadd.f32 %v712, %v715
    %vm717 = vweird.f32 %v711
    %vm718 = vweird.f32 %v712
    %vm719 = vmor %vm717, %vm718
    %v720 = vsel %vm719, %v712, %v716
    %v721 = vand.u32 2147483647, %v711
    %vm722 = vcmp.eq.f32.partialorder %v721, 8.507059e+37
    %v723 = vand.u32 %v711, 2147483648
    %v724 = vor.u32 1.1754944e-38, %v723
    %v725 = vsel %vm722, %v724, %v720
    %v726 = vmul.f32 1.0, %v725
    %v727 = vtanh.pop %v681
    %v729 = vrot.slane %v594, 6
    %v731 = vmul.f32 %v726, %v729
    %733 = vrot.lane.b32.xlu0 %v727, 64
    %v734 = vpop.permute.xlu0 %733
    %v736 = vmul.f32 %v726, %v734
    %738 = vrot.lane.b32.xlu0 %v736, 32
    %v739 = vpop.permute.xlu0 %738
    %v741 = vadd.f32 %v731, %v739
    %v742 = vtanh.pop %v741
    %744 = vrot.lane.b32.xlu0 %v742, 64
    %v745 = vpop.permute.xlu0 %744
    %v747 = vmul.f32 %v726, %v745
    %v748 = vxor.u32 %v707, 2147483648
    %v749 = vmul.f32 %v748, 1.442695
    %v750 = vpow.pop %v749
    %v751 = vadd.f32 %v750, 1.0
    %v752 = vrcp.pop %v751
    %v753 = vmul.f32 %v751, %v752
    %v754 = vsub.f32 1.0, %v753
    %v755 = vmul.f32 %v752, %v754
    %v756 = vadd.f32 %v752, %v755
    %vm757 = vweird.f32 %v751
    %vm758 = vweird.f32 %v752
    %vm759 = vmor %vm757, %vm758
    %v760 = vsel %vm759, %v752, %v756
    %v761 = vand.u32 2147483647, %v751
    %vm762 = vcmp.eq.f32.partialorder %v761, 8.507059e+37
    %v763 = vand.u32 %v751, 2147483648
    %v764 = vor.u32 1.1754944e-38, %v763
    %v765 = vsel %vm762, %v764, %v760
    %v766 = vmul.f32 1.0, %v765
    %v767 = vtanh.pop %v707
    %v769 = vrot.slane %v634, 2
    %v771 = vmul.f32 %v766, %v769
    %773 = vrot.lane.b32.xlu0 %v767, 64
    %v774 = vpop.permute.xlu0 %773
    %v776 = vmul.f32 %v766, %v774
    %778 = vrot.lane.b32.xlu0 %v776, 32
    %v779 = vpop.permute.xlu0 %778
    %v781 = vadd.f32 %v771, %v779
    %v782 = vtanh.pop %v781
    %784 = vrot.lane.b32.xlu0 %v782, 64
    %v785 = vpop.permute.xlu0 %784
    %v787 = vmul.f32 %v766, %v785
    %789 = vrot.lane.b32.xlu0 %v747, 32
    %v790 = vpop.permute.xlu0 %789
    %vm792 = vcmask 261126
    %793 = vst.msk [vmem:[#allocation3] sm:$0xc0] %vm792, %v790
    %795 = vrot.lane.b32.xlu0 %v787, 64
    %v796 = vpop.permute.xlu0 %795
    %vm798 = vcmask 517376
    %799 = vst.msk [vmem:[#allocation3 + $0x8] sm:$0x3] %vm798, %v796
    %v800 = vrot.slane %v747, 6
    %801 = vrot.lane.b32.xlu0 %v800, 32
    %v802 = vpop.permute.xlu0 %801
    %v803 = vsel %vm153, %v802, 0
    %805 = vmatpush.msra.mxu0 0.0
    %806 = vmatpush.msra.mxu0 0.0
    %807 = vmatpush.msra.mxu0 0.0
    %808 = vmatpush.msra.mxu0 0.0
    %809 = vmatpush.msra.mxu0 0.0
    %810 = vmatpush.msra.mxu0 0.0
    %811 = vmatpush.msra.mxu0 0.0
    %812 = vmatpush.msra.mxu0 0.0
    %813 = vmatpush.msra.mxu0 0.0
    %814 = vmatpush.msra.mxu0 0.0
    %815 = vmatpush.msra.mxu0 0.0
    %816 = vmatpush.msra.mxu0 0.0
    %817 = vmatpush.msra.mxu0 %v217
    %818 = vmatpush.msra.mxu0 %v216
    %819 = vmatpush.msra.mxu0 %v215
    %820 = vmatpush.msra.mxu0 %v214
    %821 = vmatmul.f32.gmra.mxu0 %v803
    %v822 = vpop.f32.mrf.mxu0
    %v823 = vadd.f32 0.0, %v822
    %824 = vdwg.mxu0
    %v825 = vadd.f32 %v181, %v823
    %826 = vrot.lane.b32.xlu0 %v787, 32
    %v827 = vpop.permute.xlu0 %826
    %v828 = vsel %vm153, %v827, 0
    %830 = vmatpush.msra.mxu0 0.0
    %831 = vmatpush.msra.mxu0 0.0
    %832 = vmatpush.msra.mxu0 0.0
    %833 = vmatpush.msra.mxu0 0.0
    %834 = vmatpush.msra.mxu0 0.0
    %835 = vmatpush.msra.mxu0 0.0
    %836 = vmatpush.msra.mxu0 0.0
    %837 = vmatpush.msra.mxu0 0.0
    %838 = vmatpush.msra.mxu0 0.0
    %839 = vmatpush.msra.mxu0 0.0
    %840 = vmatpush.msra.mxu0 0.0
    %841 = vmatpush.msra.mxu0 0.0
    %842 = vmatpush.msra.mxu0 %v221
    %843 = vmatpush.msra.mxu0 %v220
    %844 = vmatpush.msra.mxu0 %v219
    %845 = vmatpush.msra.mxu0 %v218
    %846 = vmatmul.f32.gmra.mxu0 %v828
    %v847 = vpop.f32.mrf.mxu0
    %v848 = vadd.f32 0.0, %v847
    %849 = vdwg.mxu0
    %v851 = vrot.slane %v848, 2
    %v853 = vadd.f32 %v209, %v851
    %v854 = vxor.u32 %v825, 2147483648
    %v855 = vmul.f32 %v854, 1.442695
    %v856 = vpow.pop %v855
    %v857 = vadd.f32 %v856, 1.0
    %v858 = vrcp.pop %v857
    %v859 = vmul.f32 %v857, %v858
    %v860 = vsub.f32 1.0, %v859
    %v861 = vmul.f32 %v858, %v860
    %v862 = vadd.f32 %v858, %v861
    %vm863 = vweird.f32 %v857
    %vm864 = vweird.f32 %v858
    %vm865 = vmor %vm863, %vm864
    %v866 = vsel %vm865, %v858, %v862
    %v867 = vand.u32 2147483647, %v857
    %vm868 = vcmp.eq.f32.partialorder %v867, 8.507059e+37
    %v869 = vand.u32 %v857, 2147483648
    %v870 = vor.u32 1.1754944e-38, %v869
    %v871 = vsel %vm868, %v870, %v866
    %v872 = vmul.f32 1.0, %v871
    %v873 = vtanh.pop %v825
    %v875 = vrot.slane %v741, 6
    %v877 = vmul.f32 %v872, %v875
    %879 = vrot.lane.b32.xlu0 %v873, 64
    %v880 = vpop.permute.xlu0 %879
    %v882 = vmul.f32 %v872, %v880
    %884 = vrot.lane.b32.xlu0 %v882, 32
    %v885 = vpop.permute.xlu0 %884
    %v887 = vadd.f32 %v877, %v885
    %v888 = vtanh.pop %v887
    %890 = vrot.lane.b32.xlu0 %v888, 64
    %v891 = vpop.permute.xlu0 %890
    %v893 = vmul.f32 %v872, %v891
    %v894 = vxor.u32 %v853, 2147483648
    %v895 = vmul.f32 %v894, 1.442695
    %v896 = vpow.pop %v895
    %v897 = vadd.f32 %v896, 1.0
    %v898 = vrcp.pop %v897
    %v899 = vmul.f32 %v897, %v898
    %v900 = vsub.f32 1.0, %v899
    %v901 = vmul.f32 %v898, %v900
    %v902 = vadd.f32 %v898, %v901
    %vm903 = vweird.f32 %v897
    %vm904 = vweird.f32 %v898
    %vm905 = vmor %vm903, %vm904
    %v906 = vsel %vm905, %v898, %v902
    %v907 = vand.u32 2147483647, %v897
    %vm908 = vcmp.eq.f32.partialorder %v907, 8.507059e+37
    %v909 = vand.u32 %v897, 2147483648
    %v910 = vor.u32 1.1754944e-38, %v909
    %v911 = vsel %vm908, %v910, %v906
    %v912 = vmul.f32 1.0, %v911
    %v913 = vtanh.pop %v853
    %v915 = vrot.slane %v781, 2
    %v917 = vmul.f32 %v912, %v915
    %919 = vrot.lane.b32.xlu0 %v913, 64
    %v920 = vpop.permute.xlu0 %919
    %v922 = vmul.f32 %v912, %v920
    %924 = vrot.lane.b32.xlu0 %v922, 32
    %v925 = vpop.permute.xlu0 %924
    %v927 = vadd.f32 %v917, %v925
    %v928 = vtanh.pop %v927
    %930 = vrot.lane.b32.xlu0 %v928, 64
    %v931 = vpop.permute.xlu0 %930
    %v933 = vmul.f32 %v912, %v931
    %935 = vrot.lane.b32.xlu0 %v893, 32
    %v936 = vpop.permute.xlu0 %935
    %938 = vst.msk [vmem:[#allocation3 + $0x8] sm:$0x3] %vm348, %v936
    %940 = vrot.lane.b32.xlu0 %v933, 64
    %v941 = vpop.permute.xlu0 %940
    %943 = vst.msk [vmem:[#allocation3] sm:$0xc0] %vm354, %v941
    %v944 = vsel %vm153, %v936, 0
    %946 = vmatpush.msra.mxu0 0.0
    %947 = vmatpush.msra.mxu0 0.0
    %948 = vmatpush.msra.mxu0 0.0
    %949 = vmatpush.msra.mxu0 0.0
    %950 = vmatpush.msra.mxu0 0.0
    %951 = vmatpush.msra.mxu0 0.0
    %952 = vmatpush.msra.mxu0 0.0
    %953 = vmatpush.msra.mxu0 0.0
    %954 = vmatpush.msra.mxu0 0.0
    %955 = vmatpush.msra.mxu0 0.0
    %956 = vmatpush.msra.mxu0 0.0
    %957 = vmatpush.msra.mxu0 0.0
    %958 = vmatpush.msra.mxu0 %v217
    %959 = vmatpush.msra.mxu0 %v216
    %960 = vmatpush.msra.mxu0 %v215
    %961 = vmatpush.msra.mxu0 %v214
    %962 = vmatmul.f32.gmra.mxu0 %v944
    %v963 = vpop.f32.mrf.mxu0
    %v964 = vadd.f32 0.0, %v963
    %965 = vdwg.mxu0
    %v967 = vrot.slane %v964, 6
    %v969 = vadd.f32 %v181, %v967
    %v970 = vrot.slane %v933, 6
    %971 = vrot.lane.b32.xlu0 %v970, 32
    %v972 = vpop.permute.xlu0 %971
    %v973 = vsel %vm153, %v972, 0
    %975 = vmatpush.msra.mxu0 0.0
    %976 = vmatpush.msra.mxu0 0.0
    %977 = vmatpush.msra.mxu0 0.0
    %978 = vmatpush.msra.mxu0 0.0
    %979 = vmatpush.msra.mxu0 0.0
    %980 = vmatpush.msra.mxu0 0.0
    %981 = vmatpush.msra.mxu0 0.0
    %982 = vmatpush.msra.mxu0 0.0
    %983 = vmatpush.msra.mxu0 0.0
    %984 = vmatpush.msra.mxu0 0.0
    %985 = vmatpush.msra.mxu0 0.0
    %986 = vmatpush.msra.mxu0 0.0
    %987 = vmatpush.msra.mxu0 %v221
    %988 = vmatpush.msra.mxu0 %v220
    %989 = vmatpush.msra.mxu0 %v219
    %990 = vmatpush.msra.mxu0 %v218
    %991 = vmatmul.f32.gmra.mxu0 %v973
    %v992 = vpop.f32.mrf.mxu0
    %v993 = vadd.f32 0.0, %v992
    %994 = vdwg.mxu0
    %v996 = vrot.slane %v993, 4
    %v998 = vadd.f32 %v209, %v996
    %v999 = vxor.u32 %v969, 2147483648
    %v1000 = vmul.f32 %v999, 1.442695
    %v1001 = vpow.pop %v1000
    %v1002 = vadd.f32 %v1001, 1.0
    %v1003 = vrcp.pop %v1002
    %v1004 = vmul.f32 %v1002, %v1003
    %v1005 = vsub.f32 1.0, %v1004
    %v1006 = vmul.f32 %v1003, %v1005
    %v1007 = vadd.f32 %v1003, %v1006
    %vm1008 = vweird.f32 %v1002
    %vm1009 = vweird.f32 %v1003
    %vm1010 = vmor %vm1008, %vm1009
    %v1011 = vsel %vm1010, %v1003, %v1007
    %v1012 = vand.u32 2147483647, %v1002
    %vm1013 = vcmp.eq.f32.partialorder %v1012, 8.507059e+37
    %v1014 = vand.u32 %v1002, 2147483648
    %v1015 = vor.u32 1.1754944e-38, %v1014
    %v1016 = vsel %vm1013, %v1015, %v1011
    %v1017 = vmul.f32 1.0, %v1016
    %v1018 = vtanh.pop %v969
    %v1020 = vrot.slane %v887, 6
    %v1022 = vmul.f32 %v1017, %v1020
    %1024 = vrot.lane.b32.xlu0 %v1018, 64
    %v1025 = vpop.permute.xlu0 %1024
    %v1027 = vmul.f32 %v1017, %v1025
    %1029 = vrot.lane.b32.xlu0 %v1027, 32
    %v1030 = vpop.permute.xlu0 %1029
    %v1032 = vadd.f32 %v1022, %v1030
    %v1033 = vtanh.pop %v1032
    %1035 = vrot.lane.b32.xlu0 %v1033, 64
    %v1036 = vpop.permute.xlu0 %1035
    %v1038 = vmul.f32 %v1017, %v1036
    %v1039 = vxor.u32 %v998, 2147483648
    %v1040 = vmul.f32 %v1039, 1.442695
    %v1041 = vpow.pop %v1040
    %v1042 = vadd.f32 %v1041, 1.0
    %v1043 = vrcp.pop %v1042
    %v1044 = vmul.f32 %v1042, %v1043
    %v1045 = vsub.f32 1.0, %v1044
    %v1046 = vmul.f32 %v1043, %v1045
    %v1047 = vadd.f32 %v1043, %v1046
    %vm1048 = vweird.f32 %v1042
    %vm1049 = vweird.f32 %v1043
    %vm1050 = vmor %vm1048, %vm1049
    %v1051 = vsel %vm1050, %v1043, %v1047
    %v1052 = vand.u32 2147483647, %v1042
    %vm1053 = vcmp.eq.f32.partialorder %v1052, 8.507059e+37
    %v1054 = vand.u32 %v1042, 2147483648
    %v1055 = vor.u32 1.1754944e-38, %v1054
    %v1056 = vsel %vm1053, %v1055, %v1051
    %v1057 = vmul.f32 1.0, %v1056
    %v1058 = vtanh.pop %v998
    %v1060 = vrot.slane %v927, 2
    %v1062 = vmul.f32 %v1057, %v1060
    %1064 = vrot.lane.b32.xlu0 %v1058, 64
    %v1065 = vpop.permute.xlu0 %1064
    %v1067 = vmul.f32 %v1057, %v1065
    %1069 = vrot.lane.b32.xlu0 %v1067, 32
    %v1070 = vpop.permute.xlu0 %1069
    %v1072 = vadd.f32 %v1062, %v1070
    %v1073 = vtanh.pop %v1072
    %1075 = vrot.lane.b32.xlu0 %v1073, 64
    %v1076 = vpop.permute.xlu0 %1075
    %v1078 = vmul.f32 %v1057, %v1076
    %1080 = vrot.lane.b32.xlu0 %v1038, 32
    %v1081 = vpop.permute.xlu0 %1080
    %1083 = vst.msk [vmem:[#allocation3 + $0x8] sm:$0xc] %vm495, %v1081
    %1085 = vrot.lane.b32.xlu0 %v1078, 64
    %v1086 = vpop.permute.xlu0 %1085
    %1088 = vst.msk [vmem:[#allocation3] sm:$0x30] %vm501, %v1086
    %v1089 = vrot.slane %v1038, 2
    %1090 = vrot.lane.b32.xlu0 %v1089, 32
    %v1091 = vpop.permute.xlu0 %1090
    %v1092 = vsel %vm153, %v1091, 0
    %1094 = vmatpush.msra.mxu0 0.0
    %1095 = vmatpush.msra.mxu0 0.0
    %1096 = vmatpush.msra.mxu0 0.0
    %1097 = vmatpush.msra.mxu0 0.0
    %1098 = vmatpush.msra.mxu0 0.0
    %1099 = vmatpush.msra.mxu0 0.0
    %1100 = vmatpush.msra.mxu0 0.0
    %1101 = vmatpush.msra.mxu0 0.0
    %1102 = vmatpush.msra.mxu0 0.0
    %1103 = vmatpush.msra.mxu0 0.0
    %1104 = vmatpush.msra.mxu0 0.0
    %1105 = vmatpush.msra.mxu0 0.0
    %1106 = vmatpush.msra.mxu0 %v217
    %1107 = vmatpush.msra.mxu0 %v216
    %1108 = vmatpush.msra.mxu0 %v215
    %1109 = vmatpush.msra.mxu0 %v214
    %1110 = vmatmul.f32.gmra.mxu0 %v1092
    %v1111 = vpop.f32.mrf.mxu0
    %v1112 = vadd.f32 0.0, %v1111
    %1113 = vdwg.mxu0
    %v1115 = vrot.slane %v1112, 4
    %v1117 = vadd.f32 %v181, %v1115
    %v1118 = vrot.slane %v1078, 4
    %1119 = vrot.lane.b32.xlu0 %v1118, 32
    %v1120 = vpop.permute.xlu0 %1119
    %v1121 = vsel %vm153, %v1120, 0
    %1123 = vmatpush.msra.mxu0 0.0
    %1124 = vmatpush.msra.mxu0 0.0
    %1125 = vmatpush.msra.mxu0 0.0
    %1126 = vmatpush.msra.mxu0 0.0
    %1127 = vmatpush.msra.mxu0 0.0
    %1128 = vmatpush.msra.mxu0 0.0
    %1129 = vmatpush.msra.mxu0 0.0
    %1130 = vmatpush.msra.mxu0 0.0
    %1131 = vmatpush.msra.mxu0 0.0
    %1132 = vmatpush.msra.mxu0 0.0
    %1133 = vmatpush.msra.mxu0 0.0
    %1134 = vmatpush.msra.mxu0 0.0
    %1135 = vmatpush.msra.mxu0 %v221
    %1136 = vmatpush.msra.mxu0 %v220
    %1137 = vmatpush.msra.mxu0 %v219
    %1138 = vmatpush.msra.mxu0 %v218
    %1139 = vmatmul.f32.gmra.mxu0 %v1121
    %v1140 = vpop.f32.mrf.mxu0
    %v1141 = vadd.f32 0.0, %v1140
    %1142 = vdwg.mxu0
    %v1144 = vrot.slane %v1141, 6
    %v1146 = vadd.f32 %v209, %v1144
    %v1147 = vxor.u32 %v1117, 2147483648
    %v1148 = vmul.f32 %v1147, 1.442695
    %v1149 = vpow.pop %v1148
    %v1150 = vadd.f32 %v1149, 1.0
    %v1151 = vrcp.pop %v1150
    %v1152 = vmul.f32 %v1150, %v1151
    %v1153 = vsub.f32 1.0, %v1152
    %v1154 = vmul.f32 %v1151, %v1153
    %v1155 = vadd.f32 %v1151, %v1154
    %vm1156 = vweird.f32 %v1150
    %vm1157 = vweird.f32 %v1151
    %vm1158 = vmor %vm1156, %vm1157
    %v1159 = vsel %vm1158, %v1151, %v1155
    %v1160 = vand.u32 2147483647, %v1150
    %vm1161 = vcmp.eq.f32.partialorder %v1160, 8.507059e+37
    %v1162 = vand.u32 %v1150, 2147483648
    %v1163 = vor.u32 1.1754944e-38, %v1162
    %v1164 = vsel %vm1161, %v1163, %v1159
    %v1165 = vmul.f32 1.0, %v1164
    %v1166 = vtanh.pop %v1117
    %v1168 = vrot.slane %v1032, 6
    %v1170 = vmul.f32 %v1165, %v1168
    %1172 = vrot.lane.b32.xlu0 %v1166, 64
    %v1173 = vpop.permute.xlu0 %1172
    %v1175 = vmul.f32 %v1165, %v1173
    %1177 = vrot.lane.b32.xlu0 %v1175, 32
    %v1178 = vpop.permute.xlu0 %1177
    %v1180 = vadd.f32 %v1170, %v1178
    %v1181 = vtanh.pop %v1180
    %1183 = vrot.lane.b32.xlu0 %v1181, 64
    %v1184 = vpop.permute.xlu0 %1183
    %v1186 = vmul.f32 %v1165, %v1184
    %v1187 = vxor.u32 %v1146, 2147483648
    %v1188 = vmul.f32 %v1187, 1.442695
    %v1189 = vpow.pop %v1188
    %v1190 = vadd.f32 %v1189, 1.0
    %v1191 = vrcp.pop %v1190
    %v1192 = vmul.f32 %v1190, %v1191
    %v1193 = vsub.f32 1.0, %v1192
    %v1194 = vmul.f32 %v1191, %v1193
    %v1195 = vadd.f32 %v1191, %v1194
    %vm1196 = vweird.f32 %v1190
    %vm1197 = vweird.f32 %v1191
    %vm1198 = vmor %vm1196, %vm1197
    %v1199 = vsel %vm1198, %v1191, %v1195
    %v1200 = vand.u32 2147483647, %v1190
    %vm1201 = vcmp.eq.f32.partialorder %v1200, 8.507059e+37
    %v1202 = vand.u32 %v1190, 2147483648
    %v1203 = vor.u32 1.1754944e-38, %v1202
    %v1204 = vsel %vm1201, %v1203, %v1199
    %v1205 = vmul.f32 1.0, %v1204
    %v1206 = vtanh.pop %v1146
    %v1208 = vrot.slane %v1072, 2
    %v1210 = vmul.f32 %v1205, %v1208
    %1212 = vrot.lane.b32.xlu0 %v1206, 64
    %v1213 = vpop.permute.xlu0 %1212
    %v1215 = vmul.f32 %v1205, %v1213
    %1217 = vrot.lane.b32.xlu0 %v1215, 32
    %v1218 = vpop.permute.xlu0 %1217
    %v1220 = vadd.f32 %v1210, %v1218
    %v1221 = vtanh.pop %v1220
    %1223 = vrot.lane.b32.xlu0 %v1221, 64
    %v1224 = vpop.permute.xlu0 %1223
    %v1226 = vmul.f32 %v1205, %v1224
    %1228 = vrot.lane.b32.xlu0 %v1186, 32
    %v1229 = vpop.permute.xlu0 %1228
    %1231 = vst.msk [vmem:[#allocation3 + $0x8] sm:$0x30] %vm645, %v1229
    %1233 = vrot.lane.b32.xlu0 %v1226, 64
    %v1234 = vpop.permute.xlu0 %1233
    %1236 = vst.msk [vmem:[#allocation3] sm:$0xc] %vm651, %v1234
    %v1237 = vrot.slane %v1186, 4
    %1238 = vrot.lane.b32.xlu0 %v1237, 32
    %v1239 = vpop.permute.xlu0 %1238
    %v1240 = vsel %vm153, %v1239, 0
    %1242 = vmatpush.msra.mxu0 0.0
    %1243 = vmatpush.msra.mxu0 0.0
    %1244 = vmatpush.msra.mxu0 0.0
    %1245 = vmatpush.msra.mxu0 0.0
    %1246 = vmatpush.msra.mxu0 0.0
    %1247 = vmatpush.msra.mxu0 0.0
    %1248 = vmatpush.msra.mxu0 0.0
    %1249 = vmatpush.msra.mxu0 0.0
    %1250 = vmatpush.msra.mxu0 0.0
    %1251 = vmatpush.msra.mxu0 0.0
    %1252 = vmatpush.msra.mxu0 0.0
    %1253 = vmatpush.msra.mxu0 0.0
    %1254 = vmatpush.msra.mxu0 %v217
    %1255 = vmatpush.msra.mxu0 %v216
    %1256 = vmatpush.msra.mxu0 %v215
    %1257 = vmatpush.msra.mxu0 %v214
    %1258 = vmatmul.f32.gmra.mxu0 %v1240
    %v1259 = vpop.f32.mrf.mxu0
    %v1260 = vadd.f32 0.0, %v1259
    %1261 = vdwg.mxu0
    %v1263 = vrot.slane %v1260, 2
    %v1265 = vadd.f32 %v181, %v1263
    %v1266 = vrot.slane %v1226, 2
    %1267 = vrot.lane.b32.xlu0 %v1266, 32
    %v1268 = vpop.permute.xlu0 %1267
    %v1269 = vsel %vm153, %v1268, 0
    %1271 = vmatpush.msra.mxu0 0.0
    %1272 = vmatpush.msra.mxu0 0.0
    %1273 = vmatpush.msra.mxu0 0.0
    %1274 = vmatpush.msra.mxu0 0.0
    %1275 = vmatpush.msra.mxu0 0.0
    %1276 = vmatpush.msra.mxu0 0.0
    %1277 = vmatpush.msra.mxu0 0.0
    %1278 = vmatpush.msra.mxu0 0.0
    %1279 = vmatpush.msra.mxu0 0.0
    %1280 = vmatpush.msra.mxu0 0.0
    %1281 = vmatpush.msra.mxu0 0.0
    %1282 = vmatpush.msra.mxu0 0.0
    %1283 = vmatpush.msra.mxu0 %v221
    %1284 = vmatpush.msra.mxu0 %v220
    %1285 = vmatpush.msra.mxu0 %v219
    %1286 = vmatpush.msra.mxu0 %v218
    %1287 = vmatmul.f32.gmra.mxu0 %v1269
    %v1288 = vpop.f32.mrf.mxu0
    %v1289 = vadd.f32 0.0, %v1288
    %1290 = vdwg.mxu0
    %v1291 = vadd.f32 %v209, %v1289
    %v1292 = vxor.u32 %v1265, 2147483648
    %v1293 = vmul.f32 %v1292, 1.442695
    %v1294 = vpow.pop %v1293
    %v1295 = vadd.f32 %v1294, 1.0
    %v1296 = vrcp.pop %v1295
    %v1297 = vmul.f32 %v1295, %v1296
    %v1298 = vsub.f32 1.0, %v1297
    %v1299 = vmul.f32 %v1296, %v1298
    %v1300 = vadd.f32 %v1296, %v1299
    %vm1301 = vweird.f32 %v1295
    %vm1302 = vweird.f32 %v1296
    %vm1303 = vmor %vm1301, %vm1302
    %v1304 = vsel %vm1303, %v1296, %v1300
    %v1305 = vand.u32 2147483647, %v1295
    %vm1306 = vcmp.eq.f32.partialorder %v1305, 8.507059e+37
    %v1307 = vand.u32 %v1295, 2147483648
    %v1308 = vor.u32 1.1754944e-38, %v1307
    %v1309 = vsel %vm1306, %v1308, %v1304
    %v1310 = vmul.f32 1.0, %v1309
    %v1311 = vtanh.pop %v1265
    %v1313 = vrot.slane %v1180, 6
    %v1315 = vmul.f32 %v1310, %v1313
    %1317 = vrot.lane.b32.xlu0 %v1311, 64
    %v1318 = vpop.permute.xlu0 %1317
    %v1320 = vmul.f32 %v1310, %v1318
    %1322 = vrot.lane.b32.xlu0 %v1320, 32
    %v1323 = vpop.permute.xlu0 %1322
    %v1325 = vadd.f32 %v1315, %v1323
    %v1326 = vtanh.pop %v1325
    %1328 = vrot.lane.b32.xlu0 %v1326, 64
    %v1329 = vpop.permute.xlu0 %1328
    %v1331 = vmul.f32 %v1310, %v1329
    %v1332 = vxor.u32 %v1291, 2147483648
    %v1333 = vmul.f32 %v1332, 1.442695
    %v1334 = vpow.pop %v1333
    %v1335 = vadd.f32 %v1334, 1.0
    %v1336 = vrcp.pop %v1335
    %v1337 = vmul.f32 %v1335, %v1336
    %v1338 = vsub.f32 1.0, %v1337
    %v1339 = vmul.f32 %v1336, %v1338
    %v1340 = vadd.f32 %v1336, %v1339
    %vm1341 = vweird.f32 %v1335
    %vm1342 = vweird.f32 %v1336
    %vm1343 = vmor %vm1341, %vm1342
    %v1344 = vsel %vm1343, %v1336, %v1340
    %v1345 = vand.u32 2147483647, %v1335
    %vm1346 = vcmp.eq.f32.partialorder %v1345, 8.507059e+37
    %v1347 = vand.u32 %v1335, 2147483648
    %v1348 = vor.u32 1.1754944e-38, %v1347
    %v1349 = vsel %vm1346, %v1348, %v1344
    %v1350 = vmul.f32 1.0, %v1349
    %v1351 = vtanh.pop %v1291
    %v1353 = vrot.slane %v1220, 2
    %v1355 = vmul.f32 %v1350, %v1353
    %1357 = vrot.lane.b32.xlu0 %v1351, 64
    %v1358 = vpop.permute.xlu0 %1357
    %v1360 = vmul.f32 %v1350, %v1358
    %1362 = vrot.lane.b32.xlu0 %v1360, 32
    %v1363 = vpop.permute.xlu0 %1362
    %v1365 = vadd.f32 %v1355, %v1363
    %v1366 = vtanh.pop %v1365
    %1368 = vrot.lane.b32.xlu0 %v1366, 64
    %v1369 = vpop.permute.xlu0 %1368
    %v1371 = vmul.f32 %v1350, %v1369
    %1373 = vrot.lane.b32.xlu0 %v1331, 32
    %v1374 = vpop.permute.xlu0 %1373
    %1376 = vst.msk [vmem:[#allocation3 + $0x8] sm:$0xc0] %vm792, %v1374
    %1378 = vrot.lane.b32.xlu0 %v1371, 64
    %v1379 = vpop.permute.xlu0 %1378
    %1381 = vst.msk [vmem:[#allocation3] sm:$0x3] %vm798, %v1379
    %v1382 = vld [vmem:[#allocation3] sm:$0xff]
    %v1383 = vld [vmem:[#allocation3 + $0x8] sm:$0xff]
    %v1384 = vld [vmem:[%s9] sm:$0xff]
    %v1385 = vld [vmem:[%s9 + $0x8] sm:$0xff]
    %v1386 = vld [vmem:[%s9 + $0x10] sm:$0xff]
    %v1387 = vld [vmem:[%s9 + $0x18] sm:$0xff]
    %v1388 = vld [vmem:[%s9 + $0x20] sm:$0xff]
    %v1389 = vld [vmem:[%s9 + $0x28] sm:$0xff]
    %v1390 = vld [vmem:[%s9 + $0x30] sm:$0xff]
    %v1391 = vld [vmem:[%s9 + $0x38] sm:$0xff]
    %v1392 = vld [vmem:[%s11] sm:$0x1]
    %v1394 = vperm.slane %v1392, 0
    %vm1396 = vcmask 523264
    %v1398 = vsel %vm1396, %v1382, 0
    %v1401 = vsel %vm1396, %v1383, 0
    %1403 = vmatpush.msra.mxu0 0.0
    %1404 = vmatpush.msra.mxu0 0.0
    %1405 = vmatpush.msra.mxu0 0.0
    %1406 = vmatpush.msra.mxu0 0.0
    %1407 = vmatpush.msra.mxu0 0.0
    %1408 = vmatpush.msra.mxu0 0.0
    %1409 = vmatpush.msra.mxu0 0.0
    %1410 = vmatpush.msra.mxu0 0.0
    %1411 = vmatpush.msra.mxu0 %v1391
    %1412 = vmatpush.msra.mxu0 %v1390
    %1413 = vmatpush.msra.mxu0 %v1389
    %1414 = vmatpush.msra.mxu0 %v1388
    %1415 = vmatpush.msra.mxu0 %v1387
    %1416 = vmatpush.msra.mxu0 %v1386
    %1417 = vmatpush.msra.mxu0 %v1385
    %1418 = vmatpush.msra.mxu0 %v1384
    %1419 = vmatmul.f32.gmra.mxu0 %v1398
    %v1420 = vpop.f32.mrf.mxu0
    %v1421 = vadd.f32 %v1394, %v1420
    %1422 = vmatmul.f32.gmra.mxu0 %v1401
    %v1423 = vpop.f32.mrf.mxu0
    %v1424 = vadd.f32 %v1394, %v1423
    %1425 = vdwg.mxu0
    %v1426 = vld [vmem:[%s12] sm:$0xff]
    %v1427 = vld [vmem:[%s12 + $0x8] sm:$0xff]
    %v1428 = vld [vmem:[%s12 + $0x10] sm:$0xff]
    %v1429 = vld [vmem:[%s12 + $0x18] sm:$0xff]
    %v1430 = vld [vmem:[%s12 + $0x20] sm:$0xff]
    %v1431 = vld [vmem:[%s12 + $0x28] sm:$0xff]
    %v1432 = vld [vmem:[%s12 + $0x30] sm:$0xff]
    %v1433 = vld [vmem:[%s12 + $0x38] sm:$0xff]
    %v1434 = vld [vmem:[%s14] sm:$0x1]
    %v1436 = vperm.slane %v1434, 0
    %1438 = vmatpush.msra.mxu0 0.0
    %1439 = vmatpush.msra.mxu0 0.0
    %1440 = vmatpush.msra.mxu0 0.0
    %1441 = vmatpush.msra.mxu0 0.0
    %1442 = vmatpush.msra.mxu0 0.0
    %1443 = vmatpush.msra.mxu0 0.0
    %1444 = vmatpush.msra.mxu0 0.0
    %1445 = vmatpush.msra.mxu0 0.0
    %1446 = vmatpush.msra.mxu0 %v1433
    %1447 = vmatpush.msra.mxu0 %v1432
    %1448 = vmatpush.msra.mxu0 %v1431
    %1449 = vmatpush.msra.mxu0 %v1430
    %1450 = vmatpush.msra.mxu0 %v1429
    %1451 = vmatpush.msra.mxu0 %v1428
    %1452 = vmatpush.msra.mxu0 %v1427
    %1453 = vmatpush.msra.mxu0 %v1426
    %1454 = vmatmul.f32.gmra.mxu0 %v1398
    %v1455 = vpop.f32.mrf.mxu0
    %v1456 = vadd.f32 %v1436, %v1455
    %1457 = vmatmul.f32.gmra.mxu0 %v1401
    %v1458 = vpop.f32.mrf.mxu0
    %v1459 = vadd.f32 %v1436, %v1458
    %1460 = vdwg.mxu0
    %v1461 = vld [vmem:[%s10] sm:$0xff]
    %v1462 = vld [vmem:[%s10 + $0x8] sm:$0xff]
    %v1463 = vld [vmem:[%s10 + $0x10] sm:$0xff]
    %v1464 = vld [vmem:[%s10 + $0x18] sm:$0xff]
    %v1465 = vld [vmem:[%s13] sm:$0xff]
    %v1466 = vld [vmem:[%s13 + $0x8] sm:$0xff]
    %v1467 = vld [vmem:[%s13 + $0x10] sm:$0xff]
    %v1468 = vld [vmem:[%s13 + $0x18] sm:$0xff]
    %1469 = vmatpush.msra.mxu0 0.0
    %1470 = vmatpush.msra.mxu0 0.0
    %1471 = vmatpush.msra.mxu0 0.0
    %1472 = vmatpush.msra.mxu0 0.0
    %1473 = vmatpush.msra.mxu0 0.0
    %1474 = vmatpush.msra.mxu0 0.0
    %1475 = vmatpush.msra.mxu0 0.0
    %1476 = vmatpush.msra.mxu0 0.0
    %1477 = vmatpush.msra.mxu0 0.0
    %1478 = vmatpush.msra.mxu0 0.0
    %1479 = vmatpush.msra.mxu0 0.0
    %1480 = vmatpush.msra.mxu0 0.0
    %1481 = vmatpush.msra.mxu0 %v1464
    %1482 = vmatpush.msra.mxu0 %v1463
    %1483 = vmatpush.msra.mxu0 %v1462
    %1484 = vmatpush.msra.mxu0 %v1461
    %1485 = vmatmul.f32.gmra.mxu0 %v223
    %v1486 = vpop.f32.mrf.mxu0
    %v1487 = vadd.f32 0.0, %v1486
    %1488 = vdwg.mxu0
    %v1489 = vadd.f32 %v1421, %v1487
    %1490 = vmatpush.msra.mxu0 0.0
    %1491 = vmatpush.msra.mxu0 0.0
    %1492 = vmatpush.msra.mxu0 0.0
    %1493 = vmatpush.msra.mxu0 0.0
    %1494 = vmatpush.msra.mxu0 0.0
    %1495 = vmatpush.msra.mxu0 0.0
    %1496 = vmatpush.msra.mxu0 0.0
    %1497 = vmatpush.msra.mxu0 0.0
    %1498 = vmatpush.msra.mxu0 0.0
    %1499 = vmatpush.msra.mxu0 0.0
    %1500 = vmatpush.msra.mxu0 0.0
    %1501 = vmatpush.msra.mxu0 0.0
    %1502 = vmatpush.msra.mxu0 %v1468
    %1503 = vmatpush.msra.mxu0 %v1467
    %1504 = vmatpush.msra.mxu0 %v1466
    %1505 = vmatpush.msra.mxu0 %v1465
    %1506 = vmatmul.f32.gmra.mxu0 %v223
    %v1507 = vpop.f32.mrf.mxu0
    %v1508 = vadd.f32 0.0, %v1507
    %1509 = vdwg.mxu0
    %v1511 = vrot.slane %v1508, 2
    %v1513 = vadd.f32 %v1459, %v1511
    %v1514 = vxor.u32 %v1489, 2147483648
    %v1515 = vmul.f32 %v1514, 1.442695
    %v1516 = vpow.pop %v1515
    %v1517 = vadd.f32 %v1516, 1.0
    %v1518 = vrcp.pop %v1517
    %v1519 = vmul.f32 %v1517, %v1518
    %v1520 = vsub.f32 1.0, %v1519
    %v1521 = vmul.f32 %v1518, %v1520
    %v1522 = vadd.f32 %v1518, %v1521
    %vm1523 = vweird.f32 %v1517
    %vm1524 = vweird.f32 %v1518
    %vm1525 = vmor %vm1523, %vm1524
    %v1526 = vsel %vm1525, %v1518, %v1522
    %v1527 = vand.u32 2147483647, %v1517
    %vm1528 = vcmp.eq.f32.partialorder %v1527, 8.507059e+37
    %v1529 = vand.u32 %v1517, 2147483648
    %v1530 = vor.u32 1.1754944e-38, %v1529
    %v1531 = vsel %vm1528, %v1530, %v1526
    %v1532 = vmul.f32 1.0, %v1531
    %v1533 = vtanh.pop %v1489
    %v1534 = vmul.f32 %v1532, 0.0
    %1536 = vrot.lane.b32.xlu0 %v1533, 64
    %v1537 = vpop.permute.xlu0 %1536
    %v1539 = vmul.f32 %v1532, %v1537
    %1541 = vrot.lane.b32.xlu0 %v1539, 32
    %v1542 = vpop.permute.xlu0 %1541
    %v1544 = vadd.f32 %v1534, %v1542
    %v1545 = vtanh.pop %v1544
    %1547 = vrot.lane.b32.xlu0 %v1545, 64
    %v1548 = vpop.permute.xlu0 %1547
    %v1550 = vmul.f32 %v1532, %v1548
    %v1551 = vxor.u32 %v1513, 2147483648
    %v1552 = vmul.f32 %v1551, 1.442695
    %v1553 = vpow.pop %v1552
    %v1554 = vadd.f32 %v1553, 1.0
    %v1555 = vrcp.pop %v1554
    %v1556 = vmul.f32 %v1554, %v1555
    %v1557 = vsub.f32 1.0, %v1556
    %v1558 = vmul.f32 %v1555, %v1557
    %v1559 = vadd.f32 %v1555, %v1558
    %vm1560 = vweird.f32 %v1554
    %vm1561 = vweird.f32 %v1555
    %vm1562 = vmor %vm1560, %vm1561
    %v1563 = vsel %vm1562, %v1555, %v1559
    %v1564 = vand.u32 2147483647, %v1554
    %vm1565 = vcmp.eq.f32.partialorder %v1564, 8.507059e+37
    %v1566 = vand.u32 %v1554, 2147483648
    %v1567 = vor.u32 1.1754944e-38, %v1566
    %v1568 = vsel %vm1565, %v1567, %v1563
    %v1569 = vmul.f32 1.0, %v1568
    %v1570 = vtanh.pop %v1513
    %v1571 = vmul.f32 %v1569, 0.0
    %1573 = vrot.lane.b32.xlu0 %v1570, 64
    %v1574 = vpop.permute.xlu0 %1573
    %v1576 = vmul.f32 %v1569, %v1574
    %1578 = vrot.lane.b32.xlu0 %v1576, 32
    %v1579 = vpop.permute.xlu0 %1578
    %v1581 = vadd.f32 %v1571, %v1579
    %v1582 = vtanh.pop %v1581
    %1584 = vrot.lane.b32.xlu0 %v1582, 64
    %v1585 = vpop.permute.xlu0 %1584
    %v1587 = vmul.f32 %v1569, %v1585
    %1589 = vrot.lane.b32.xlu0 %v1550, 32
    %v1590 = vpop.permute.xlu0 %1589
    %1592 = vst.msk [vmem:[#allocation4] sm:$0x1] %vm81, %v1590
    %1594 = vrot.lane.b32.xlu0 %v1587, 64
    %v1595 = vpop.permute.xlu0 %1594
    %vm1597 = vcmask 522502
    %1598 = vst.msk [vmem:[#allocation4 + $0x1] sm:$0x40] %vm1597, %v1595
    %vm1599 = vcmask 254977
    %1600 = vst.msk [vmem:[#allocation4 + $0x7] sm:$0x2] %vm1599, %v1590
    %vm1601 = vcmask 523527
    %1602 = vst.msk [vmem:[#allocation4 + $0x8] sm:$0x80] %vm1601, %v1595
    %v1603 = vsel %vm153, %v1590, 0
    %1605 = vmatpush.msra.mxu0 0.0
    %1606 = vmatpush.msra.mxu0 0.0
    %1607 = vmatpush.msra.mxu0 0.0
    %1608 = vmatpush.msra.mxu0 0.0
    %1609 = vmatpush.msra.mxu0 0.0
    %1610 = vmatpush.msra.mxu0 0.0
    %1611 = vmatpush.msra.mxu0 0.0
    %1612 = vmatpush.msra.mxu0 0.0
    %1613 = vmatpush.msra.mxu0 0.0
    %1614 = vmatpush.msra.mxu0 0.0
    %1615 = vmatpush.msra.mxu0 0.0
    %1616 = vmatpush.msra.mxu0 0.0
    %1617 = vmatpush.msra.mxu0 %v1464
    %1618 = vmatpush.msra.mxu0 %v1463
    %1619 = vmatpush.msra.mxu0 %v1462
    %1620 = vmatpush.msra.mxu0 %v1461
    %1621 = vmatmul.f32.gmra.mxu0 %v1603
    %v1622 = vpop.f32.mrf.mxu0
    %v1623 = vadd.f32 0.0, %v1622
    %1624 = vdwg.mxu0
    %v1626 = vrot.slane %v1623, 6
    %v1628 = vadd.f32 %v1421, %v1626
    %v1629 = vrot.slane %v1587, 6
    %1630 = vrot.lane.b32.xlu0 %v1629, 32
    %v1631 = vpop.permute.xlu0 %1630
    %v1632 = vsel %vm153, %v1631, 0
    %1634 = vmatpush.msra.mxu0 0.0
    %1635 = vmatpush.msra.mxu0 0.0
    %1636 = vmatpush.msra.mxu0 0.0
    %1637 = vmatpush.msra.mxu0 0.0
    %1638 = vmatpush.msra.mxu0 0.0
    %1639 = vmatpush.msra.mxu0 0.0
    %1640 = vmatpush.msra.mxu0 0.0
    %1641 = vmatpush.msra.mxu0 0.0
    %1642 = vmatpush.msra.mxu0 0.0
    %1643 = vmatpush.msra.mxu0 0.0
    %1644 = vmatpush.msra.mxu0 0.0
    %1645 = vmatpush.msra.mxu0 0.0
    %1646 = vmatpush.msra.mxu0 %v1468
    %1647 = vmatpush.msra.mxu0 %v1467
    %1648 = vmatpush.msra.mxu0 %v1466
    %1649 = vmatpush.msra.mxu0 %v1465
    %1650 = vmatmul.f32.gmra.mxu0 %v1632
    %v1651 = vpop.f32.mrf.mxu0
    %v1652 = vadd.f32 0.0, %v1651
    %1653 = vdwg.mxu0
    %v1655 = vrot.slane %v1652, 4
    %v1657 = vadd.f32 %v1459, %v1655
    %v1658 = vxor.u32 %v1628, 2147483648
    %v1659 = vmul.f32 %v1658, 1.442695
    %v1660 = vpow.pop %v1659
    %v1661 = vadd.f32 %v1660, 1.0
    %v1662 = vrcp.pop %v1661
    %v1663 = vmul.f32 %v1661, %v1662
    %v1664 = vsub.f32 1.0, %v1663
    %v1665 = vmul.f32 %v1662, %v1664
    %v1666 = vadd.f32 %v1662, %v1665
    %vm1667 = vweird.f32 %v1661
    %vm1668 = vweird.f32 %v1662
    %vm1669 = vmor %vm1667, %vm1668
    %v1670 = vsel %vm1669, %v1662, %v1666
    %v1671 = vand.u32 2147483647, %v1661
    %vm1672 = vcmp.eq.f32.partialorder %v1671, 8.507059e+37
    %v1673 = vand.u32 %v1661, 2147483648
    %v1674 = vor.u32 1.1754944e-38, %v1673
    %v1675 = vsel %vm1672, %v1674, %v1670
    %v1676 = vmul.f32 1.0, %v1675
    %v1677 = vtanh.pop %v1628
    %v1679 = vrot.slane %v1544, 6
    %v1681 = vmul.f32 %v1676, %v1679
    %1683 = vrot.lane.b32.xlu0 %v1677, 64
    %v1684 = vpop.permute.xlu0 %1683
    %v1686 = vmul.f32 %v1676, %v1684
    %1688 = vrot.lane.b32.xlu0 %v1686, 32
    %v1689 = vpop.permute.xlu0 %1688
    %v1691 = vadd.f32 %v1681, %v1689
    %v1692 = vtanh.pop %v1691
    %1694 = vrot.lane.b32.xlu0 %v1692, 64
    %v1695 = vpop.permute.xlu0 %1694
    %v1697 = vmul.f32 %v1676, %v1695
    %v1698 = vxor.u32 %v1657, 2147483648
    %v1699 = vmul.f32 %v1698, 1.442695
    %v1700 = vpow.pop %v1699
    %v1701 = vadd.f32 %v1700, 1.0
    %v1702 = vrcp.pop %v1701
    %v1703 = vmul.f32 %v1701, %v1702
    %v1704 = vsub.f32 1.0, %v1703
    %v1705 = vmul.f32 %v1702, %v1704
    %v1706 = vadd.f32 %v1702, %v1705
    %vm1707 = vweird.f32 %v1701
    %vm1708 = vweird.f32 %v1702
    %vm1709 = vmor %vm1707, %vm1708
    %v1710 = vsel %vm1709, %v1702, %v1706
    %v1711 = vand.u32 2147483647, %v1701
    %vm1712 = vcmp.eq.f32.partialorder %v1711, 8.507059e+37
    %v1713 = vand.u32 %v1701, 2147483648
    %v1714 = vor.u32 1.1754944e-38, %v1713
    %v1715 = vsel %vm1712, %v1714, %v1710
    %v1716 = vmul.f32 1.0, %v1715
    %v1717 = vtanh.pop %v1657
    %v1719 = vrot.slane %v1581, 2
    %v1721 = vmul.f32 %v1716, %v1719
    %1723 = vrot.lane.b32.xlu0 %v1717, 64
    %v1724 = vpop.permute.xlu0 %1723
    %v1726 = vmul.f32 %v1716, %v1724
    %1728 = vrot.lane.b32.xlu0 %v1726, 32
    %v1729 = vpop.permute.xlu0 %1728
    %v1731 = vadd.f32 %v1721, %v1729
    %v1732 = vtanh.pop %v1731
    %1734 = vrot.lane.b32.xlu0 %v1732, 64
    %v1735 = vpop.permute.xlu0 %1734
    %v1737 = vmul.f32 %v1716, %v1735
    %1739 = vrot.lane.b32.xlu0 %v1697, 32
    %v1740 = vpop.permute.xlu0 %1739
    %vm1742 = vcmask 256002
    %1743 = vst.msk [vmem:[#allocation4 - $0x1] sm:$0x4] %vm1742, %v1740
    %1745 = vrot.lane.b32.xlu0 %v1737, 64
    %v1746 = vpop.permute.xlu0 %1745
    %vm1748 = vcmask 520452
    %1749 = vst.msk [vmem:[#allocation4 + $0x2] sm:$0x10] %vm1748, %v1746
    %vm1750 = vcmask 257027
    %1751 = vst.msk [vmem:[#allocation4 + $0x6] sm:$0x8] %vm1750, %v1740
    %vm1752 = vcmask 521477
    %1753 = vst.msk [vmem:[#allocation4 + $0x9] sm:$0x20] %vm1752, %v1746
    %v1754 = vrot.slane %v1697, 2
    %1755 = vrot.lane.b32.xlu0 %v1754, 32
    %v1756 = vpop.permute.xlu0 %1755
    %v1757 = vsel %vm153, %v1756, 0
    %1759 = vmatpush.msra.mxu0 0.0
    %1760 = vmatpush.msra.mxu0 0.0
    %1761 = vmatpush.msra.mxu0 0.0
    %1762 = vmatpush.msra.mxu0 0.0
    %1763 = vmatpush.msra.mxu0 0.0
    %1764 = vmatpush.msra.mxu0 0.0
    %1765 = vmatpush.msra.mxu0 0.0
    %1766 = vmatpush.msra.mxu0 0.0
    %1767 = vmatpush.msra.mxu0 0.0
    %1768 = vmatpush.msra.mxu0 0.0
    %1769 = vmatpush.msra.mxu0 0.0
    %1770 = vmatpush.msra.mxu0 0.0
    %1771 = vmatpush.msra.mxu0 %v1464
    %1772 = vmatpush.msra.mxu0 %v1463
    %1773 = vmatpush.msra.mxu0 %v1462
    %1774 = vmatpush.msra.mxu0 %v1461
    %1775 = vmatmul.f32.gmra.mxu0 %v1757
    %v1776 = vpop.f32.mrf.mxu0
    %v1777 = vadd.f32 0.0, %v1776
    %1778 = vdwg.mxu0
    %v1780 = vrot.slane %v1777, 4
    %v1782 = vadd.f32 %v1421, %v1780
    %v1783 = vrot.slane %v1737, 4
    %1784 = vrot.lane.b32.xlu0 %v1783, 32
    %v1785 = vpop.permute.xlu0 %1784
    %v1786 = vsel %vm153, %v1785, 0
    %1788 = vmatpush.msra.mxu0 0.0
    %1789 = vmatpush.msra.mxu0 0.0
    %1790 = vmatpush.msra.mxu0 0.0
    %1791 = vmatpush.msra.mxu0 0.0
    %1792 = vmatpush.msra.mxu0 0.0
    %1793 = vmatpush.msra.mxu0 0.0
    %1794 = vmatpush.msra.mxu0 0.0
    %1795 = vmatpush.msra.mxu0 0.0
    %1796 = vmatpush.msra.mxu0 0.0
    %1797 = vmatpush.msra.mxu0 0.0
    %1798 = vmatpush.msra.mxu0 0.0
    %1799 = vmatpush.msra.mxu0 0.0
    %1800 = vmatpush.msra.mxu0 %v1468
    %1801 = vmatpush.msra.mxu0 %v1467
    %1802 = vmatpush.msra.mxu0 %v1466
    %1803 = vmatpush.msra.mxu0 %v1465
    %1804 = vmatmul.f32.gmra.mxu0 %v1786
    %v1805 = vpop.f32.mrf.mxu0
    %v1806 = vadd.f32 0.0, %v1805
    %1807 = vdwg.mxu0
    %v1809 = vrot.slane %v1806, 6
    %v1811 = vadd.f32 %v1459, %v1809
    %v1812 = vxor.u32 %v1782, 2147483648
    %v1813 = vmul.f32 %v1812, 1.442695
    %v1814 = vpow.pop %v1813
    %v1815 = vadd.f32 %v1814, 1.0
    %v1816 = vrcp.pop %v1815
    %v1817 = vmul.f32 %v1815, %v1816
    %v1818 = vsub.f32 1.0, %v1817
    %v1819 = vmul.f32 %v1816, %v1818
    %v1820 = vadd.f32 %v1816, %v1819
    %vm1821 = vweird.f32 %v1815
    %vm1822 = vweird.f32 %v1816
    %vm1823 = vmor %vm1821, %vm1822
    %v1824 = vsel %vm1823, %v1816, %v1820
    %v1825 = vand.u32 2147483647, %v1815
    %vm1826 = vcmp.eq.f32.partialorder %v1825, 8.507059e+37
    %v1827 = vand.u32 %v1815, 2147483648
    %v1828 = vor.u32 1.1754944e-38, %v1827
    %v1829 = vsel %vm1826, %v1828, %v1824
    %v1830 = vmul.f32 1.0, %v1829
    %v1831 = vtanh.pop %v1782
    %v1833 = vrot.slane %v1691, 6
    %v1835 = vmul.f32 %v1830, %v1833
    %1837 = vrot.lane.b32.xlu0 %v1831, 64
    %v1838 = vpop.permute.xlu0 %1837
    %v1840 = vmul.f32 %v1830, %v1838
    %1842 = vrot.lane.b32.xlu0 %v1840, 32
    %v1843 = vpop.permute.xlu0 %1842
    %v1845 = vadd.f32 %v1835, %v1843
    %v1846 = vtanh.pop %v1845
    %1848 = vrot.lane.b32.xlu0 %v1846, 64
    %v1849 = vpop.permute.xlu0 %1848
    %v1851 = vmul.f32 %v1830, %v1849
    %v1852 = vxor.u32 %v1811, 2147483648
    %v1853 = vmul.f32 %v1852, 1.442695
    %v1854 = vpow.pop %v1853
    %v1855 = vadd.f32 %v1854, 1.0
    %v1856 = vrcp.pop %v1855
    %v1857 = vmul.f32 %v1855, %v1856
    %v1858 = vsub.f32 1.0, %v1857
    %v1859 = vmul.f32 %v1856, %v1858
    %v1860 = vadd.f32 %v1856, %v1859
    %vm1861 = vweird.f32 %v1855
    %vm1862 = vweird.f32 %v1856
    %vm1863 = vmor %vm1861, %vm1862
    %v1864 = vsel %vm1863, %v1856, %v1860
    %v1865 = vand.u32 2147483647, %v1855
    %vm1866 = vcmp.eq.f32.partialorder %v1865, 8.507059e+37
    %v1867 = vand.u32 %v1855, 2147483648
    %v1868 = vor.u32 1.1754944e-38, %v1867
    %v1869 = vsel %vm1866, %v1868, %v1864
    %v1870 = vmul.f32 1.0, %v1869
    %v1871 = vtanh.pop %v1811
    %v1873 = vrot.slane %v1731, 2
    %v1875 = vmul.f32 %v1870, %v1873
    %1877 = vrot.lane.b32.xlu0 %v1871, 64
    %v1878 = vpop.permute.xlu0 %1877
    %v1880 = vmul.f32 %v1870, %v1878
    %1882 = vrot.lane.b32.xlu0 %v1880, 32
    %v1883 = vpop.permute.xlu0 %1882
    %v1885 = vadd.f32 %v1875, %v1883
    %v1886 = vtanh.pop %v1885
    %1888 = vrot.lane.b32.xlu0 %v1886, 64
    %v1889 = vpop.permute.xlu0 %1888
    %v1891 = vmul.f32 %v1870, %v1889
    %1893 = vrot.lane.b32.xlu0 %v1851, 32
    %v1894 = vpop.permute.xlu0 %1893
    %vm1896 = vcmask 258052
    %1897 = vst.msk [vmem:[#allocation4 - $0x2] sm:$0x10] %vm1896, %v1894
    %1899 = vrot.lane.b32.xlu0 %v1891, 64
    %v1900 = vpop.permute.xlu0 %1899
    %vm1902 = vcmask 518402
    %1903 = vst.msk [vmem:[#allocation4 + $0x3] sm:$0x4] %vm1902, %v1900
    %vm1904 = vcmask 259077
    %1905 = vst.msk [vmem:[#allocation4 + $0x5] sm:$0x20] %vm1904, %v1894
    %vm1906 = vcmask 519427
    %1907 = vst.msk [vmem:[#allocation4 + $0xa] sm:$0x8] %vm1906, %v1900
    %v1908 = vrot.slane %v1851, 4
    %1909 = vrot.lane.b32.xlu0 %v1908, 32
    %v1910 = vpop.permute.xlu0 %1909
    %v1911 = vsel %vm153, %v1910, 0
    %1913 = vmatpush.msra.mxu0 0.0
    %1914 = vmatpush.msra.mxu0 0.0
    %1915 = vmatpush.msra.mxu0 0.0
    %1916 = vmatpush.msra.mxu0 0.0
    %1917 = vmatpush.msra.mxu0 0.0
    %1918 = vmatpush.msra.mxu0 0.0
    %1919 = vmatpush.msra.mxu0 0.0
    %1920 = vmatpush.msra.mxu0 0.0
    %1921 = vmatpush.msra.mxu0 0.0
    %1922 = vmatpush.msra.mxu0 0.0
    %1923 = vmatpush.msra.mxu0 0.0
    %1924 = vmatpush.msra.mxu0 0.0
    %1925 = vmatpush.msra.mxu0 %v1464
    %1926 = vmatpush.msra.mxu0 %v1463
    %1927 = vmatpush.msra.mxu0 %v1462
    %1928 = vmatpush.msra.mxu0 %v1461
    %1929 = vmatmul.f32.gmra.mxu0 %v1911
    %v1930 = vpop.f32.mrf.mxu0
    %v1931 = vadd.f32 0.0, %v1930
    %1932 = vdwg.mxu0
    %v1934 = vrot.slane %v1931, 2
    %v1936 = vadd.f32 %v1421, %v1934
    %v1937 = vrot.slane %v1891, 2
    %1938 = vrot.lane.b32.xlu0 %v1937, 32
    %v1939 = vpop.permute.xlu0 %1938
    %v1940 = vsel %vm153, %v1939, 0
    %1942 = vmatpush.msra.mxu0 0.0
    %1943 = vmatpush.msra.mxu0 0.0
    %1944 = vmatpush.msra.mxu0 0.0
    %1945 = vmatpush.msra.mxu0 0.0
    %1946 = vmatpush.msra.mxu0 0.0
    %1947 = vmatpush.msra.mxu0 0.0
    %1948 = vmatpush.msra.mxu0 0.0
    %1949 = vmatpush.msra.mxu0 0.0
    %1950 = vmatpush.msra.mxu0 0.0
    %1951 = vmatpush.msra.mxu0 0.0
    %1952 = vmatpush.msra.mxu0 0.0
    %1953 = vmatpush.msra.mxu0 0.0
    %1954 = vmatpush.msra.mxu0 %v1468
    %1955 = vmatpush.msra.mxu0 %v1467
    %1956 = vmatpush.msra.mxu0 %v1466
    %1957 = vmatpush.msra.mxu0 %v1465
    %1958 = vmatmul.f32.gmra.mxu0 %v1940
    %v1959 = vpop.f32.mrf.mxu0
    %v1960 = vadd.f32 0.0, %v1959
    %1961 = vdwg.mxu0
    %v1962 = vadd.f32 %v1459, %v1960
    %v1963 = vxor.u32 %v1936, 2147483648
    %v1964 = vmul.f32 %v1963, 1.442695
    %v1965 = vpow.pop %v1964
    %v1966 = vadd.f32 %v1965, 1.0
    %v1967 = vrcp.pop %v1966
    %v1968 = vmul.f32 %v1966, %v1967
    %v1969 = vsub.f32 1.0, %v1968
    %v1970 = vmul.f32 %v1967, %v1969
    %v1971 = vadd.f32 %v1967, %v1970
    %vm1972 = vweird.f32 %v1966
    %vm1973 = vweird.f32 %v1967
    %vm1974 = vmor %vm1972, %vm1973
    %v1975 = vsel %vm1974, %v1967, %v1971
    %v1976 = vand.u32 2147483647, %v1966
    %vm1977 = vcmp.eq.f32.partialorder %v1976, 8.507059e+37
    %v1978 = vand.u32 %v1966, 2147483648
    %v1979 = vor.u32 1.1754944e-38, %v1978
    %v1980 = vsel %vm1977, %v1979, %v1975
    %v1981 = vmul.f32 1.0, %v1980
    %v1982 = vtanh.pop %v1936
    %v1984 = vrot.slane %v1845, 6
    %v1986 = vmul.f32 %v1981, %v1984
    %1988 = vrot.lane.b32.xlu0 %v1982, 64
    %v1989 = vpop.permute.xlu0 %1988
    %v1991 = vmul.f32 %v1981, %v1989
    %1993 = vrot.lane.b32.xlu0 %v1991, 32
    %v1994 = vpop.permute.xlu0 %1993
    %v1996 = vadd.f32 %v1986, %v1994
    %v1997 = vtanh.pop %v1996
    %1999 = vrot.lane.b32.xlu0 %v1997, 64
    %v2000 = vpop.permute.xlu0 %1999
    %v2002 = vmul.f32 %v1981, %v2000
    %v2003 = vxor.u32 %v1962, 2147483648
    %v2004 = vmul.f32 %v2003, 1.442695
    %v2005 = vpow.pop %v2004
    %v2006 = vadd.f32 %v2005, 1.0
    %v2007 = vrcp.pop %v2006
    %v2008 = vmul.f32 %v2006, %v2007
    %v2009 = vsub.f32 1.0, %v2008
    %v2010 = vmul.f32 %v2007, %v2009
    %v2011 = vadd.f32 %v2007, %v2010
    %vm2012 = vweird.f32 %v2006
    %vm2013 = vweird.f32 %v2007
    %vm2014 = vmor %vm2012, %vm2013
    %v2015 = vsel %vm2014, %v2007, %v2011
    %v2016 = vand.u32 2147483647, %v2006
    %vm2017 = vcmp.eq.f32.partialorder %v2016, 8.507059e+37
    %v2018 = vand.u32 %v2006, 2147483648
    %v2019 = vor.u32 1.1754944e-38, %v2018
    %v2020 = vsel %vm2017, %v2019, %v2015
    %v2021 = vmul.f32 1.0, %v2020
    %v2022 = vtanh.pop %v1962
    %v2024 = vrot.slane %v1885, 2
    %v2026 = vmul.f32 %v2021, %v2024
    %2028 = vrot.lane.b32.xlu0 %v2022, 64
    %v2029 = vpop.permute.xlu0 %2028
    %v2031 = vmul.f32 %v2021, %v2029
    %2033 = vrot.lane.b32.xlu0 %v2031, 32
    %v2034 = vpop.permute.xlu0 %2033
    %v2036 = vadd.f32 %v2026, %v2034
    %v2037 = vtanh.pop %v2036
    %2039 = vrot.lane.b32.xlu0 %v2037, 64
    %v2040 = vpop.permute.xlu0 %2039
    %v2042 = vmul.f32 %v2021, %v2040
    %2044 = vrot.lane.b32.xlu0 %v2002, 32
    %v2045 = vpop.permute.xlu0 %2044
    %vm2047 = vcmask 260102
    %2048 = vst.msk [vmem:[#allocation4 - $0x3] sm:$0x40] %vm2047, %v2045
    %2050 = vrot.lane.b32.xlu0 %v2042, 64
    %v2051 = vpop.permute.xlu0 %2050
    %vm2053 = vcmask 516352
    %2054 = vst.msk [vmem:[#allocation4 + $0x4] sm:$0x1] %vm2053, %v2051
    %vm2055 = vcmask 261127
    %2056 = vst.msk [vmem:[#allocation4 + $0x4] sm:$0x80] %vm2055, %v2045
    %vm2057 = vcmask 517377
    %2058 = vst.msk [vmem:[#allocation4 + $0xb] sm:$0x2] %vm2057, %v2051
    %v2059 = vrot.slane %v2002, 6
    %2060 = vrot.lane.b32.xlu0 %v2059, 32
    %v2061 = vpop.permute.xlu0 %2060
    %v2062 = vsel %vm153, %v2061, 0
    %2064 = vmatpush.msra.mxu0 0.0
    %2065 = vmatpush.msra.mxu0 0.0
    %2066 = vmatpush.msra.mxu0 0.0
    %2067 = vmatpush.msra.mxu0 0.0
    %2068 = vmatpush.msra.mxu0 0.0
    %2069 = vmatpush.msra.mxu0 0.0
    %2070 = vmatpush.msra.mxu0 0.0
    %2071 = vmatpush.msra.mxu0 0.0
    %2072 = vmatpush.msra.mxu0 0.0
    %2073 = vmatpush.msra.mxu0 0.0
    %2074 = vmatpush.msra.mxu0 0.0
    %2075 = vmatpush.msra.mxu0 0.0
    %2076 = vmatpush.msra.mxu0 %v1464
    %2077 = vmatpush.msra.mxu0 %v1463
    %2078 = vmatpush.msra.mxu0 %v1462
    %2079 = vmatpush.msra.mxu0 %v1461
    %2080 = vmatmul.f32.gmra.mxu0 %v2062
    %v2081 = vpop.f32.mrf.mxu0
    %v2082 = vadd.f32 0.0, %v2081
    %2083 = vdwg.mxu0
    %v2084 = vadd.f32 %v1424, %v2082
    %2085 = vrot.lane.b32.xlu0 %v2042, 32
    %v2086 = vpop.permute.xlu0 %2085
    %v2087 = vsel %vm153, %v2086, 0
    %2089 = vmatpush.msra.mxu0 0.0
    %2090 = vmatpush.msra.mxu0 0.0
    %2091 = vmatpush.msra.mxu0 0.0
    %2092 = vmatpush.msra.mxu0 0.0
    %2093 = vmatpush.msra.mxu0 0.0
    %2094 = vmatpush.msra.mxu0 0.0
    %2095 = vmatpush.msra.mxu0 0.0
    %2096 = vmatpush.msra.mxu0 0.0
    %2097 = vmatpush.msra.mxu0 0.0
    %2098 = vmatpush.msra.mxu0 0.0
    %2099 = vmatpush.msra.mxu0 0.0
    %2100 = vmatpush.msra.mxu0 0.0
    %2101 = vmatpush.msra.mxu0 %v1468
    %2102 = vmatpush.msra.mxu0 %v1467
    %2103 = vmatpush.msra.mxu0 %v1466
    %2104 = vmatpush.msra.mxu0 %v1465
    %2105 = vmatmul.f32.gmra.mxu0 %v2087
    %v2106 = vpop.f32.mrf.mxu0
    %v2107 = vadd.f32 0.0, %v2106
    %2108 = vdwg.mxu0
    %v2110 = vrot.slane %v2107, 2
    %v2112 = vadd.f32 %v1456, %v2110
    %v2113 = vxor.u32 %v2084, 2147483648
    %v2114 = vmul.f32 %v2113, 1.442695
    %v2115 = vpow.pop %v2114
    %v2116 = vadd.f32 %v2115, 1.0
    %v2117 = vrcp.pop %v2116
    %v2118 = vmul.f32 %v2116, %v2117
    %v2119 = vsub.f32 1.0, %v2118
    %v2120 = vmul.f32 %v2117, %v2119
    %v2121 = vadd.f32 %v2117, %v2120
    %vm2122 = vweird.f32 %v2116
    %vm2123 = vweird.f32 %v2117
    %vm2124 = vmor %vm2122, %vm2123
    %v2125 = vsel %vm2124, %v2117, %v2121
    %v2126 = vand.u32 2147483647, %v2116
    %vm2127 = vcmp.eq.f32.partialorder %v2126, 8.507059e+37
    %v2128 = vand.u32 %v2116, 2147483648
    %v2129 = vor.u32 1.1754944e-38, %v2128
    %v2130 = vsel %vm2127, %v2129, %v2125
    %v2131 = vmul.f32 1.0, %v2130
    %v2132 = vtanh.pop %v2084
    %v2134 = vrot.slane %v1996, 6
    %v2136 = vmul.f32 %v2131, %v2134
    %2138 = vrot.lane.b32.xlu0 %v2132, 64
    %v2139 = vpop.permute.xlu0 %2138
    %v2141 = vmul.f32 %v2131, %v2139
    %2143 = vrot.lane.b32.xlu0 %v2141, 32
    %v2144 = vpop.permute.xlu0 %2143
    %v2146 = vadd.f32 %v2136, %v2144
    %v2147 = vtanh.pop %v2146
    %2149 = vrot.lane.b32.xlu0 %v2147, 64
    %v2150 = vpop.permute.xlu0 %2149
    %v2152 = vmul.f32 %v2131, %v2150
    %v2153 = vxor.u32 %v2112, 2147483648
    %v2154 = vmul.f32 %v2153, 1.442695
    %v2155 = vpow.pop %v2154
    %v2156 = vadd.f32 %v2155, 1.0
    %v2157 = vrcp.pop %v2156
    %v2158 = vmul.f32 %v2156, %v2157
    %v2159 = vsub.f32 1.0, %v2158
    %v2160 = vmul.f32 %v2157, %v2159
    %v2161 = vadd.f32 %v2157, %v2160
    %vm2162 = vweird.f32 %v2156
    %vm2163 = vweird.f32 %v2157
    %vm2164 = vmor %vm2162, %vm2163
    %v2165 = vsel %vm2164, %v2157, %v2161
    %v2166 = vand.u32 2147483647, %v2156
    %vm2167 = vcmp.eq.f32.partialorder %v2166, 8.507059e+37
    %v2168 = vand.u32 %v2156, 2147483648
    %v2169 = vor.u32 1.1754944e-38, %v2168
    %v2170 = vsel %vm2167, %v2169, %v2165
    %v2171 = vmul.f32 1.0, %v2170
    %v2172 = vtanh.pop %v2112
    %v2174 = vrot.slane %v2036, 2
    %v2176 = vmul.f32 %v2171, %v2174
    %2178 = vrot.lane.b32.xlu0 %v2172, 64
    %v2179 = vpop.permute.xlu0 %2178
    %v2181 = vmul.f32 %v2171, %v2179
    %2183 = vrot.lane.b32.xlu0 %v2181, 32
    %v2184 = vpop.permute.xlu0 %2183
    %v2186 = vadd.f32 %v2176, %v2184
    %v2187 = vtanh.pop %v2186
    %2189 = vrot.lane.b32.xlu0 %v2187, 64
    %v2190 = vpop.permute.xlu0 %2189
    %v2192 = vmul.f32 %v2171, %v2190
    %2194 = vrot.lane.b32.xlu0 %v2152, 32
    %v2195 = vpop.permute.xlu0 %2194
    %2197 = vst.msk [vmem:[#allocation4 + $0x4] sm:$0x1] %vm81, %v2195
    %2199 = vrot.lane.b32.xlu0 %v2192, 64
    %v2200 = vpop.permute.xlu0 %2199
    %2202 = vst.msk [vmem:[#allocation4 - $0x3] sm:$0x40] %vm1597, %v2200
    %2203 = vst.msk [vmem:[#allocation4 + $0xb] sm:$0x2] %vm1599, %v2195
    %2204 = vst.msk [vmem:[#allocation4 + $0x4] sm:$0x80] %vm1601, %v2200
    %v2205 = vsel %vm153, %v2195, 0
    %2207 = vmatpush.msra.mxu0 0.0
    %2208 = vmatpush.msra.mxu0 0.0
    %2209 = vmatpush.msra.mxu0 0.0
    %2210 = vmatpush.msra.mxu0 0.0
    %2211 = vmatpush.msra.mxu0 0.0
    %2212 = vmatpush.msra.mxu0 0.0
    %2213 = vmatpush.msra.mxu0 0.0
    %2214 = vmatpush.msra.mxu0 0.0
    %2215 = vmatpush.msra.mxu0 0.0
    %2216 = vmatpush.msra.mxu0 0.0
    %2217 = vmatpush.msra.mxu0 0.0
    %2218 = vmatpush.msra.mxu0 0.0
    %2219 = vmatpush.msra.mxu0 %v1464
    %2220 = vmatpush.msra.mxu0 %v1463
    %2221 = vmatpush.msra.mxu0 %v1462
    %2222 = vmatpush.msra.mxu0 %v1461
    %2223 = vmatmul.f32.gmra.mxu0 %v2205
    %v2224 = vpop.f32.mrf.mxu0
    %v2225 = vadd.f32 0.0, %v2224
    %2226 = vdwg.mxu0
    %v2228 = vrot.slane %v2225, 6
    %v2230 = vadd.f32 %v1424, %v2228
    %v2231 = vrot.slane %v2192, 6
    %2232 = vrot.lane.b32.xlu0 %v2231, 32
    %v2233 = vpop.permute.xlu0 %2232
    %v2234 = vsel %vm153, %v2233, 0
    %2236 = vmatpush.msra.mxu0 0.0
    %2237 = vmatpush.msra.mxu0 0.0
    %2238 = vmatpush.msra.mxu0 0.0
    %2239 = vmatpush.msra.mxu0 0.0
    %2240 = vmatpush.msra.mxu0 0.0
    %2241 = vmatpush.msra.mxu0 0.0
    %2242 = vmatpush.msra.mxu0 0.0
    %2243 = vmatpush.msra.mxu0 0.0
    %2244 = vmatpush.msra.mxu0 0.0
    %2245 = vmatpush.msra.mxu0 0.0
    %2246 = vmatpush.msra.mxu0 0.0
    %2247 = vmatpush.msra.mxu0 0.0
    %2248 = vmatpush.msra.mxu0 %v1468
    %2249 = vmatpush.msra.mxu0 %v1467
    %2250 = vmatpush.msra.mxu0 %v1466
    %2251 = vmatpush.msra.mxu0 %v1465
    %2252 = vmatmul.f32.gmra.mxu0 %v2234
    %v2253 = vpop.f32.mrf.mxu0
    %v2254 = vadd.f32 0.0, %v2253
    %2255 = vdwg.mxu0
    %v2257 = vrot.slane %v2254, 4
    %v2259 = vadd.f32 %v1456, %v2257
    %v2260 = vxor.u32 %v2230, 2147483648
    %v2261 = vmul.f32 %v2260, 1.442695
    %v2262 = vpow.pop %v2261
    %v2263 = vadd.f32 %v2262, 1.0
    %v2264 = vrcp.pop %v2263
    %v2265 = vmul.f32 %v2263, %v2264
    %v2266 = vsub.f32 1.0, %v2265
    %v2267 = vmul.f32 %v2264, %v2266
    %v2268 = vadd.f32 %v2264, %v2267
    %vm2269 = vweird.f32 %v2263
    %vm2270 = vweird.f32 %v2264
    %vm2271 = vmor %vm2269, %vm2270
    %v2272 = vsel %vm2271, %v2264, %v2268
    %v2273 = vand.u32 2147483647, %v2263
    %vm2274 = vcmp.eq.f32.partialorder %v2273, 8.507059e+37
    %v2275 = vand.u32 %v2263, 2147483648
    %v2276 = vor.u32 1.1754944e-38, %v2275
    %v2277 = vsel %vm2274, %v2276, %v2272
    %v2278 = vmul.f32 1.0, %v2277
    %v2279 = vtanh.pop %v2230
    %v2281 = vrot.slane %v2146, 6
    %v2283 = vmul.f32 %v2278, %v2281
    %2285 = vrot.lane.b32.xlu0 %v2279, 64
    %v2286 = vpop.permute.xlu0 %2285
    %v2288 = vmul.f32 %v2278, %v2286
    %2290 = vrot.lane.b32.xlu0 %v2288, 32
    %v2291 = vpop.permute.xlu0 %2290
    %v2293 = vadd.f32 %v2283, %v2291
    %v2294 = vtanh.pop %v2293
    %2296 = vrot.lane.b32.xlu0 %v2294, 64
    %v2297 = vpop.permute.xlu0 %2296
    %v2299 = vmul.f32 %v2278, %v2297
    %v2300 = vxor.u32 %v2259, 2147483648
    %v2301 = vmul.f32 %v2300, 1.442695
    %v2302 = vpow.pop %v2301
    %v2303 = vadd.f32 %v2302, 1.0
    %v2304 = vrcp.pop %v2303
    %v2305 = vmul.f32 %v2303, %v2304
    %v2306 = vsub.f32 1.0, %v2305
    %v2307 = vmul.f32 %v2304, %v2306
    %v2308 = vadd.f32 %v2304, %v2307
    %vm2309 = vweird.f32 %v2303
    %vm2310 = vweird.f32 %v2304
    %vm2311 = vmor %vm2309, %vm2310
    %v2312 = vsel %vm2311, %v2304, %v2308
    %v2313 = vand.u32 2147483647, %v2303
    %vm2314 = vcmp.eq.f32.partialorder %v2313, 8.507059e+37
    %v2315 = vand.u32 %v2303, 2147483648
    %v2316 = vor.u32 1.1754944e-38, %v2315
    %v2317 = vsel %vm2314, %v2316, %v2312
    %v2318 = vmul.f32 1.0, %v2317
    %v2319 = vtanh.pop %v2259
    %v2321 = vrot.slane %v2186, 2
    %v2323 = vmul.f32 %v2318, %v2321
    %2325 = vrot.lane.b32.xlu0 %v2319, 64
    %v2326 = vpop.permute.xlu0 %2325
    %v2328 = vmul.f32 %v2318, %v2326
    %2330 = vrot.lane.b32.xlu0 %v2328, 32
    %v2331 = vpop.permute.xlu0 %2330
    %v2333 = vadd.f32 %v2323, %v2331
    %v2334 = vtanh.pop %v2333
    %2336 = vrot.lane.b32.xlu0 %v2334, 64
    %v2337 = vpop.permute.xlu0 %2336
    %v2339 = vmul.f32 %v2318, %v2337
    %2341 = vrot.lane.b32.xlu0 %v2299, 32
    %v2342 = vpop.permute.xlu0 %2341
    %2344 = vst.msk [vmem:[#allocation4 + $0x3] sm:$0x4] %vm1742, %v2342
    %2346 = vrot.lane.b32.xlu0 %v2339, 64
    %v2347 = vpop.permute.xlu0 %2346
    %2349 = vst.msk [vmem:[#allocation4 - $0x2] sm:$0x10] %vm1748, %v2347
    %2350 = vst.msk [vmem:[#allocation4 + $0xa] sm:$0x8] %vm1750, %v2342
    %2351 = vst.msk [vmem:[#allocation4 + $0x5] sm:$0x20] %vm1752, %v2347
    %v2352 = vrot.slane %v2299, 2
    %2353 = vrot.lane.b32.xlu0 %v2352, 32
    %v2354 = vpop.permute.xlu0 %2353
    %v2355 = vsel %vm153, %v2354, 0
    %2357 = vmatpush.msra.mxu0 0.0
    %2358 = vmatpush.msra.mxu0 0.0
    %2359 = vmatpush.msra.mxu0 0.0
    %2360 = vmatpush.msra.mxu0 0.0
    %2361 = vmatpush.msra.mxu0 0.0
    %2362 = vmatpush.msra.mxu0 0.0
    %2363 = vmatpush.msra.mxu0 0.0
    %2364 = vmatpush.msra.mxu0 0.0
    %2365 = vmatpush.msra.mxu0 0.0
    %2366 = vmatpush.msra.mxu0 0.0
    %2367 = vmatpush.msra.mxu0 0.0
    %2368 = vmatpush.msra.mxu0 0.0
    %2369 = vmatpush.msra.mxu0 %v1464
    %2370 = vmatpush.msra.mxu0 %v1463
    %2371 = vmatpush.msra.mxu0 %v1462
    %2372 = vmatpush.msra.mxu0 %v1461
    %2373 = vmatmul.f32.gmra.mxu0 %v2355
    %v2374 = vpop.f32.mrf.mxu0
    %v2375 = vadd.f32 0.0, %v2374
    %2376 = vdwg.mxu0
    %v2378 = vrot.slane %v2375, 4
    %v2380 = vadd.f32 %v1424, %v2378
    %v2381 = vrot.slane %v2339, 4
    %2382 = vrot.lane.b32.xlu0 %v2381, 32
    %v2383 = vpop.permute.xlu0 %2382
    %v2384 = vsel %vm153, %v2383, 0
    %2386 = vmatpush.msra.mxu0 0.0
    %2387 = vmatpush.msra.mxu0 0.0
    %2388 = vmatpush.msra.mxu0 0.0
    %2389 = vmatpush.msra.mxu0 0.0
    %2390 = vmatpush.msra.mxu0 0.0
    %2391 = vmatpush.msra.mxu0 0.0
    %2392 = vmatpush.msra.mxu0 0.0
    %2393 = vmatpush.msra.mxu0 0.0
    %2394 = vmatpush.msra.mxu0 0.0
    %2395 = vmatpush.msra.mxu0 0.0
    %2396 = vmatpush.msra.mxu0 0.0
    %2397 = vmatpush.msra.mxu0 0.0
    %2398 = vmatpush.msra.mxu0 %v1468
    %2399 = vmatpush.msra.mxu0 %v1467
    %2400 = vmatpush.msra.mxu0 %v1466
    %2401 = vmatpush.msra.mxu0 %v1465
    %2402 = vmatmul.f32.gmra.mxu0 %v2384
    %v2403 = vpop.f32.mrf.mxu0
    %v2404 = vadd.f32 0.0, %v2403
    %2405 = vdwg.mxu0
    %v2407 = vrot.slane %v2404, 6
    %v2409 = vadd.f32 %v1456, %v2407
    %v2410 = vxor.u32 %v2380, 2147483648
    %v2411 = vmul.f32 %v2410, 1.442695
    %v2412 = vpow.pop %v2411
    %v2413 = vadd.f32 %v2412, 1.0
    %v2414 = vrcp.pop %v2413
    %v2415 = vmul.f32 %v2413, %v2414
    %v2416 = vsub.f32 1.0, %v2415
    %v2417 = vmul.f32 %v2414, %v2416
    %v2418 = vadd.f32 %v2414, %v2417
    %vm2419 = vweird.f32 %v2413
    %vm2420 = vweird.f32 %v2414
    %vm2421 = vmor %vm2419, %vm2420
    %v2422 = vsel %vm2421, %v2414, %v2418
    %v2423 = vand.u32 2147483647, %v2413
    %vm2424 = vcmp.eq.f32.partialorder %v2423, 8.507059e+37
    %v2425 = vand.u32 %v2413, 2147483648
    %v2426 = vor.u32 1.1754944e-38, %v2425
    %v2427 = vsel %vm2424, %v2426, %v2422
    %v2428 = vmul.f32 1.0, %v2427
    %v2429 = vtanh.pop %v2380
    %v2431 = vrot.slane %v2293, 6
    %v2433 = vmul.f32 %v2428, %v2431
    %2435 = vrot.lane.b32.xlu0 %v2429, 64
    %v2436 = vpop.permute.xlu0 %2435
    %v2438 = vmul.f32 %v2428, %v2436
    %2440 = vrot.lane.b32.xlu0 %v2438, 32
    %v2441 = vpop.permute.xlu0 %2440
    %v2443 = vadd.f32 %v2433, %v2441
    %v2444 = vtanh.pop %v2443
    %2446 = vrot.lane.b32.xlu0 %v2444, 64
    %v2447 = vpop.permute.xlu0 %2446
    %v2449 = vmul.f32 %v2428, %v2447
    %v2450 = vxor.u32 %v2409, 2147483648
    %v2451 = vmul.f32 %v2450, 1.442695
    %v2452 = vpow.pop %v2451
    %v2453 = vadd.f32 %v2452, 1.0
    %v2454 = vrcp.pop %v2453
    %v2455 = vmul.f32 %v2453, %v2454
    %v2456 = vsub.f32 1.0, %v2455
    %v2457 = vmul.f32 %v2454, %v2456
    %v2458 = vadd.f32 %v2454, %v2457
    %vm2459 = vweird.f32 %v2453
    %vm2460 = vweird.f32 %v2454
    %vm2461 = vmor %vm2459, %vm2460
    %v2462 = vsel %vm2461, %v2454, %v2458
    %v2463 = vand.u32 2147483647, %v2453
    %vm2464 = vcmp.eq.f32.partialorder %v2463, 8.507059e+37
    %v2465 = vand.u32 %v2453, 2147483648
    %v2466 = vor.u32 1.1754944e-38, %v2465
    %v2467 = vsel %vm2464, %v2466, %v2462
    %v2468 = vmul.f32 1.0, %v2467
    %v2469 = vtanh.pop %v2409
    %v2471 = vrot.slane %v2333, 2
    %v2473 = vmul.f32 %v2468, %v2471
    %2475 = vrot.lane.b32.xlu0 %v2469, 64
    %v2476 = vpop.permute.xlu0 %2475
    %v2478 = vmul.f32 %v2468, %v2476
    %2480 = vrot.lane.b32.xlu0 %v2478, 32
    %v2481 = vpop.permute.xlu0 %2480
    %v2483 = vadd.f32 %v2473, %v2481
    %v2484 = vtanh.pop %v2483
    %2486 = vrot.lane.b32.xlu0 %v2484, 64
    %v2487 = vpop.permute.xlu0 %2486
    %v2489 = vmul.f32 %v2468, %v2487
    %2491 = vrot.lane.b32.xlu0 %v2449, 32
    %v2492 = vpop.permute.xlu0 %2491
    %2494 = vst.msk [vmem:[#allocation4 + $0x2] sm:$0x10] %vm1896, %v2492
    %2496 = vrot.lane.b32.xlu0 %v2489, 64
    %v2497 = vpop.permute.xlu0 %2496
    %2499 = vst.msk [vmem:[#allocation4 - $0x1] sm:$0x4] %vm1902, %v2497
    %2500 = vst.msk [vmem:[#allocation4 + $0x9] sm:$0x20] %vm1904, %v2492
    %2501 = vst.msk [vmem:[#allocation4 + $0x6] sm:$0x8] %vm1906, %v2497
    %v2502 = vrot.slane %v2449, 4
    %2503 = vrot.lane.b32.xlu0 %v2502, 32
    %v2504 = vpop.permute.xlu0 %2503
    %v2505 = vsel %vm153, %v2504, 0
    %2507 = vmatpush.msra.mxu0 0.0
    %2508 = vmatpush.msra.mxu0 0.0
    %2509 = vmatpush.msra.mxu0 0.0
    %2510 = vmatpush.msra.mxu0 0.0
    %2511 = vmatpush.msra.mxu0 0.0
    %2512 = vmatpush.msra.mxu0 0.0
    %2513 = vmatpush.msra.mxu0 0.0
    %2514 = vmatpush.msra.mxu0 0.0
    %2515 = vmatpush.msra.mxu0 0.0
    %2516 = vmatpush.msra.mxu0 0.0
    %2517 = vmatpush.msra.mxu0 0.0
    %2518 = vmatpush.msra.mxu0 0.0
    %2519 = vmatpush.msra.mxu0 %v1464
    %2520 = vmatpush.msra.mxu0 %v1463
    %2521 = vmatpush.msra.mxu0 %v1462
    %2522 = vmatpush.msra.mxu0 %v1461
    %2523 = vmatmul.f32.gmra.mxu0 %v2505
    %v2524 = vpop.f32.mrf.mxu0
    %v2525 = vadd.f32 0.0, %v2524
    %2526 = vdwg.mxu0
    %v2528 = vrot.slane %v2525, 2
    %v2530 = vadd.f32 %v1424, %v2528
    %v2531 = vrot.slane %v2489, 2
    %2532 = vrot.lane.b32.xlu0 %v2531, 32
    %v2533 = vpop.permute.xlu0 %2532
    %v2534 = vsel %vm153, %v2533, 0
    %2536 = vmatpush.msra.mxu0 0.0
    %2537 = vmatpush.msra.mxu0 0.0
    %2538 = vmatpush.msra.mxu0 0.0
    %2539 = vmatpush.msra.mxu0 0.0
    %2540 = vmatpush.msra.mxu0 0.0
    %2541 = vmatpush.msra.mxu0 0.0
    %2542 = vmatpush.msra.mxu0 0.0
    %2543 = vmatpush.msra.mxu0 0.0
    %2544 = vmatpush.msra.mxu0 0.0
    %2545 = vmatpush.msra.mxu0 0.0
    %2546 = vmatpush.msra.mxu0 0.0
    %2547 = vmatpush.msra.mxu0 0.0
    %2548 = vmatpush.msra.mxu0 %v1468
    %2549 = vmatpush.msra.mxu0 %v1467
    %2550 = vmatpush.msra.mxu0 %v1466
    %2551 = vmatpush.msra.mxu0 %v1465
    %2552 = vmatmul.f32.gmra.mxu0 %v2534
    %v2553 = vpop.f32.mrf.mxu0
    %v2554 = vadd.f32 0.0, %v2553
    %2555 = vdwg.mxu0
    %v2556 = vadd.f32 %v1456, %v2554
    %v2557 = vxor.u32 %v2530, 2147483648
    %v2558 = vmul.f32 %v2557, 1.442695
    %v2559 = vpow.pop %v2558
    %v2560 = vadd.f32 %v2559, 1.0
    %v2561 = vrcp.pop %v2560
    %v2562 = vmul.f32 %v2560, %v2561
    %v2563 = vsub.f32 1.0, %v2562
    %v2564 = vmul.f32 %v2561, %v2563
    %v2565 = vadd.f32 %v2561, %v2564
    %vm2566 = vweird.f32 %v2560
    %vm2567 = vweird.f32 %v2561
    %vm2568 = vmor %vm2566, %vm2567
    %v2569 = vsel %vm2568, %v2561, %v2565
    %v2570 = vand.u32 2147483647, %v2560
    %vm2571 = vcmp.eq.f32.partialorder %v2570, 8.507059e+37
    %v2572 = vand.u32 %v2560, 2147483648
    %v2573 = vor.u32 1.1754944e-38, %v2572
    %v2574 = vsel %vm2571, %v2573, %v2569
    %v2575 = vmul.f32 1.0, %v2574
    %v2576 = vtanh.pop %v2530
    %v2578 = vrot.slane %v2443, 6
    %v2580 = vmul.f32 %v2575, %v2578
    %2582 = vrot.lane.b32.xlu0 %v2576, 64
    %v2583 = vpop.permute.xlu0 %2582
    %v2585 = vmul.f32 %v2575, %v2583
    %2587 = vrot.lane.b32.xlu0 %v2585, 32
    %v2588 = vpop.permute.xlu0 %2587
    %v2590 = vadd.f32 %v2580, %v2588
    %v2591 = vtanh.pop %v2590
    %2593 = vrot.lane.b32.xlu0 %v2591, 64
    %v2594 = vpop.permute.xlu0 %2593
    %v2596 = vmul.f32 %v2575, %v2594
    %v2597 = vxor.u32 %v2556, 2147483648
    %v2598 = vmul.f32 %v2597, 1.442695
    %v2599 = vpow.pop %v2598
    %v2600 = vadd.f32 %v2599, 1.0
    %v2601 = vrcp.pop %v2600
    %v2602 = vmul.f32 %v2600, %v2601
    %v2603 = vsub.f32 1.0, %v2602
    %v2604 = vmul.f32 %v2601, %v2603
    %v2605 = vadd.f32 %v2601, %v2604
    %vm2606 = vweird.f32 %v2600
    %vm2607 = vweird.f32 %v2601
    %vm2608 = vmor %vm2606, %vm2607
    %v2609 = vsel %vm2608, %v2601, %v2605
    %v2610 = vand.u32 2147483647, %v2600
    %vm2611 = vcmp.eq.f32.partialorder %v2610, 8.507059e+37
    %v2612 = vand.u32 %v2600, 2147483648
    %v2613 = vor.u32 1.1754944e-38, %v2612
    %v2614 = vsel %vm2611, %v2613, %v2609
    %v2615 = vmul.f32 1.0, %v2614
    %v2616 = vtanh.pop %v2556
    %v2618 = vrot.slane %v2483, 2
    %v2620 = vmul.f32 %v2615, %v2618
    %2622 = vrot.lane.b32.xlu0 %v2616, 64
    %v2623 = vpop.permute.xlu0 %2622
    %v2625 = vmul.f32 %v2615, %v2623
    %2627 = vrot.lane.b32.xlu0 %v2625, 32
    %v2628 = vpop.permute.xlu0 %2627
    %v2630 = vadd.f32 %v2620, %v2628
    %v2631 = vtanh.pop %v2630
    %2633 = vrot.lane.b32.xlu0 %v2631, 64
    %v2634 = vpop.permute.xlu0 %2633
    %v2636 = vmul.f32 %v2615, %v2634
    %2638 = vrot.lane.b32.xlu0 %v2596, 32
    %v2639 = vpop.permute.xlu0 %2638
    %2641 = vst.msk [vmem:[#allocation4 + $0x1] sm:$0x40] %vm2047, %v2639
    %2643 = vrot.lane.b32.xlu0 %v2636, 64
    %v2644 = vpop.permute.xlu0 %2643
    %2646 = vst.msk [vmem:[#allocation4] sm:$0x1] %vm2053, %v2644
    %2647 = vst.msk [vmem:[#allocation4 + $0x8] sm:$0x80] %vm2055, %v2639
    %2648 = vst.msk [vmem:[#allocation4 + $0x7] sm:$0x2] %vm2057, %v2644
    %v2649 = vld [vmem:[#allocation4] sm:$0xff]
    %v2650 = vld [vmem:[#allocation4 + $0x8] sm:$0xff]
    %v2651 = vld [vmem:[%s15] sm:$0xff]
    %v2652 = vld [vmem:[%s15 + $0x8] sm:$0xff]
    %v2653 = vld [vmem:[%s15 + $0x10] sm:$0xff]
    %v2654 = vld [vmem:[%s15 + $0x18] sm:$0xff]
    %v2655 = vld [vmem:[%s15 + $0x20] sm:$0xff]
    %v2656 = vld [vmem:[%s15 + $0x28] sm:$0xff]
    %v2657 = vld [vmem:[%s15 + $0x30] sm:$0xff]
    %v2658 = vld [vmem:[%s15 + $0x38] sm:$0xff]
    %v2660 = vsel %vm1396, %v2649, 0
    %v2663 = vsel %vm1396, %v2650, 0
    %2665 = vmatpush.msra.mxu0 0.0
    %2666 = vmatpush.msra.mxu0 0.0
    %2667 = vmatpush.msra.mxu0 0.0
    %2668 = vmatpush.msra.mxu0 0.0
    %2669 = vmatpush.msra.mxu0 0.0
    %2670 = vmatpush.msra.mxu0 0.0
    %2671 = vmatpush.msra.mxu0 0.0
    %2672 = vmatpush.msra.mxu0 0.0
    %2673 = vmatpush.msra.mxu0 %v2658
    %2674 = vmatpush.msra.mxu0 %v2657
    %2675 = vmatpush.msra.mxu0 %v2656
    %2676 = vmatpush.msra.mxu0 %v2655
    %2677 = vmatpush.msra.mxu0 %v2654
    %2678 = vmatpush.msra.mxu0 %v2653
    %2679 = vmatpush.msra.mxu0 %v2652
    %2680 = vmatpush.msra.mxu0 %v2651
    %2681 = vmatmul.f32.gmra.mxu0 %v2660
    %v2682 = vpop.f32.mrf.mxu0
    %v2683 = vadd.f32 0.0, %v2682
    %2684 = vmatmul.f32.gmra.mxu0 %v2663
    %v2685 = vpop.f32.mrf.mxu0
    %v2686 = vadd.f32 0.0, %v2685
    %2687 = vdwg.mxu0
    %v2688 = vtanh.pop %v2683
    %v2689 = vtanh.pop %v2686
    %v2690 = vld [vmem:[%s16] sm:$0xff]
    %v2691 = vld [vmem:[%s16 + $0x8] sm:$0xff]
    %vm2692 = vcmask 130048
    %v2694 = vsel %vm2692, %v2688, 0
    %v2697 = vsel %vm2692, %v2689, 0
    %2699 = vmatpush.msra.mxu0 0.0
    %2700 = vmatpush.msra.mxu0 0.0
    %2701 = vmatpush.msra.mxu0 0.0
    %2702 = vmatpush.msra.mxu0 0.0
    %2703 = vmatpush.msra.mxu0 0.0
    %2704 = vmatpush.msra.mxu0 0.0
    %2705 = vmatpush.msra.mxu0 0.0
    %2706 = vmatpush.msra.mxu0 0.0
    %2707 = vmatpush.msra.mxu0 0.0
    %2708 = vmatpush.msra.mxu0 0.0
    %2709 = vmatpush.msra.mxu0 0.0
    %2710 = vmatpush.msra.mxu0 0.0
    %2711 = vmatpush.msra.mxu0 0.0
    %2712 = vmatpush.msra.mxu0 0.0
    %2713 = vmatpush.msra.mxu0 %v2691
    %2714 = vmatpush.msra.mxu0 %v2690
    %2715 = vmatmul.f32.gmra.mxu0 %v2694
    %v2716 = vpop.f32.mrf.mxu0
    %v2717 = vadd.f32 0.0, %v2716
    %2718 = vmatmul.f32.gmra.mxu0 %v2697
    %v2719 = vpop.f32.mrf.mxu0
    %v2720 = vadd.f32 0.0, %v2719
    %2721 = vdwg.mxu0
    %v2722 = vld [vmem:[%s1] sm:$0xff]
    %vm2723 = vcmp.eq.s32.totalorder %v2722, 0
    %v2724 = vsel %vm2723, 1, 0
    %v2725 = vcvt.s32.f32 %v2724
    %v2726 = vlaneseq
    %v2727 = vshrl.u32 %v2726, 7
    %v2728 = vlaneseq
    %v2729 = vand.u32 %v2728, 127
    %vm2730 = vcmp.eq.s32.totalorder %v2727, %v2729
    %v2731 = vsel %vm2730, 1, 0
    %v2732 = vcvt.s32.f32 %v2731
    %v2733 = vmul.f32 %v2725, 10000.0
    %2735 = vset.pattern.permute.xlu0 0
    %2736 = vperm.xlu0 %2735, %v2733
    %v2737 = vpop.permute.xlu0 %2736
    %v2739 = vsub.f32 %v2717, %v2737
    %vm2740 = vcmask 31744
    %v2741 = vsel %vm2740, %v2739, -inf
    %v2742 = vrot.slane %v2741, 4
    %v2743 = vmax.f32 %v2741, %v2742
    %v2744 = vrot.slane %v2743, 2
    %v2745 = vmax.f32 %v2743, %v2744
    %v2746 = vrot.slane %v2745, 1
    %v2747 = vmax.f32 %v2745, %v2746
    %v2748 = vsub.f32 %v2739, %v2747
    %v2749 = vmul.f32 %v2748, 1.442695
    %v2750 = vpow.pop %v2749
    %v2751 = vsel %vm2740, %v2750, 0.0
    %v2752 = vrot.slane %v2751, 4
    %v2753 = vadd.f32 %v2751, %v2752
    %v2754 = vrot.slane %v2753, 2
    %v2755 = vadd.f32 %v2753, %v2754
    %v2756 = vrot.slane %v2755, 1
    %v2757 = vadd.f32 %v2755, %v2756
    %v2758 = vrcp.pop %v2757
    %v2759 = vmul.f32 %v2757, %v2758
    %v2760 = vsub.f32 1.0, %v2759
    %v2761 = vmul.f32 %v2758, %v2760
    %v2762 = vadd.f32 %v2758, %v2761
    %vm2763 = vweird.f32 %v2757
    %vm2764 = vweird.f32 %v2758
    %vm2765 = vmor %vm2763, %vm2764
    %v2766 = vsel %vm2765, %v2758, %v2762
    %v2767 = vand.u32 2147483647, %v2757
    %vm2768 = vcmp.eq.f32.partialorder %v2767, 8.507059e+37
    %v2769 = vand.u32 %v2757, 2147483648
    %v2770 = vor.u32 1.1754944e-38, %v2769
    %v2771 = vsel %vm2768, %v2770, %v2766
    %v2772 = vmul.f32 %v2750, %v2771
    %2773 = vxpose.xlu0.b32.start [1/16] %v2772, 128
    %2774 = vxpose.xlu0.b32.cont [2/16] 0.0, 128
    %2775 = vxpose.xlu0.b32.cont [3/16] 0.0, 128
    %2776 = vxpose.xlu0.b32.cont [4/16] 0.0, 128
    %2777 = vxpose.xlu0.b32.cont [5/16] 0.0, 128
    %2778 = vxpose.xlu0.b32.cont [6/16] 0.0, 128
    %2779 = vxpose.xlu0.b32.cont [7/16] 0.0, 128
    %2780 = vxpose.xlu0.b32.cont [8/16] 0.0, 128
    %2781 = vxpose.xlu0.b32.cont [9/16] 0.0, 128
    %2782 = vxpose.xlu0.b32.cont [10/16] 0.0, 128
    %2783 = vxpose.xlu0.b32.cont [11/16] 0.0, 128
    %2784 = vxpose.xlu0.b32.cont [12/16] 0.0, 128
    %2785 = vxpose.xlu0.b32.cont [13/16] 0.0, 128
    %2786 = vxpose.xlu0.b32.cont [14/16] 0.0, 128
    %2787 = vxpose.xlu0.b32.cont [15/16] 0.0, 128
    %2788 = vxpose.xlu0.b32.end [16/16] 0.0, 128
    %v2789 = vpop.trf.xlu0
    %v2790 = vpop.trf.xlu0
    %v2791 = vpop.trf.xlu0
    %v2792 = vpop.trf.xlu0
    %v2793 = vpop.trf.xlu0
    %v2794 = vpop.trf.xlu0
    %v2795 = vpop.trf.xlu0
    %v2796 = vpop.trf.xlu0
    %v2797 = vpop.trf.xlu0
    %v2798 = vpop.trf.xlu0
    %v2799 = vpop.trf.xlu0
    %v2800 = vpop.trf.xlu0
    %v2801 = vpop.trf.xlu0
    %v2802 = vpop.trf.xlu0
    %v2803 = vpop.trf.xlu0
    %v2804 = vpop.trf.xlu0
    %vm2805 = vcmask 64512
    %v2807 = vsel %vm2805, %v2789, 0
    %2809 = vmatpush.msra.mxu0 0.0
    %2810 = vmatpush.msra.mxu0 0.0
    %2811 = vmatpush.msra.mxu0 0.0
    %2812 = vmatpush.msra.mxu0 0.0
    %2813 = vmatpush.msra.mxu0 0.0
    %2814 = vmatpush.msra.mxu0 0.0
    %2815 = vmatpush.msra.mxu0 0.0
    %2816 = vmatpush.msra.mxu0 0.0
    %2817 = vmatpush.msra.mxu0 0.0
    %2818 = vmatpush.msra.mxu0 0.0
    %2819 = vmatpush.msra.mxu0 0.0
    %2820 = vmatpush.msra.mxu0 0.0
    %2821 = vmatpush.msra.mxu0 0.0
    %2822 = vmatpush.msra.mxu0 0.0
    %2823 = vmatpush.msra.mxu0 0.0
    %2824 = vmatpush.msra.mxu0 %v2732
    %2825 = vmatmul.f32.gmra.mxu0 %v2807
    %v2826 = vpop.f32.mrf.mxu0
    %v2827 = vadd.f32 0.0, %v2826
    %2828 = vdwg.mxu0
    %vm2829 = vcmask 60416
    %2830 = vst.msk [vmem:[#allocation9] sm:$0xf] %vm2829, %v2827
    %2831 = vmatpush.msra.mxu0 0.0
    %2832 = vmatpush.msra.mxu0 0.0
    %2833 = vmatpush.msra.mxu0 0.0
    %2834 = vmatpush.msra.mxu0 0.0
    %2835 = vmatpush.msra.mxu0 0.0
    %2836 = vmatpush.msra.mxu0 0.0
    %2837 = vmatpush.msra.mxu0 0.0
    %2838 = vmatpush.msra.mxu0 0.0
    %2839 = vmatpush.msra.mxu0 0.0
    %2840 = vmatpush.msra.mxu0 0.0
    %2841 = vmatpush.msra.mxu0 0.0
    %2842 = vmatpush.msra.mxu0 0.0
    %2843 = vmatpush.msra.mxu0 0.0
    %2844 = vmatpush.msra.mxu0 0.0
    %2845 = vmatpush.msra.mxu0 0.0
    %2846 = vmatpush.msra.mxu0 %v2649
    %2847 = vmatmul.f32.gmra.mxu0 %v2807
    %v2848 = vpop.f32.mrf.mxu0
    %v2849 = vadd.f32 0.0, %v2848
    %2850 = vdwg.mxu0
    %v2852 = vrot.slane %v2849, 1
    %2853 = vrot.lane.b32.xlu0 %v2852, 64
    %v2854 = vpop.permute.xlu0 %2853
    %v2856 = vrot.slane %v2849, 2
    %v2858 = vrot.slane %v2849, 3
    %2859 = vrot.lane.b32.xlu0 %v2858, 64
    %v2860 = vpop.permute.xlu0 %2859
    %v2862 = vsel %vm1396, %v2849, %v2854
    %v2863 = vsel %vm1396, %v2856, %v2860
    %2864 = vset.pattern.permute.xlu0 1
    %2865 = vperm.xlu0 %2864, %v2733
    %v2866 = vpop.permute.xlu0 %2865
    %v2868 = vsub.f32 %v2720, %v2866
    %v2869 = vsel %vm2740, %v2868, -inf
    %v2870 = vrot.slane %v2869, 4
    %v2871 = vmax.f32 %v2869, %v2870
    %v2872 = vrot.slane %v2871, 2
    %v2873 = vmax.f32 %v2871, %v2872
    %v2874 = vrot.slane %v2873, 1
    %v2875 = vmax.f32 %v2873, %v2874
    %v2876 = vsub.f32 %v2868, %v2875
    %v2877 = vmul.f32 %v2876, 1.442695
    %v2878 = vpow.pop %v2877
    %v2879 = vsel %vm2740, %v2878, 0.0
    %v2880 = vrot.slane %v2879, 4
    %v2881 = vadd.f32 %v2879, %v2880
    %v2882 = vrot.slane %v2881, 2
    %v2883 = vadd.f32 %v2881, %v2882
    %v2884 = vrot.slane %v2883, 1
    %v2885 = vadd.f32 %v2883, %v2884
    %v2886 = vrcp.pop %v2885
    %v2887 = vmul.f32 %v2885, %v2886
    %v2888 = vsub.f32 1.0, %v2887
    %v2889 = vmul.f32 %v2886, %v2888
    %v2890 = vadd.f32 %v2886, %v2889
    %vm2891 = vweird.f32 %v2885
    %vm2892 = vweird.f32 %v2886
    %vm2893 = vmor %vm2891, %vm2892
    %v2894 = vsel %vm2893, %v2886, %v2890
    %v2895 = vand.u32 2147483647, %v2885
    %vm2896 = vcmp.eq.f32.partialorder %v2895, 8.507059e+37
    %v2897 = vand.u32 %v2885, 2147483648
    %v2898 = vor.u32 1.1754944e-38, %v2897
    %v2899 = vsel %vm2896, %v2898, %v2894
    %v2900 = vmul.f32 %v2878, %v2899
    %2901 = vxpose.xlu0.b32.start [1/16] %v2900, 128
    %2902 = vxpose.xlu0.b32.cont [2/16] 0.0, 128
    %2903 = vxpose.xlu0.b32.cont [3/16] 0.0, 128
    %2904 = vxpose.xlu0.b32.cont [4/16] 0.0, 128
    %2905 = vxpose.xlu0.b32.cont [5/16] 0.0, 128
    %2906 = vxpose.xlu0.b32.cont [6/16] 0.0, 128
    %2907 = vxpose.xlu0.b32.cont [7/16] 0.0, 128
    %2908 = vxpose.xlu0.b32.cont [8/16] 0.0, 128
    %2909 = vxpose.xlu0.b32.cont [9/16] 0.0, 128
    %2910 = vxpose.xlu0.b32.cont [10/16] 0.0, 128
    %2911 = vxpose.xlu0.b32.cont [11/16] 0.0, 128
    %2912 = vxpose.xlu0.b32.cont [12/16] 0.0, 128
    %2913 = vxpose.xlu0.b32.cont [13/16] 0.0, 128
    %2914 = vxpose.xlu0.b32.cont [14/16] 0.0, 128
    %2915 = vxpose.xlu0.b32.cont [15/16] 0.0, 128
    %2916 = vxpose.xlu0.b32.end [16/16] 0.0, 128
    %v2917 = vpop.trf.xlu0
    %v2918 = vpop.trf.xlu0
    %v2919 = vpop.trf.xlu0
    %v2920 = vpop.trf.xlu0
    %v2921 = vpop.trf.xlu0
    %v2922 = vpop.trf.xlu0
    %v2923 = vpop.trf.xlu0
    %v2924 = vpop.trf.xlu0
    %v2925 = vpop.trf.xlu0
    %v2926 = vpop.trf.xlu0
    %v2927 = vpop.trf.xlu0
    %v2928 = vpop.trf.xlu0
    %v2929 = vpop.trf.xlu0
    %v2930 = vpop.trf.xlu0
    %v2931 = vpop.trf.xlu0
    %v2932 = vpop.trf.xlu0
    %v2934 = vsel %vm2805, %v2917, 0
    %2936 = vmatpush.msra.mxu0 0.0
    %2937 = vmatpush.msra.mxu0 0.0
    %2938 = vmatpush.msra.mxu0 0.0
    %2939 = vmatpush.msra.mxu0 0.0
    %2940 = vmatpush.msra.mxu0 0.0
    %2941 = vmatpush.msra.mxu0 0.0
    %2942 = vmatpush.msra.mxu0 0.0
    %2943 = vmatpush.msra.mxu0 0.0
    %2944 = vmatpush.msra.mxu0 0.0
    %2945 = vmatpush.msra.mxu0 0.0
    %2946 = vmatpush.msra.mxu0 0.0
    %2947 = vmatpush.msra.mxu0 0.0
    %2948 = vmatpush.msra.mxu0 0.0
    %2949 = vmatpush.msra.mxu0 0.0
    %2950 = vmatpush.msra.mxu0 0.0
    %2951 = vmatpush.msra.mxu0 %v2732
    %2952 = vmatmul.f32.gmra.mxu0 %v2934
    %v2953 = vpop.f32.mrf.mxu0
    %v2954 = vadd.f32 0.0, %v2953
    %2955 = vdwg.mxu0
    %s2956 = scalar_lea.vmem [#allocation9], 4
    %2957 = vst.msk [vmem:[%s2956] sm:$0xf] %vm2829, %v2954
    %2958 = vmatpush.msra.mxu0 0.0
    %2959 = vmatpush.msra.mxu0 0.0
    %2960 = vmatpush.msra.mxu0 0.0
    %2961 = vmatpush.msra.mxu0 0.0
    %2962 = vmatpush.msra.mxu0 0.0
    %2963 = vmatpush.msra.mxu0 0.0
    %2964 = vmatpush.msra.mxu0 0.0
    %2965 = vmatpush.msra.mxu0 0.0
    %2966 = vmatpush.msra.mxu0 0.0
    %2967 = vmatpush.msra.mxu0 0.0
    %2968 = vmatpush.msra.mxu0 0.0
    %2969 = vmatpush.msra.mxu0 0.0
    %2970 = vmatpush.msra.mxu0 0.0
    %2971 = vmatpush.msra.mxu0 0.0
    %2972 = vmatpush.msra.mxu0 0.0
    %2973 = vmatpush.msra.mxu0 %v2650
    %2974 = vmatmul.f32.gmra.mxu0 %v2934
    %v2975 = vpop.f32.mrf.mxu0
    %v2976 = vadd.f32 0.0, %v2975
    %2977 = vdwg.mxu0
    %v2979 = vrot.slane %v2976, 1
    %2980 = vrot.lane.b32.xlu0 %v2979, 64
    %v2981 = vpop.permute.xlu0 %2980
    %v2983 = vrot.slane %v2976, 2
    %v2985 = vrot.slane %v2976, 3
    %2986 = vrot.lane.b32.xlu0 %v2985, 64
    %v2987 = vpop.permute.xlu0 %2986
    %v2989 = vsel %vm1396, %v2976, %v2981
    %v2990 = vsel %vm1396, %v2983, %v2987
    %v2993 = vrot.slane %v2989, 7
    %v2994 = vrot.slane %v2990, 7
    %vm2997 = vcmask 1040384
    %v2998 = vsel %vm2997, %v2862, %v2993
    %v2999 = vsel %vm2997, %v2863, %v2994
    %v3000 = vld [vmem:[%s17] sm:$0xff]
    %v3001 = vld [vmem:[%s17 + $0x8] sm:$0xff]
    %v3002 = vld [vmem:[%s17 + $0x10] sm:$0xff]
    %v3003 = vld [vmem:[%s17 + $0x18] sm:$0xff]
    %v3004 = vld [vmem:[%s17 + $0x20] sm:$0xff]
    %v3005 = vld [vmem:[%s17 + $0x28] sm:$0xff]
    %v3006 = vld [vmem:[%s17 + $0x30] sm:$0xff]
    %v3007 = vld [vmem:[%s17 + $0x38] sm:$0xff]
    %v3008 = vld [vmem:[%s17 + $0x40] sm:$0xff]
    %v3009 = vld [vmem:[%s17 + $0x48] sm:$0xff]
    %v3010 = vld [vmem:[%s17 + $0x50] sm:$0xff]
    %v3011 = vld [vmem:[%s17 + $0x58] sm:$0xff]
    %v3012 = vld [vmem:[%s17 + $0x60] sm:$0xff]
    %v3013 = vld [vmem:[%s17 + $0x68] sm:$0xff]
    %v3014 = vld [vmem:[%s17 + $0x70] sm:$0xff]
    %v3015 = vld [vmem:[%s17 + $0x78] sm:$0xff]
    %v3016 = vld [vmem:[%s17 + $0x80] sm:$0xff]
    %v3017 = vld [vmem:[%s17 + $0x88] sm:$0xff]
    %v3018 = vld [vmem:[%s17 + $0x90] sm:$0xff]
    %v3019 = vld [vmem:[%s17 + $0x98] sm:$0xff]
    %v3020 = vld [vmem:[%s17 + $0xa0] sm:$0xff]
    %v3021 = vld [vmem:[%s17 + $0xa8] sm:$0xff]
    %v3022 = vld [vmem:[%s17 + $0xb0] sm:$0xff]
    %v3023 = vld [vmem:[%s17 + $0xb8] sm:$0xff]
    %v3024 = vld [vmem:[%s17 + $0xc0] sm:$0xff]
    %v3025 = vld [vmem:[%s17 + $0xc8] sm:$0xff]
    %v3026 = vld [vmem:[%s17 + $0xd0] sm:$0xff]
    %v3027 = vld [vmem:[%s17 + $0xd8] sm:$0xff]
    %v3028 = vld [vmem:[%s17 + $0xe0] sm:$0xff]
    %v3029 = vld [vmem:[%s17 + $0xe8] sm:$0xff]
    %v3030 = vld [vmem:[%s17 + $0xf0] sm:$0xff]
    %v3031 = vld [vmem:[%s17 + $0xf8] sm:$0xff]
    %v3032 = vld [vmem:[%s18] sm:$0x1]
    %v3034 = vperm.slane %v3032, 0
    %3036 = vmatpush.msra.mxu0 %v3015
    %3037 = vmatpush.msra.mxu0 %v3014
    %3038 = vmatpush.msra.mxu0 %v3013
    %3039 = vmatpush.msra.mxu0 %v3012
    %3040 = vmatpush.msra.mxu0 %v3011
    %3041 = vmatpush.msra.mxu0 %v3010
    %3042 = vmatpush.msra.mxu0 %v3009
    %3043 = vmatpush.msra.mxu0 %v3008
    %3044 = vmatpush.msra.mxu0 %v3007
    %3045 = vmatpush.msra.mxu0 %v3006
    %3046 = vmatpush.msra.mxu0 %v3005
    %3047 = vmatpush.msra.mxu0 %v3004
    %3048 = vmatpush.msra.mxu0 %v3003
    %3049 = vmatpush.msra.mxu0 %v3002
    %3050 = vmatpush.msra.mxu0 %v3001
    %3051 = vmatpush.msra.mxu0 %v3000
    %3052 = vmatmul.f32.gmra.mxu0 %v2998
    %v3053 = vpop.f32.mrf.mxu0
    %v3054 = vadd.f32 %v3034, %v3053
    %3055 = vdwg.mxu0
    %3056 = vmatpush.msra.mxu0 %v3031
    %3057 = vmatpush.msra.mxu0 %v3030
    %3058 = vmatpush.msra.mxu0 %v3029
    %3059 = vmatpush.msra.mxu0 %v3028
    %3060 = vmatpush.msra.mxu0 %v3027
    %3061 = vmatpush.msra.mxu0 %v3026
    %3062 = vmatpush.msra.mxu0 %v3025
    %3063 = vmatpush.msra.mxu0 %v3024
    %3064 = vmatpush.msra.mxu0 %v3023
    %3065 = vmatpush.msra.mxu0 %v3022
    %3066 = vmatpush.msra.mxu0 %v3021
    %3067 = vmatpush.msra.mxu0 %v3020
    %3068 = vmatpush.msra.mxu0 %v3019
    %3069 = vmatpush.msra.mxu0 %v3018
    %3070 = vmatpush.msra.mxu0 %v3017
    %3071 = vmatpush.msra.mxu0 %v3016
    %3072 = vmatmul.f32.gmra.mxu0 %v2999
    %v3073 = vpop.f32.mrf.mxu0
    %v3074 = vadd.f32 %v3054, %v3073
    %3075 = vdwg.mxu0
    %v3076 = vtanh.pop %v3074
    %v3077 = vld [vmem:[%s19] sm:$0xff]
    %v3078 = vld [vmem:[%s19 + $0x8] sm:$0xff]
    %v3079 = vld [vmem:[%s20] sm:$0x1]
    %v3081 = vperm.slane %v3079, 0
    %v3084 = vsel %vm2692, %v3076, 0
    %3086 = vmatpush.msra.mxu0 0.0
    %3087 = vmatpush.msra.mxu0 0.0
    %3088 = vmatpush.msra.mxu0 0.0
    %3089 = vmatpush.msra.mxu0 0.0
    %3090 = vmatpush.msra.mxu0 0.0
    %3091 = vmatpush.msra.mxu0 0.0
    %3092 = vmatpush.msra.mxu0 0.0
    %3093 = vmatpush.msra.mxu0 0.0
    %3094 = vmatpush.msra.mxu0 0.0
    %3095 = vmatpush.msra.mxu0 0.0
    %3096 = vmatpush.msra.mxu0 0.0
    %3097 = vmatpush.msra.mxu0 0.0
    %3098 = vmatpush.msra.mxu0 0.0
    %3099 = vmatpush.msra.mxu0 0.0
    %3100 = vmatpush.msra.mxu0 %v3078
    %3101 = vmatpush.msra.mxu0 %v3077
    %3102 = vmatmul.f32.gmra.mxu0 %v3084
    %v3103 = vpop.f32.mrf.mxu0
    %v3104 = vadd.f32 %v3081, %v3103
    %3105 = vdwg.mxu0
    %vm3106 = vcmask 17408
    %3107 = vst.msk [vmem:[#allocation7] sm:$0x3] %vm3106, %v3104
    // Predicated region
    $region82: #{tpu_custom_call.1} parent=1 // pred_check
      _
    $region83: #{tpu_custom_call.1} parent=1 // pred_check_branch
      %3109 = sbr.rel (0) target = $region85
    $region84: #{tpu_custom_call.1} parent=1 // pred_region
      %3111 = vsyncadd [#allocation8], 0
      %s3113 = sshll.u32 [#allocation7], 4
      %s3114 = int_to_ptr.vmem [resolvable:$true] %s3113
      %s3115 = sshll.u32 %s21, 4
      %s3116 = int_to_ptr.hbm [resolvable:$true] %s3115
      %3118 = dma.vmem_to_hbm [thread:$0]  %s3114, 32, %s3116, [#allocation8]
    $region85: #{tpu_custom_call.1} parent=1 // pred_fallthru
      _
    // Predicated region
    $region86: #{tpu_custom_call.1} parent=1 // pred_check
      _
    $region87: #{tpu_custom_call.1} parent=1 // pred_check_branch
      %3120 = sbr.rel (0) target = $region89
    $region88: #{tpu_custom_call.1} parent=1 // pred_region
      %3122 = vsyncadd [#allocation10], 0
      %s3123 = sshll.u32 [#allocation9], 4
      %s3124 = int_to_ptr.vmem [resolvable:$true] %s3123
      %s3125 = sshll.u32 %s22, 4
      %s3126 = int_to_ptr.hbm [resolvable:$true] %s3125
      %3131 = dma.vmem_to_hbm [thread:$0]  %s3124, 128, %s3126, [#allocation10], 64, 64, 4
    $region89: #{tpu_custom_call.1} parent=1 // pred_fallthru
      _
    // Predicated region
    $region90: #{tpu_custom_call.1} parent=1 // pred_check
      _
    $region91: #{tpu_custom_call.1} parent=1 // pred_check_branch
      %3133 = sbr.rel (0) target = $region93
    $region92: #{tpu_custom_call.1} parent=1 // pred_region
      %3135 = dma.done [#allocation8], 32
    $region93: #{tpu_custom_call.1} parent=1 // pred_fallthru
      _
    // Predicated region
    $region94: #{tpu_custom_call.1} parent=1 // pred_check
      _
    $region95: #{tpu_custom_call.1} parent=1 // pred_check_branch
      %3137 = sbr.rel (0) target = $region97
    $region96: #{tpu_custom_call.1} parent=1 // pred_region
      %3139 = dma.done [#allocation10], 128
    $region97: #{tpu_custom_call.1} parent=1 // pred_fallthru
      _
    %3140 = vsyncpa [#allocation8], 1
    %3141 = vsyncpa [#allocation10], 1

</llo_original>
